<compile_context>
chip_gen: v6e
topology: v6e:2x2x1
jax: 0.10.0
libtpu: 0.0.40
codegen_flags: <defaults>
</compile_context>

<pallas_src>
import jax
import jax.numpy as jnp
from jax.experimental import pallas as pl
from jax.experimental.pallas import tpu as pltpu

EPS = 1e-5


# ----------------------------------------------------------------------------
# JAX-side glue: pad-by-1 + stride phase split (space-to-depth), weight reorg.
# ----------------------------------------------------------------------------
def _phase_split_pad1(x, s):
    """Pad H/W by 1 (k=3 'same') and split into s*s stride phases.

    x: (N, H, W, C) -> (N, s*s, Hq, Wq, C) with
    out[n, (r % s) * s + (c % s), r // s, c // s, :] == x_padded[n, r, c, :].
    This is a 1x-sized layout copy, not a 9x im2col blowup.
    """
    N, H, W, C = x.shape
    Hp, Wp = H + 2, W + 2
    ph, pw = (-Hp) % s, (-Wp) % s
    xp = jnp.pad(x, ((0, 0), (1, 1 + ph), (1, 1 + pw), (0, 0)))
    Hq, Wq = (Hp + ph) // s, (Wp + pw) // s
    xr = xp.reshape(N, Hq, s, Wq, s, C)
    xr = jnp.transpose(xr, (0, 2, 4, 1, 3, 5))      # (N, s, s, Hq, Wq, C)
    return xr.reshape(N, s * s, Hq, Wq, C)


def _taps_3x3(w_oihw):
    """(O, I, 3, 3) -> (9, I, O); tap index t = di*3 + dj."""
    O, I, kh, kw = w_oihw.shape
    return jnp.transpose(w_oihw, (2, 3, 1, 0)).reshape(kh * kw, I, O)


# ----------------------------------------------------------------------------
# In-kernel helper: accumulate the 9 shifted-tap matmuls of a 3x3 conv.
# ----------------------------------------------------------------------------
def _accum_3x3(x_ref, w_ref, stride, Ho, Wo, Cin, Cout):
    """x_ref: (1, s*s, Hq, Wq, Cin) phase-split padded image; w_ref: (9, Cin, Cout)."""
    acc = jnp.zeros((Ho * Wo, Cout), jnp.float32)
    for di in range(3):
        for dj in range(3):
            p = (di % stride) * stride + (dj % stride)
            h0, w0 = di // stride, dj // stride
            slab = x_ref[0, p, h0:h0 + Ho, w0:w0 + Wo, :]          # (Ho, Wo, Cin)
            acc = acc + jnp.dot(slab.reshape(Ho * Wo, Cin),
                                w_ref[di * 3 + dj],
                                preferred_element_type=jnp.float32)
    return acc


# ----------------------------------------------------------------------------
# Kernel 1: conv1 3x3 (stride) + bias + folded BatchNorm + ReLU, per image.
# ----------------------------------------------------------------------------
def conv3x3_bn_relu(x, w_oihw, scale, shift, stride):
    N, H, W, Cin = x.shape
    Cout = w_oihw.shape[0]
    Ho, Wo = (H - 1) // stride + 1, (W - 1) // stride + 1
    xp = _phase_split_pad1(x, stride)
    _, SS, Hq, Wq, _ = xp.shape
    wt = _taps_3x3(w_oihw)

    def kernel(x_ref, w_ref, sc_ref, sh_ref, o_ref):
        acc = _accum_3x3(x_ref, w_ref, stride, Ho, Wo, Cin, Cout)
        o_ref[...] = jnp.maximum(acc * sc_ref[...] + sh_ref[...], 0.0)

    out = pl.pallas_call(
        kernel,
        out_shape=jax.ShapeDtypeStruct((N * Ho * Wo, Cout), jnp.float32),
        grid=(N,),
        in_specs=[
            pl.BlockSpec((1, SS, Hq, Wq, Cin), lambda n: (n, 0, 0, 0, 0)),
            pl.BlockSpec((9, Cin, Cout), lambda n: (0, 0, 0)),
            pl.BlockSpec((1, Cout), lambda n: (0, 0)),
            pl.BlockSpec((1, Cout), lambda n: (0, 0)),
        ],
        out_specs=pl.BlockSpec((Ho * Wo, Cout), lambda n: (n, 0)),
        compiler_params=pltpu.CompilerParams(dimension_semantics=("parallel",)),
    )(xp, wt, scale.reshape(1, Cout), shift.reshape(1, Cout))
    return out.reshape(N, Ho, Wo, Cout)


# ----------------------------------------------------------------------------
# Kernel 2: conv2 3x3 (stride 1) + fused 1x1-shortcut (BN folded) + residual
#           add + per-image channel mean (for Squeeze-and-Excite), per image.
# ----------------------------------------------------------------------------
def conv3x3_add_shortcut_pool(y1, w_oihw, xs, ws_folded, shift):
    N, Ho, Wo, C = y1.shape
    Cin = xs.shape[1]
    yp = _phase_split_pad1(y1, 1)
    _, SS, Hq, Wq, _ = yp.shape
    wt = _taps_3x3(w_oihw)

    def kernel(x_ref, w_ref, xs_ref, ws_ref, sh_ref, z_ref, pool_ref):
        acc = _accum_3x3(x_ref, w_ref, 1, Ho, Wo, C, C)
        acc = acc + jnp.dot(xs_ref[...], ws_ref[...],
                            preferred_element_type=jnp.float32)   # shortcut
        z = acc + sh_ref[...]                                      # conv2 bias + shortcut bias/BN
        z_ref[...] = z
        pool_ref[0] = jnp.mean(z, axis=0, keepdims=True)           # (1, C)

    z, pooled = pl.pallas_call(
        kernel,
        out_shape=(jax.ShapeDtypeStruct((N * Ho * Wo, C), jnp.float32),
                   jax.ShapeDtypeStruct((N, 1, C), jnp.float32)),
        grid=(N,),
        in_specs=[
            pl.BlockSpec((1, SS, Hq, Wq, C), lambda n: (n, 0, 0, 0, 0)),
            pl.BlockSpec((9, C, C), lambda n: (0, 0, 0)),
            pl.BlockSpec((Ho * Wo, Cin), lambda n: (n, 0)),
            pl.BlockSpec((Cin, C), lambda n: (0, 0)),
            pl.BlockSpec((1, C), lambda n: (0, 0)),
        ],
        out_specs=(pl.BlockSpec((Ho * Wo, C), lambda n: (n, 0)),
                   pl.BlockSpec((1, 1, C), lambda n: (n, 0, 0))),
        compiler_params=pltpu.CompilerParams(dimension_semantics=("parallel",)),
    )(yp, wt, xs, ws_folded, shift.reshape(1, C))
    return z, pooled


# ----------------------------------------------------------------------------
# Kernel 3: Squeeze-and-Excite gate (2 tiny FCs + sigmoid) + gated rescale,
#           gridded per image over z.
# ----------------------------------------------------------------------------
def se_gate_apply(z2d, pooled, w1, w2, N, Ho, Wo, C):
    Cr = w1.shape[1]

    def kernel(z_ref, p_ref, w1_ref, w2_ref, o_ref):
        h = jnp.maximum(
            jnp.dot(p_ref[0], w1_ref[...], preferred_element_type=jnp.float32), 0.0)
        gate = jax.nn.sigmoid(
            jnp.dot(h, w2_ref[...], preferred_element_type=jnp.float32))  # (1, C)
        o_ref[...] = z_ref[...] * gate

    out = pl.pallas_call(
        kernel,
        out_shape=jax.ShapeDtypeStruct((N * Ho * Wo, C), jnp.float32),
        grid=(N,),
        in_specs=[
            pl.BlockSpec((Ho * Wo, C), lambda n: (n, 0)),
            pl.BlockSpec((1, 1, C), lambda n: (n, 0, 0)),
            pl.BlockSpec((C, Cr), lambda n: (0, 0)),
            pl.BlockSpec((Cr, C), lambda n: (0, 0)),
        ],
        out_specs=pl.BlockSpec((Ho * Wo, C), lambda n: (n, 0)),
        compiler_params=pltpu.CompilerParams(dimension_semantics=("parallel",)),
    )(z2d, pooled, w1, w2)
    return out.reshape(N, Ho, Wo, C)


# ----------------------------------------------------------------------------
# Full StemBlock forward (NCHW in / NCHW out).
# ----------------------------------------------------------------------------
def stem_block_forward(x_nchw, p, stride):
    x = jnp.transpose(x_nchw, (0, 2, 3, 1))          # NCHW -> NHWC
    N, H, W, Cin = x.shape
    Cout = p["w1"].shape[0]
    Ho, Wo = (H - 1) // stride + 1, (W - 1) // stride + 1

    # conv1 + BN + ReLU: relu((conv + b1) * sc + (be - m*sc))
    sc1 = p["g1"] / jnp.sqrt(p["v1"] + EPS)
    scale1 = sc1
    shift1 = p["b1"] * sc1 + p["be1"] - p["m1"] * sc1
    y1 = conv3x3_bn_relu(x, p["w1"], scale1, shift1, stride)   # (N, Ho, Wo, Cout)

    # shortcut Conv1x1(stride) + BN folded into a (Cin, Cout) matrix + bias
    scs = p["gs"] / jnp.sqrt(p["vs"] + EPS)
    ws2d = p["ws"].reshape(Cout, Cin)
    ws_folded = (ws2d * scs[:, None]).T                         # (Cin, Cout)
    sbias = (p["bs"] - p["ms"]) * scs + p["bes"]
    shift2 = p["b2"] + sbias                                    # conv2 bias + shortcut
    xs = x[:, ::stride, ::stride, :].reshape(N * Ho * Wo, Cin)

    # conv2 + shortcut + residual add + per-image pooled means
    z2d, pooled = conv3x3_add_shortcut_pool(y1, p["w2"], xs, ws_folded, shift2)

    # Squeeze-and-Excite gate + apply
    out = se_gate_apply(z2d, pooled, p["fc1"].T, p["fc2"].T, N, Ho, Wo, Cout)
    return jnp.transpose(out, (0, 3, 1, 2))                     # NHWC -> NCHW


# ----------------------------------------------------------------------------
# Pure-JAX reference (same math, via lax.conv) for a correctness check.
# ----------------------------------------------------------------------------
def reference_forward(x, p, stride):
    def bn(x, g, b, m, v):
        return ((x - m[None, :, None, None]) / jnp.sqrt(v[None, :, None, None] + EPS)
                * g[None, :, None, None] + b[None, :, None, None])

    def conv(x, w, b, st, pad):
        y = jax.lax.conv_general_dilated(
            x, w, (st, st), [(pad, pad), (pad, pad)],
            dimension_numbers=("NCHW", "OIHW", "NCHW"))
        return y + b[None, :, None, None]

    h = conv(x, p["w1"], p["b1"], stride, 1)
    h = jnp.maximum(bn(h, p["g1"], p["be1"], p["m1"], p["v1"]), 0.0)
    h = conv(h, p["w2"], p["b2"], 1, 1)
    s = bn(conv(x, p["ws"], p["bs"], stride, 0), p["gs"], p["bes"], p["ms"], p["vs"])
    z = h + s
    pooled = jnp.mean(z, axis=(2, 3))
    gate = jax.nn.sigmoid(jnp.maximum(pooled @ p["fc1"].T, 0.0) @ p["fc2"].T)
    return z * gate[:, :, None, None]


def init_params(key, in_c, out_c, r=8):
    ks = jax.random.split(key, 16)
    u = lambda k, s: jax.random.uniform(k, s, jnp.float32, 0.5, 1.5)
    n = lambda k, s, sc=0.1: sc * jax.random.normal(k, s, jnp.float32)
    return dict(
        # Conv1 3x3 + BN1 (out_c)
        w1=n(ks[0], (out_c, in_c, 3, 3)), b1=n(ks[1], (out_c,)),
        g1=u(ks[2], (out_c,)), be1=n(ks[3], (out_c,)),
        m1=n(ks[4], (out_c,)), v1=u(ks[5], (out_c,)),
        # Conv2 3x3
        w2=n(ks[6], (out_c, out_c, 3, 3)), b2=n(ks[7], (out_c,)),
        # shortcut Conv1x1 + BN
        ws=n(ks[8], (out_c, in_c, 1, 1)), bs=n(ks[9], (out_c,)),
        gs=u(ks[10], (out_c,)), bes=n(ks[11], (out_c,)),
        ms=n(ks[12], (out_c,)), vs=u(ks[13], (out_c,)),
        # Squeeze-and-Excite (PyTorch Linear weights: (out_features, in_features))
        fc1=n(ks[14], (out_c // r, out_c)),
        fc2=n(ks[15], (out_c, out_c // r)),
    )


if __name__ == "__main__":
    key = jax.random.PRNGKey(0)
    kx, kp = jax.random.split(key)

    N, in_c, out_c, H, W, stride = 2, 4, 16, 16, 16, 2
    x = jax.random.normal(kx, (N, in_c, H, W), jnp.float32)
    params = init_params(kp, in_c, out_c, r=8)

    fwd = jax.jit(stem_block_forward, static_argnums=2)
    out = jax.block_until_ready(fwd(x, params, stride))
    ref = jax.block_until_ready(reference_forward(x, params, stride))

    assert out.shape == (N, out_c, H // stride, W // stride), out.shape
    max_err = float(jnp.abs(out - ref).max())
    assert jnp.allclose(out, ref, atol=2e-4, rtol=2e-4), max_err
    print("KERNEL_OK")
</pallas_src>

<mosaic_0001>
module attributes {stable_mosaic.version = 11 : i64} {
  func.func @kernel(%arg0: i32, %arg1: memref<1x4x9x9x4xf32, #tpu.memory_space<vmem>>, %arg2: memref<9x4x16xf32, #tpu.memory_space<vmem>>, %arg3: memref<1x16xf32, #tpu.memory_space<vmem>>, %arg4: memref<1x16xf32, #tpu.memory_space<vmem>>, %arg5: memref<64x16xf32, #tpu.memory_space<vmem>>) attributes {dimension_semantics = [#tpu.dimension_semantics<parallel>], iteration_bounds = array<i64: 2>, scalar_prefetch = 0 : i64, scratch_operands = 0 : i64, tpu.core_type = #tpu.core_type<tc>, window_params = [{transform_indices = @transform_0, window_bounds = array<i64: 1, 4, 9, 9, 4>}, {pipeline_mode = #tpu.pipeline_mode<synchronous>, transform_indices = @transform_1, window_bounds = array<i64: 9, 4, 16>}, {pipeline_mode = #tpu.pipeline_mode<synchronous>, transform_indices = @transform_2, window_bounds = array<i64: 1, 16>}, {pipeline_mode = #tpu.pipeline_mode<synchronous>, transform_indices = @transform_3, window_bounds = array<i64: 1, 16>}, {transform_indices = @transform_4, window_bounds = array<i64: 64, 16>}]} {
    %cst = arith.constant 0.000000e+00 : f32
    %0 = vector.broadcast %cst : f32 to vector<64x16xf32>
    %c0 = arith.constant 0 : index
    %c0_0 = arith.constant 0 : index
    %c0_1 = arith.constant 0 : index
    %c0_2 = arith.constant 0 : index
    %c0_3 = arith.constant 0 : index
    %1 = vector.load %arg1[%c0, %c0_0, %c0_1, %c0_2, %c0_3] : memref<1x4x9x9x4xf32, #tpu.memory_space<vmem>>, vector<1x1x8x8x4xf32>
    %2 = vector.shape_cast %1 : vector<1x1x8x8x4xf32> to vector<8x8x4xf32>
    %3 = vector.shape_cast %2 : vector<8x8x4xf32> to vector<64x4xf32>
    %c0_4 = arith.constant 0 : index
    %c0_5 = arith.constant 0 : index
    %c0_6 = arith.constant 0 : index
    %4 = vector.load %arg2[%c0_4, %c0_5, %c0_6] : memref<9x4x16xf32, #tpu.memory_space<vmem>>, vector<1x4x16xf32>
    %5 = vector.shape_cast %4 : vector<1x4x16xf32> to vector<4x16xf32>
    %cst_7 = arith.constant dense<0.000000e+00> : vector<64x16xf32>
    %6 = tpu.matmul %3, %5, %cst_7 {dimension_numbers = #tpu.dot_dimension_numbers<[1], [0], [0], [1], [0, 0, 1, 1], [], []>} : vector<64x4xf32>, vector<4x16xf32>, vector<64x16xf32> -> vector<64x16xf32>
    %7 = arith.addf %0, %6 : vector<64x16xf32>
    %c0_8 = arith.constant 0 : index
    %c1 = arith.constant 1 : index
    %c0_9 = arith.constant 0 : index
    %c0_10 = arith.constant 0 : index
    %c0_11 = arith.constant 0 : index
    %8 = vector.load %arg1[%c0_8, %c1, %c0_9, %c0_10, %c0_11] : memref<1x4x9x9x4xf32, #tpu.memory_space<vmem>>, vector<1x1x8x8x4xf32>
    %9 = vector.shape_cast %8 : vector<1x1x8x8x4xf32> to vector<8x8x4xf32>
    %10 = vector.shape_cast %9 : vector<8x8x4xf32> to vector<64x4xf32>
    %c1_12 = arith.constant 1 : index
    %c0_13 = arith.constant 0 : index
    %c0_14 = arith.constant 0 : index
    %11 = vector.load %arg2[%c1_12, %c0_13, %c0_14] : memref<9x4x16xf32, #tpu.memory_space<vmem>>, vector<1x4x16xf32>
    %12 = vector.shape_cast %11 : vector<1x4x16xf32> to vector<4x16xf32>
    %cst_15 = arith.constant dense<0.000000e+00> : vector<64x16xf32>
    %13 = tpu.matmul %10, %12, %cst_15 {dimension_numbers = #tpu.dot_dimension_numbers<[1], [0], [0], [1], [0, 0, 1, 1], [], []>} : vector<64x4xf32>, vector<4x16xf32>, vector<64x16xf32> -> vector<64x16xf32>
    %14 = arith.addf %7, %13 : vector<64x16xf32>
    %c0_16 = arith.constant 0 : index
    %c0_17 = arith.constant 0 : index
    %c0_18 = arith.constant 0 : index
    %c1_19 = arith.constant 1 : index
    %c0_20 = arith.constant 0 : index
    %15 = vector.load %arg1[%c0_16, %c0_17, %c0_18, %c1_19, %c0_20] : memref<1x4x9x9x4xf32, #tpu.memory_space<vmem>>, vector<1x1x8x8x4xf32>
    %16 = vector.shape_cast %15 : vector<1x1x8x8x4xf32> to vector<8x8x4xf32>
    %17 = vector.shape_cast %16 : vector<8x8x4xf32> to vector<64x4xf32>
    %c2 = arith.constant 2 : index
    %c0_21 = arith.constant 0 : index
    %c0_22 = arith.constant 0 : index
    %18 = vector.load %arg2[%c2, %c0_21, %c0_22] : memref<9x4x16xf32, #tpu.memory_space<vmem>>, vector<1x4x16xf32>
    %19 = vector.shape_cast %18 : vector<1x4x16xf32> to vector<4x16xf32>
    %cst_23 = arith.constant dense<0.000000e+00> : vector<64x16xf32>
    %20 = tpu.matmul %17, %19, %cst_23 {dimension_numbers = #tpu.dot_dimension_numbers<[1], [0], [0], [1], [0, 0, 1, 1], [], []>} : vector<64x4xf32>, vector<4x16xf32>, vector<64x16xf32> -> vector<64x16xf32>
    %21 = arith.addf %14, %20 : vector<64x16xf32>
    %c0_24 = arith.constant 0 : index
    %c2_25 = arith.constant 2 : index
    %c0_26 = arith.constant 0 : index
    %c0_27 = arith.constant 0 : index
    %c0_28 = arith.constant 0 : index
    %22 = vector.load %arg1[%c0_24, %c2_25, %c0_26, %c0_27, %c0_28] : memref<1x4x9x9x4xf32, #tpu.memory_space<vmem>>, vector<1x1x8x8x4xf32>
    %23 = vector.shape_cast %22 : vector<1x1x8x8x4xf32> to vector<8x8x4xf32>
    %24 = vector.shape_cast %23 : vector<8x8x4xf32> to vector<64x4xf32>
    %c3 = arith.constant 3 : index
    %c0_29 = arith.constant 0 : index
    %c0_30 = arith.constant 0 : index
    %25 = vector.load %arg2[%c3, %c0_29, %c0_30] : memref<9x4x16xf32, #tpu.memory_space<vmem>>, vector<1x4x16xf32>
    %26 = vector.shape_cast %25 : vector<1x4x16xf32> to vector<4x16xf32>
    %cst_31 = arith.constant dense<0.000000e+00> : vector<64x16xf32>
    %27 = tpu.matmul %24, %26, %cst_31 {dimension_numbers = #tpu.dot_dimension_numbers<[1], [0], [0], [1], [0, 0, 1, 1], [], []>} : vector<64x4xf32>, vector<4x16xf32>, vector<64x16xf32> -> vector<64x16xf32>
    %28 = arith.addf %21, %27 : vector<64x16xf32>
    %c0_32 = arith.constant 0 : index
    %c3_33 = arith.constant 3 : index
    %c0_34 = arith.constant 0 : index
    %c0_35 = arith.constant 0 : index
    %c0_36 = arith.constant 0 : index
    %29 = vector.load %arg1[%c0_32, %c3_33, %c0_34, %c0_35, %c0_36] : memref<1x4x9x9x4xf32, #tpu.memory_space<vmem>>, vector<1x1x8x8x4xf32>
    %30 = vector.shape_cast %29 : vector<1x1x8x8x4xf32> to vector<8x8x4xf32>
    %31 = vector.shape_cast %30 : vector<8x8x4xf32> to vector<64x4xf32>
    %c4 = arith.constant 4 : index
    %c0_37 = arith.constant 0 : index
    %c0_38 = arith.constant 0 : index
    %32 = vector.load %arg2[%c4, %c0_37, %c0_38] : memref<9x4x16xf32, #tpu.memory_space<vmem>>, vector<1x4x16xf32>
    %33 = vector.shape_cast %32 : vector<1x4x16xf32> to vector<4x16xf32>
    %cst_39 = arith.constant dense<0.000000e+00> : vector<64x16xf32>
    %34 = tpu.matmul %31, %33, %cst_39 {dimension_numbers = #tpu.dot_dimension_numbers<[1], [0], [0], [1], [0, 0, 1, 1], [], []>} : vector<64x4xf32>, vector<4x16xf32>, vector<64x16xf32> -> vector<64x16xf32>
    %35 = arith.addf %28, %34 : vector<64x16xf32>
    %c0_40 = arith.constant 0 : index
    %c2_41 = arith.constant 2 : index
    %c0_42 = arith.constant 0 : index
    %c1_43 = arith.constant 1 : index
    %c0_44 = arith.constant 0 : index
    %36 = vector.load %arg1[%c0_40, %c2_41, %c0_42, %c1_43, %c0_44] : memref<1x4x9x9x4xf32, #tpu.memory_space<vmem>>, vector<1x1x8x8x4xf32>
    %37 = vector.shape_cast %36 : vector<1x1x8x8x4xf32> to vector<8x8x4xf32>
    %38 = vector.shape_cast %37 : vector<8x8x4xf32> to vector<64x4xf32>
    %c5 = arith.constant 5 : index
    %c0_45 = arith.constant 0 : index
    %c0_46 = arith.constant 0 : index
    %39 = vector.load %arg2[%c5, %c0_45, %c0_46] : memref<9x4x16xf32, #tpu.memory_space<vmem>>, vector<1x4x16xf32>
    %40 = vector.shape_cast %39 : vector<1x4x16xf32> to vector<4x16xf32>
    %cst_47 = arith.constant dense<0.000000e+00> : vector<64x16xf32>
    %41 = tpu.matmul %38, %40, %cst_47 {dimension_numbers = #tpu.dot_dimension_numbers<[1], [0], [0], [1], [0, 0, 1, 1], [], []>} : vector<64x4xf32>, vector<4x16xf32>, vector<64x16xf32> -> vector<64x16xf32>
    %42 = arith.addf %35, %41 : vector<64x16xf32>
    %c0_48 = arith.constant 0 : index
    %c0_49 = arith.constant 0 : index
    %c1_50 = arith.constant 1 : index
    %c0_51 = arith.constant 0 : index
    %c0_52 = arith.constant 0 : index
    %43 = vector.load %arg1[%c0_48, %c0_49, %c1_50, %c0_51, %c0_52] : memref<1x4x9x9x4xf32, #tpu.memory_space<vmem>>, vector<1x1x8x8x4xf32>
    %44 = vector.shape_cast %43 : vector<1x1x8x8x4xf32> to vector<8x8x4xf32>
    %45 = vector.shape_cast %44 : vector<8x8x4xf32> to vector<64x4xf32>
    %c6 = arith.constant 6 : index
    %c0_53 = arith.constant 0 : index
    %c0_54 = arith.constant 0 : index
    %46 = vector.load %arg2[%c6, %c0_53, %c0_54] : memref<9x4x16xf32, #tpu.memory_space<vmem>>, vector<1x4x16xf32>
    %47 = vector.shape_cast %46 : vector<1x4x16xf32> to vector<4x16xf32>
    %cst_55 = arith.constant dense<0.000000e+00> : vector<64x16xf32>
    %48 = tpu.matmul %45, %47, %cst_55 {dimension_numbers = #tpu.dot_dimension_numbers<[1], [0], [0], [1], [0, 0, 1, 1], [], []>} : vector<64x4xf32>, vector<4x16xf32>, vector<64x16xf32> -> vector<64x16xf32>
    %49 = arith.addf %42, %48 : vector<64x16xf32>
    %c0_56 = arith.constant 0 : index
    %c1_57 = arith.constant 1 : index
    %c1_58 = arith.constant 1 : index
    %c0_59 = arith.constant 0 : index
    %c0_60 = arith.constant 0 : index
    %50 = vector.load %arg1[%c0_56, %c1_57, %c1_58, %c0_59, %c0_60] : memref<1x4x9x9x4xf32, #tpu.memory_space<vmem>>, vector<1x1x8x8x4xf32>
    %51 = vector.shape_cast %50 : vector<1x1x8x8x4xf32> to vector<8x8x4xf32>
    %52 = vector.shape_cast %51 : vector<8x8x4xf32> to vector<64x4xf32>
    %c7 = arith.constant 7 : index
    %c0_61 = arith.constant 0 : index
    %c0_62 = arith.constant 0 : index
    %53 = vector.load %arg2[%c7, %c0_61, %c0_62] : memref<9x4x16xf32, #tpu.memory_space<vmem>>, vector<1x4x16xf32>
    %54 = vector.shape_cast %53 : vector<1x4x16xf32> to vector<4x16xf32>
    %cst_63 = arith.constant dense<0.000000e+00> : vector<64x16xf32>
    %55 = tpu.matmul %52, %54, %cst_63 {dimension_numbers = #tpu.dot_dimension_numbers<[1], [0], [0], [1], [0, 0, 1, 1], [], []>} : vector<64x4xf32>, vector<4x16xf32>, vector<64x16xf32> -> vector<64x16xf32>
    %56 = arith.addf %49, %55 : vector<64x16xf32>
    %c0_64 = arith.constant 0 : index
    %c0_65 = arith.constant 0 : index
    %c1_66 = arith.constant 1 : index
    %c1_67 = arith.constant 1 : index
    %c0_68 = arith.constant 0 : index
    %57 = vector.load %arg1[%c0_64, %c0_65, %c1_66, %c1_67, %c0_68] : memref<1x4x9x9x4xf32, #tpu.memory_space<vmem>>, vector<1x1x8x8x4xf32>
    %58 = vector.shape_cast %57 : vector<1x1x8x8x4xf32> to vector<8x8x4xf32>
    %59 = vector.shape_cast %58 : vector<8x8x4xf32> to vector<64x4xf32>
    %c8 = arith.constant 8 : index
    %c0_69 = arith.constant 0 : index
    %c0_70 = arith.constant 0 : index
    %60 = vector.load %arg2[%c8, %c0_69, %c0_70] : memref<9x4x16xf32, #tpu.memory_space<vmem>>, vector<1x4x16xf32>
    %61 = vector.shape_cast %60 : vector<1x4x16xf32> to vector<4x16xf32>
    %cst_71 = arith.constant dense<0.000000e+00> : vector<64x16xf32>
    %62 = tpu.matmul %59, %61, %cst_71 {dimension_numbers = #tpu.dot_dimension_numbers<[1], [0], [0], [1], [0, 0, 1, 1], [], []>} : vector<64x4xf32>, vector<4x16xf32>, vector<64x16xf32> -> vector<64x16xf32>
    %63 = arith.addf %56, %62 : vector<64x16xf32>
    %c0_72 = arith.constant 0 : index
    %c0_73 = arith.constant 0 : index
    %64 = vector.load %arg3[%c0_72, %c0_73] : memref<1x16xf32, #tpu.memory_space<vmem>>, vector<1x16xf32>
    %65 = vector.broadcast %64 : vector<1x16xf32> to vector<64x16xf32>
    %66 = arith.mulf %63, %65 : vector<64x16xf32>
    %c0_74 = arith.constant 0 : index
    %c0_75 = arith.constant 0 : index
    %67 = vector.load %arg4[%c0_74, %c0_75] : memref<1x16xf32, #tpu.memory_space<vmem>>, vector<1x16xf32>
    %68 = vector.broadcast %67 : vector<1x16xf32> to vector<64x16xf32>
    %69 = arith.addf %66, %68 : vector<64x16xf32>
    %cst_76 = arith.constant 0.000000e+00 : f32
    %70 = vector.broadcast %cst_76 : f32 to vector<64x16xf32>
    %71 = arith.maximumf %69, %70 : vector<64x16xf32>
    %c0_77 = arith.constant 0 : index
    %c0_78 = arith.constant 0 : index
    %72 = vector.load %arg5[%c0_77, %c0_78] : memref<64x16xf32, #tpu.memory_space<vmem>>, vector<64x16xf32>
    tpu.vector_store %arg5[%c0_77, %c0_78], %71 {strides = array<i32>} : memref<64x16xf32, #tpu.memory_space<vmem>>, vector<64x16xf32>,
    return
  }
  func.func @transform_0(%arg0: i32) -> (i32, i32, i32, i32, i32) {
    %c0_i32 = arith.constant 0 : i32
    %c0_i32_0 = arith.constant 0 : i32
    %c0_i32_1 = arith.constant 0 : i32
    %c0_i32_2 = arith.constant 0 : i32
    %c0_i32_3 = arith.constant 0 : i32
    return %arg0, %c0_i32, %c0_i32_0, %c0_i32_1, %c0_i32_2 : i32, i32, i32, i32, i32
  }
  func.func @transform_1(%arg0: i32) -> (i32, i32, i32) {
    %c0_i32 = arith.constant 0 : i32
    %c0_i32_0 = arith.constant 0 : i32
    %c0_i32_1 = arith.constant 0 : i32
    %c0_i32_2 = arith.constant 0 : i32
    return %c0_i32, %c0_i32_0, %c0_i32_1 : i32, i32, i32
  }
  func.func @transform_2(%arg0: i32) -> (i32, i32) {
    %c0_i32 = arith.constant 0 : i32
    %c0_i32_0 = arith.constant 0 : i32
    %c0_i32_1 = arith.constant 0 : i32
    return %c0_i32, %c0_i32_0 : i32, i32
  }
  func.func @transform_3(%arg0: i32) -> (i32, i32) {
    %c0_i32 = arith.constant 0 : i32
    %c0_i32_0 = arith.constant 0 : i32
    %c0_i32_1 = arith.constant 0 : i32
    return %c0_i32, %c0_i32_0 : i32, i32
  }
  func.func @transform_4(%arg0: i32) -> (i32, i32) {
    %c0_i32 = arith.constant 0 : i32
    %c0_i32_0 = arith.constant 0 : i32
    return %arg0, %c0_i32 : i32, i32
  }
}

module attributes {stable_mosaic.version = 11 : i64} {
  func.func @kernel(%arg0: i32, %arg1: memref<1x1x10x10x16xf32, #tpu.memory_space<vmem>>, %arg2: memref<9x16x16xf32, #tpu.memory_space<vmem>>, %arg3: memref<64x4xf32, #tpu.memory_space<vmem>>, %arg4: memref<4x16xf32, #tpu.memory_space<vmem>>, %arg5: memref<1x16xf32, #tpu.memory_space<vmem>>, %arg6: memref<64x16xf32, #tpu.memory_space<vmem>>, %arg7: memref<1x1x16xf32, #tpu.memory_space<vmem>>) attributes {dimension_semantics = [#tpu.dimension_semantics<parallel>], iteration_bounds = array<i64: 2>, scalar_prefetch = 0 : i64, scratch_operands = 0 : i64, tpu.core_type = #tpu.core_type<tc>, window_params = [{transform_indices = @transform_0, window_bounds = array<i64: 1, 1, 10, 10, 16>}, {pipeline_mode = #tpu.pipeline_mode<synchronous>, transform_indices = @transform_1, window_bounds = array<i64: 9, 16, 16>}, {transform_indices = @transform_2, window_bounds = array<i64: 64, 4>}, {pipeline_mode = #tpu.pipeline_mode<synchronous>, transform_indices = @transform_3, window_bounds = array<i64: 4, 16>}, {pipeline_mode = #tpu.pipeline_mode<synchronous>, transform_indices = @transform_4, window_bounds = array<i64: 1, 16>}, {transform_indices = @transform_5, window_bounds = array<i64: 64, 16>}, {transform_indices = @transform_6, window_bounds = array<i64: 1, 1, 16>}]} {
    %cst = arith.constant 0.000000e+00 : f32
    %0 = vector.broadcast %cst : f32 to vector<64x16xf32>
    %c0 = arith.constant 0 : index
    %c0_0 = arith.constant 0 : index
    %c0_1 = arith.constant 0 : index
    %c0_2 = arith.constant 0 : index
    %c0_3 = arith.constant 0 : index
    %1 = vector.load %arg1[%c0, %c0_0, %c0_1, %c0_2, %c0_3] : memref<1x1x10x10x16xf32, #tpu.memory_space<vmem>>, vector<1x1x8x8x16xf32>
    %2 = vector.shape_cast %1 : vector<1x1x8x8x16xf32> to vector<8x8x16xf32>
    %3 = vector.shape_cast %2 : vector<8x8x16xf32> to vector<64x16xf32>
    %c0_4 = arith.constant 0 : index
    %c0_5 = arith.constant 0 : index
    %c0_6 = arith.constant 0 : index
    %4 = vector.load %arg2[%c0_4, %c0_5, %c0_6] : memref<9x16x16xf32, #tpu.memory_space<vmem>>, vector<1x16x16xf32>
    %5 = vector.shape_cast %4 : vector<1x16x16xf32> to vector<16x16xf32>
    %cst_7 = arith.constant dense<0.000000e+00> : vector<64x16xf32>
    %6 = tpu.matmul %3, %5, %cst_7 {dimension_numbers = #tpu.dot_dimension_numbers<[1], [0], [0], [1], [0, 0, 1, 1], [], []>} : vector<64x16xf32>, vector<16x16xf32>, vector<64x16xf32> -> vector<64x16xf32>
    %7 = arith.addf %0, %6 : vector<64x16xf32>
    %c0_8 = arith.constant 0 : index
    %c0_9 = arith.constant 0 : index
    %c0_10 = arith.constant 0 : index
    %c1 = arith.constant 1 : index
    %c0_11 = arith.constant 0 : index
    %8 = vector.load %arg1[%c0_8, %c0_9, %c0_10, %c1, %c0_11] : memref<1x1x10x10x16xf32, #tpu.memory_space<vmem>>, vector<1x1x8x8x16xf32>
    %9 = vector.shape_cast %8 : vector<1x1x8x8x16xf32> to vector<8x8x16xf32>
    %10 = vector.shape_cast %9 : vector<8x8x16xf32> to vector<64x16xf32>
    %c1_12 = arith.constant 1 : index
    %c0_13 = arith.constant 0 : index
    %c0_14 = arith.constant 0 : index
    %11 = vector.load %arg2[%c1_12, %c0_13, %c0_14] : memref<9x16x16xf32, #tpu.memory_space<vmem>>, vector<1x16x16xf32>
    %12 = vector.shape_cast %11 : vector<1x16x16xf32> to vector<16x16xf32>
    %cst_15 = arith.constant dense<0.000000e+00> : vector<64x16xf32>
    %13 = tpu.matmul %10, %12, %cst_15 {dimension_numbers = #tpu.dot_dimension_numbers<[1], [0], [0], [1], [0, 0, 1, 1], [], []>} : vector<64x16xf32>, vector<16x16xf32>, vector<64x16xf32> -> vector<64x16xf32>
    %14 = arith.addf %7, %13 : vector<64x16xf32>
    %c0_16 = arith.constant 0 : index
    %c0_17 = arith.constant 0 : index
    %c0_18 = arith.constant 0 : index
    %c2 = arith.constant 2 : index
    %c0_19 = arith.constant 0 : index
    %15 = vector.load %arg1[%c0_16, %c0_17, %c0_18, %c2, %c0_19] : memref<1x1x10x10x16xf32, #tpu.memory_space<vmem>>, vector<1x1x8x8x16xf32>
    %16 = vector.shape_cast %15 : vector<1x1x8x8x16xf32> to vector<8x8x16xf32>
    %17 = vector.shape_cast %16 : vector<8x8x16xf32> to vector<64x16xf32>
    %c2_20 = arith.constant 2 : index
    %c0_21 = arith.constant 0 : index
    %c0_22 = arith.constant 0 : index
    %18 = vector.load %arg2[%c2_20, %c0_21, %c0_22] : memref<9x16x16xf32, #tpu.memory_space<vmem>>, vector<1x16x16xf32>
    %19 = vector.shape_cast %18 : vector<1x16x16xf32> to vector<16x16xf32>
    %cst_23 = arith.constant dense<0.000000e+00> : vector<64x16xf32>
    %20 = tpu.matmul %17, %19, %cst_23 {dimension_numbers = #tpu.dot_dimension_numbers<[1], [0], [0], [1], [0, 0, 1, 1], [], []>} : vector<64x16xf32>, vector<16x16xf32>, vector<64x16xf32> -> vector<64x16xf32>
    %21 = arith.addf %14, %20 : vector<64x16xf32>
    %c0_24 = arith.constant 0 : index
    %c0_25 = arith.constant 0 : index
    %c1_26 = arith.constant 1 : index
    %c0_27 = arith.constant 0 : index
    %c0_28 = arith.constant 0 : index
    %22 = vector.load %arg1[%c0_24, %c0_25, %c1_26, %c0_27, %c0_28] : memref<1x1x10x10x16xf32, #tpu.memory_space<vmem>>, vector<1x1x8x8x16xf32>
    %23 = vector.shape_cast %22 : vector<1x1x8x8x16xf32> to vector<8x8x16xf32>
    %24 = vector.shape_cast %23 : vector<8x8x16xf32> to vector<64x16xf32>
    %c3 = arith.constant 3 : index
    %c0_29 = arith.constant 0 : index
    %c0_30 = arith.constant 0 : index
    %25 = vector.load %arg2[%c3, %c0_29, %c0_30] : memref<9x16x16xf32, #tpu.memory_space<vmem>>, vector<1x16x16xf32>
    %26 = vector.shape_cast %25 : vector<1x16x16xf32> to vector<16x16xf32>
    %cst_31 = arith.constant dense<0.000000e+00> : vector<64x16xf32>
    %27 = tpu.matmul %24, %26, %cst_31 {dimension_numbers = #tpu.dot_dimension_numbers<[1], [0], [0], [1], [0, 0, 1, 1], [], []>} : vector<64x16xf32>, vector<16x16xf32>, vector<64x16xf32> -> vector<64x16xf32>
    %28 = arith.addf %21, %27 : vector<64x16xf32>
    %c0_32 = arith.constant 0 : index
    %c0_33 = arith.constant 0 : index
    %c1_34 = arith.constant 1 : index
    %c1_35 = arith.constant 1 : index
    %c0_36 = arith.constant 0 : index
    %29 = vector.load %arg1[%c0_32, %c0_33, %c1_34, %c1_35, %c0_36] : memref<1x1x10x10x16xf32, #tpu.memory_space<vmem>>, vector<1x1x8x8x16xf32>
    %30 = vector.shape_cast %29 : vector<1x1x8x8x16xf32> to vector<8x8x16xf32>
    %31 = vector.shape_cast %30 : vector<8x8x16xf32> to vector<64x16xf32>
    %c4 = arith.constant 4 : index
    %c0_37 = arith.constant 0 : index
    %c0_38 = arith.constant 0 : index
    %32 = vector.load %arg2[%c4, %c0_37, %c0_38] : memref<9x16x16xf32, #tpu.memory_space<vmem>>, vector<1x16x16xf32>
    %33 = vector.shape_cast %32 : vector<1x16x16xf32> to vector<16x16xf32>
    %cst_39 = arith.constant dense<0.000000e+00> : vector<64x16xf32>
    %34 = tpu.matmul %31, %33, %cst_39 {dimension_numbers = #tpu.dot_dimension_numbers<[1], [0], [0], [1], [0, 0, 1, 1], [], []>} : vector<64x16xf32>, vector<16x16xf32>, vector<64x16xf32> -> vector<64x16xf32>
    %35 = arith.addf %28, %34 : vector<64x16xf32>
    %c0_40 = arith.constant 0 : index
    %c0_41 = arith.constant 0 : index
    %c1_42 = arith.constant 1 : index
    %c2_43 = arith.constant 2 : index
    %c0_44 = arith.constant 0 : index
    %36 = vector.load %arg1[%c0_40, %c0_41, %c1_42, %c2_43, %c0_44] : memref<1x1x10x10x16xf32, #tpu.memory_space<vmem>>, vector<1x1x8x8x16xf32>
    %37 = vector.shape_cast %36 : vector<1x1x8x8x16xf32> to vector<8x8x16xf32>
    %38 = vector.shape_cast %37 : vector<8x8x16xf32> to vector<64x16xf32>
    %c5 = arith.constant 5 : index
    %c0_45 = arith.constant 0 : index
    %c0_46 = arith.constant 0 : index
    %39 = vector.load %arg2[%c5, %c0_45, %c0_46] : memref<9x16x16xf32, #tpu.memory_space<vmem>>, vector<1x16x16xf32>
    %40 = vector.shape_cast %39 : vector<1x16x16xf32> to vector<16x16xf32>
    %cst_47 = arith.constant dense<0.000000e+00> : vector<64x16xf32>
    %41 = tpu.matmul %38, %40, %cst_47 {dimension_numbers = #tpu.dot_dimension_numbers<[1], [0], [0], [1], [0, 0, 1, 1], [], []>} : vector<64x16xf32>, vector<16x16xf32>, vector<64x16xf32> -> vector<64x16xf32>
    %42 = arith.addf %35, %41 : vector<64x16xf32>
    %c0_48 = arith.constant 0 : index
    %c0_49 = arith.constant 0 : index
    %c2_50 = arith.constant 2 : index
    %c0_51 = arith.constant 0 : index
    %c0_52 = arith.constant 0 : index
    %43 = vector.load %arg1[%c0_48, %c0_49, %c2_50, %c0_51, %c0_52] : memref<1x1x10x10x16xf32, #tpu.memory_space<vmem>>, vector<1x1x8x8x16xf32>
    %44 = vector.shape_cast %43 : vector<1x1x8x8x16xf32> to vector<8x8x16xf32>
    %45 = vector.shape_cast %44 : vector<8x8x16xf32> to vector<64x16xf32>
    %c6 = arith.constant 6 : index
    %c0_53 = arith.constant 0 : index
    %c0_54 = arith.constant 0 : index
    %46 = vector.load %arg2[%c6, %c0_53, %c0_54] : memref<9x16x16xf32, #tpu.memory_space<vmem>>, vector<1x16x16xf32>
    %47 = vector.shape_cast %46 : vector<1x16x16xf32> to vector<16x16xf32>
    %cst_55 = arith.constant dense<0.000000e+00> : vector<64x16xf32>
    %48 = tpu.matmul %45, %47, %cst_55 {dimension_numbers = #tpu.dot_dimension_numbers<[1], [0], [0], [1], [0, 0, 1, 1], [], []>} : vector<64x16xf32>, vector<16x16xf32>, vector<64x16xf32> -> vector<64x16xf32>
    %49 = arith.addf %42, %48 : vector<64x16xf32>
    %c0_56 = arith.constant 0 : index
    %c0_57 = arith.constant 0 : index
    %c2_58 = arith.constant 2 : index
    %c1_59 = arith.constant 1 : index
    %c0_60 = arith.constant 0 : index
    %50 = vector.load %arg1[%c0_56, %c0_57, %c2_58, %c1_59, %c0_60] : memref<1x1x10x10x16xf32, #tpu.memory_space<vmem>>, vector<1x1x8x8x16xf32>
    %51 = vector.shape_cast %50 : vector<1x1x8x8x16xf32> to vector<8x8x16xf32>
    %52 = vector.shape_cast %51 : vector<8x8x16xf32> to vector<64x16xf32>
    %c7 = arith.constant 7 : index
    %c0_61 = arith.constant 0 : index
    %c0_62 = arith.constant 0 : index
    %53 = vector.load %arg2[%c7, %c0_61, %c0_62] : memref<9x16x16xf32, #tpu.memory_space<vmem>>, vector<1x16x16xf32>
    %54 = vector.shape_cast %53 : vector<1x16x16xf32> to vector<16x16xf32>
    %cst_63 = arith.constant dense<0.000000e+00> : vector<64x16xf32>
    %55 = tpu.matmul %52, %54, %cst_63 {dimension_numbers = #tpu.dot_dimension_numbers<[1], [0], [0], [1], [0, 0, 1, 1], [], []>} : vector<64x16xf32>, vector<16x16xf32>, vector<64x16xf32> -> vector<64x16xf32>
    %56 = arith.addf %49, %55 : vector<64x16xf32>
    %c0_64 = arith.constant 0 : index
    %c0_65 = arith.constant 0 : index
    %c2_66 = arith.constant 2 : index
    %c2_67 = arith.constant 2 : index
    %c0_68 = arith.constant 0 : index
    %57 = vector.load %arg1[%c0_64, %c0_65, %c2_66, %c2_67, %c0_68] : memref<1x1x10x10x16xf32, #tpu.memory_space<vmem>>, vector<1x1x8x8x16xf32>
    %58 = vector.shape_cast %57 : vector<1x1x8x8x16xf32> to vector<8x8x16xf32>
    %59 = vector.shape_cast %58 : vector<8x8x16xf32> to vector<64x16xf32>
    %c8 = arith.constant 8 : index
    %c0_69 = arith.constant 0 : index
    %c0_70 = arith.constant 0 : index
    %60 = vector.load %arg2[%c8, %c0_69, %c0_70] : memref<9x16x16xf32, #tpu.memory_space<vmem>>, vector<1x16x16xf32>
    %61 = vector.shape_cast %60 : vector<1x16x16xf32> to vector<16x16xf32>
    %cst_71 = arith.constant dense<0.000000e+00> : vector<64x16xf32>
    %62 = tpu.matmul %59, %61, %cst_71 {dimension_numbers = #tpu.dot_dimension_numbers<[1], [0], [0], [1], [0, 0, 1, 1], [], []>} : vector<64x16xf32>, vector<16x16xf32>, vector<64x16xf32> -> vector<64x16xf32>
    %63 = arith.addf %56, %62 : vector<64x16xf32>
    %c0_72 = arith.constant 0 : index
    %c0_73 = arith.constant 0 : index
    %64 = vector.load %arg3[%c0_72, %c0_73] : memref<64x4xf32, #tpu.memory_space<vmem>>, vector<64x4xf32>
    %c0_74 = arith.constant 0 : index
    %c0_75 = arith.constant 0 : index
    %65 = vector.load %arg4[%c0_74, %c0_75] : memref<4x16xf32, #tpu.memory_space<vmem>>, vector<4x16xf32>
    %cst_76 = arith.constant dense<0.000000e+00> : vector<64x16xf32>
    %66 = tpu.matmul %64, %65, %cst_76 {dimension_numbers = #tpu.dot_dimension_numbers<[1], [0], [0], [1], [0, 0, 1, 1], [], []>} : vector<64x4xf32>, vector<4x16xf32>, vector<64x16xf32> -> vector<64x16xf32>
    %67 = arith.addf %63, %66 : vector<64x16xf32>
    %c0_77 = arith.constant 0 : index
    %c0_78 = arith.constant 0 : index
    %68 = vector.load %arg5[%c0_77, %c0_78] : memref<1x16xf32, #tpu.memory_space<vmem>>, vector<1x16xf32>
    %69 = vector.broadcast %68 : vector<1x16xf32> to vector<64x16xf32>
    %70 = arith.addf %67, %69 : vector<64x16xf32>
    %c0_79 = arith.constant 0 : index
    %c0_80 = arith.constant 0 : index
    %71 = vector.load %arg6[%c0_79, %c0_80] : memref<64x16xf32, #tpu.memory_space<vmem>>, vector<64x16xf32>
    tpu.vector_store %arg6[%c0_79, %c0_80], %70 {strides = array<i32>} : memref<64x16xf32, #tpu.memory_space<vmem>>, vector<64x16xf32>,
    %cst_81 = arith.constant dense<0.000000e+00> : vector<16xf32>
    %72 = vector.multi_reduction <add>, %70, %cst_81 [0] : vector<64x16xf32> to vector<16xf32>
    %73 = vector.shape_cast %72 : vector<16xf32> to vector<1x16xf32>
    %cst_82 = arith.constant 6.400000e+01 : f32
    %74 = vector.broadcast %cst_82 : f32 to vector<1x16xf32>
    %75 = arith.divf %73, %74 : vector<1x16xf32>
    %c0_83 = arith.constant 0 : index
    %c0_84 = arith.constant 0 : index
    %c0_85 = arith.constant 0 : index
    %76 = vector.load %arg7[%c0_83, %c0_84, %c0_85] : memref<1x1x16xf32, #tpu.memory_space<vmem>>, vector<1x1x16xf32>
    %77 = vector.shape_cast %76 : vector<1x1x16xf32> to vector<1x16xf32>
    %78 = vector.shape_cast %75 : vector<1x16xf32> to vector<1x1x16xf32>
    tpu.vector_store %arg7[%c0_83, %c0_84, %c0_85], %78 {strides = array<i32>} : memref<1x1x16xf32, #tpu.memory_space<vmem>>, vector<1x1x16xf32>,
    return
  }
  func.func @transform_0(%arg0: i32) -> (i32, i32, i32, i32, i32) {
    %c0_i32 = arith.constant 0 : i32
    %c0_i32_0 = arith.constant 0 : i32
    %c0_i32_1 = arith.constant 0 : i32
    %c0_i32_2 = arith.constant 0 : i32
    %c0_i32_3 = arith.constant 0 : i32
    return %arg0, %c0_i32, %c0_i32_0, %c0_i32_1, %c0_i32_2 : i32, i32, i32, i32, i32
  }
  func.func @transform_1(%arg0: i32) -> (i32, i32, i32) {
    %c0_i32 = arith.constant 0 : i32
    %c0_i32_0 = arith.constant 0 : i32
    %c0_i32_1 = arith.constant 0 : i32
    %c0_i32_2 = arith.constant 0 : i32
    return %c0_i32, %c0_i32_0, %c0_i32_1 : i32, i32, i32
  }
  func.func @transform_2(%arg0: i32) -> (i32, i32) {
    %c0_i32 = arith.constant 0 : i32
    %c0_i32_0 = arith.constant 0 : i32
    return %arg0, %c0_i32 : i32, i32
  }
  func.func @transform_3(%arg0: i32) -> (i32, i32) {
    %c0_i32 = arith.constant 0 : i32
    %c0_i32_0 = arith.constant 0 : i32
    %c0_i32_1 = arith.constant 0 : i32
    return %c0_i32, %c0_i32_0 : i32, i32
  }
  func.func @transform_4(%arg0: i32) -> (i32, i32) {
    %c0_i32 = arith.constant 0 : i32
    %c0_i32_0 = arith.constant 0 : i32
    %c0_i32_1 = arith.constant 0 : i32
    return %c0_i32, %c0_i32_0 : i32, i32
  }
  func.func @transform_5(%arg0: i32) -> (i32, i32) {
    %c0_i32 = arith.constant 0 : i32
    %c0_i32_0 = arith.constant 0 : i32
    return %arg0, %c0_i32 : i32, i32
  }
  func.func @transform_6(%arg0: i32) -> (i32, i32, i32) {
    %c0_i32 = arith.constant 0 : i32
    %c0_i32_0 = arith.constant 0 : i32
    %c0_i32_1 = arith.constant 0 : i32
    return %arg0, %c0_i32, %c0_i32_0 : i32, i32, i32
  }
}

module attributes {stable_mosaic.version = 11 : i64} {
  func.func @kernel(%arg0: i32, %arg1: memref<64x16xf32, #tpu.memory_space<vmem>>, %arg2: memref<1x1x16xf32, #tpu.memory_space<vmem>>, %arg3: memref<16x2xf32, #tpu.memory_space<vmem>>, %arg4: memref<2x16xf32, #tpu.memory_space<vmem>>, %arg5: memref<64x16xf32, #tpu.memory_space<vmem>>) attributes {dimension_semantics = [#tpu.dimension_semantics<parallel>], iteration_bounds = array<i64: 2>, scalar_prefetch = 0 : i64, scratch_operands = 0 : i64, tpu.core_type = #tpu.core_type<tc>, window_params = [{transform_indices = @transform_0, window_bounds = array<i64: 64, 16>}, {transform_indices = @transform_1, window_bounds = array<i64: 1, 1, 16>}, {pipeline_mode = #tpu.pipeline_mode<synchronous>, transform_indices = @transform_2, window_bounds = array<i64: 16, 2>}, {pipeline_mode = #tpu.pipeline_mode<synchronous>, transform_indices = @transform_3, window_bounds = array<i64: 2, 16>}, {transform_indices = @transform_4, window_bounds = array<i64: 64, 16>}]} {
    %c0 = arith.constant 0 : index
    %c0_0 = arith.constant 0 : index
    %c0_1 = arith.constant 0 : index
    %0 = vector.load %arg2[%c0, %c0_0, %c0_1] : memref<1x1x16xf32, #tpu.memory_space<vmem>>, vector<1x1x16xf32>
    %1 = vector.shape_cast %0 : vector<1x1x16xf32> to vector<1x16xf32>
    %c0_2 = arith.constant 0 : index
    %c0_3 = arith.constant 0 : index
    %2 = vector.load %arg3[%c0_2, %c0_3] : memref<16x2xf32, #tpu.memory_space<vmem>>, vector<16x2xf32>
    %cst = arith.constant dense<0.000000e+00> : vector<1x2xf32>
    %3 = tpu.matmul %1, %2, %cst {dimension_numbers = #tpu.dot_dimension_numbers<[1], [0], [0], [1], [0, 0, 1, 1], [], []>} : vector<1x16xf32>, vector<16x2xf32>, vector<1x2xf32> -> vector<1x2xf32>
    %cst_4 = arith.constant 0.000000e+00 : f32
    %4 = vector.broadcast %cst_4 : f32 to vector<1x2xf32>
    %5 = arith.maximumf %3, %4 : vector<1x2xf32>
    %c0_5 = arith.constant 0 : index
    %c0_6 = arith.constant 0 : index
    %6 = vector.load %arg4[%c0_5, %c0_6] : memref<2x16xf32, #tpu.memory_space<vmem>>, vector<2x16xf32>
    %cst_7 = arith.constant dense<0.000000e+00> : vector<1x16xf32>
    %7 = tpu.matmul %5, %6, %cst_7 {dimension_numbers = #tpu.dot_dimension_numbers<[1], [0], [0], [1], [0, 0, 1, 1], [], []>} : vector<1x2xf32>, vector<2x16xf32>, vector<1x16xf32> -> vector<1x16xf32>
    %8 = arith.negf %7 : vector<1x16xf32>
    %9 = math.exp %8 : vector<1x16xf32>
    %cst_8 = arith.constant 1.000000e+00 : f32
    %10 = vector.broadcast %cst_8 : f32 to vector<1x16xf32>
    %11 = arith.addf %10, %9 : vector<1x16xf32>
    %12 = arith.divf %10, %11 : vector<1x16xf32>
    %c0_9 = arith.constant 0 : index
    %c0_10 = arith.constant 0 : index
    %13 = vector.load %arg1[%c0_9, %c0_10] : memref<64x16xf32, #tpu.memory_space<vmem>>, vector<64x16xf32>
    %14 = vector.broadcast %12 : vector<1x16xf32> to vector<64x16xf32>
    %15 = arith.mulf %13, %14 : vector<64x16xf32>
    %c0_11 = arith.constant 0 : index
    %c0_12 = arith.constant 0 : index
    %16 = vector.load %arg5[%c0_11, %c0_12] : memref<64x16xf32, #tpu.memory_space<vmem>>, vector<64x16xf32>
    tpu.vector_store %arg5[%c0_11, %c0_12], %15 {strides = array<i32>} : memref<64x16xf32, #tpu.memory_space<vmem>>, vector<64x16xf32>,
    return
  }
  func.func @transform_0(%arg0: i32) -> (i32, i32) {
    %c0_i32 = arith.constant 0 : i32
    %c0_i32_0 = arith.constant 0 : i32
    return %arg0, %c0_i32 : i32, i32
  }
  func.func @transform_1(%arg0: i32) -> (i32, i32, i32) {
    %c0_i32 = arith.constant 0 : i32
    %c0_i32_0 = arith.constant 0 : i32
    %c0_i32_1 = arith.constant 0 : i32
    return %arg0, %c0_i32, %c0_i32_0 : i32, i32, i32
  }
  func.func @transform_2(%arg0: i32) -> (i32, i32) {
    %c0_i32 = arith.constant 0 : i32
    %c0_i32_0 = arith.constant 0 : i32
    %c0_i32_1 = arith.constant 0 : i32
    return %c0_i32, %c0_i32_0 : i32, i32
  }
  func.func @transform_3(%arg0: i32) -> (i32, i32) {
    %c0_i32 = arith.constant 0 : i32
    %c0_i32_0 = arith.constant 0 : i32
    %c0_i32_1 = arith.constant 0 : i32
    return %c0_i32, %c0_i32_0 : i32, i32
  }
  func.func @transform_4(%arg0: i32) -> (i32, i32) {
    %c0_i32 = arith.constant 0 : i32
    %c0_i32_0 = arith.constant 0 : i32
    return %arg0, %c0_i32 : i32, i32
  }
}

</mosaic_0001>

<llo_original>
// kernel: stem_block_forward.5
$region0: #{stem_block_forward.5}
  #allocation0 [shape = 'u32[]', space=smem, size = 0x4, offset = 0x4, fixed_abs, tag = 'smem constant byte address 0x4 - core index']
  #allocation1 [shape = 'u32[144,128]{1,0:T(1,128)}', space=vmem, size = 0x12000, scoped, tag = 'internal scratch']
  %s0 = inlined_call_operand.vmem [shape: f32[128,16], index: 0, kind: input, shape index: {}]
  %s1 = inlined_call_operand.vmem [shape: f32[2,1,16], index: 1, kind: input, shape index: {}]
  %s2 = inlined_call_operand.vmem [shape: f32[16,2], index: 2, kind: input, shape index: {}]
  %s3 = inlined_call_operand.vmem [shape: f32[2,16], index: 3, kind: input, shape index: {}]
  %s4 = inlined_call_operand.hbm [shape: f32[128,16], index: 4, kind: output, shape index: {}]
  %s5 = sld [smem:[#allocation0]]
  $region49: #{stem_block_forward.5} parent=0
    _
  %s7 = ssub.s32 1, %s5
  %s8 = scalar_select 0, %s7, %s5
  $region1: #{stem_block_forward.5} parent=0
    #allocation2 [shape = 'u8[65536]{0}', space=vmem, size = 0x10000, scoped, tag = 'output window, operand 0']
    #allocation3 [shape = 's32[2]{0}', space=sflag, size = 0x8, scoped, tag = 'scoped memory for stem_block_forward.5']
    %9 = vsyncpa [#allocation3], 0
    %s10 = scalar_lea.sflag [#allocation3], 1
    %11 = vsyncpa %s10, 0
    loop: start=0, step=1, limit=4
    $region2: #{stem_block_forward.5} parent=1 // loop_pre_header
      _
    $region3: #{stem_block_forward.5} parent=1 // loop_header
      %s13 = sphi 0, %s17
      %p14 = scmp.ge.s32.totalorder %s13, 4
      %s23 = sphi 0, %s25
      %s26 = sphi 0, %s23
      %s27 = sphi 0, %s26
      %s43 = sphi 0, %s27
      %s49 = sphi 0, %s51
      %s52 = sphi 0, %s49
      %s53 = sphi 0, %s52
      %s69 = sphi 0, %s53
      %s73 = sphi 0, %s73
      %s75 = sphi 0, %s73
      %s76 = sphi 0, %s75
      %s90 = sphi 0, %s76
      %s94 = sphi 0, %s94
      %s96 = sphi 0, %s94
      %s97 = sphi 0, %s96
      %s111 = sphi 0, %s97
      %s117 = sphi 0, %s119
      %s120 = sphi 0, %s117
      %s121 = sphi 0, %s120
      %s137 = sphi 0, %s121
    $region4: #{stem_block_forward.5} parent=1 // loop_header_branch
      %16 = sbr.rel (%p14) target = $region8
    $region5: #{stem_block_forward.5} parent=1 // loop_body
      %s18 = ssub.s32 %s13, 1
      %s19 = ssub.s32 %s13, 2
      %s20 = sadd.s32 %s13, 1
      %s21 = ssub.s32 %s13, %s20
      %p22 = scmp.eq.s32.totalorder %s21, 0
      %s24 = sadd.s32 %s23, 1
      %s25 = scalar_select %p22, %s23, %s24
      %p28 = pneg %p22
      %p29 = scmp.eq.s32.totalorder %s13, 1
      %p30 = por %p28, %p29
      %p31 = scmp.ne.s32.totalorder %s23, %s26
      %p32 = scmp.eq.s32.totalorder %s13, 0
      %p33 = por %p31, %p32
      %p34 = scmp.ne.s32.totalorder %s23, %s26
      %p35 = scmp.eq.s32.totalorder %s18, 1
      %p36 = por %p34, %p35
      %p37 = scmp.ne.s32.totalorder %s26, %s27
      %p38 = scmp.eq.s32.totalorder %s18, 0
      %p39 = por %p37, %p38
      %p40 = scmp.ne.s32.totalorder %s26, %s27
      %p41 = scmp.eq.s32.totalorder %s19, 1
      %p42 = por %p40, %p41
      %p44 = scmp.ne.s32.totalorder %s27, %s43
      %p45 = scmp.eq.s32.totalorder %s19, 0
      %p46 = por %p44, %p45
      %s47 = ssub.s32 %s13, %s20
      %p48 = scmp.eq.s32.totalorder %s47, 0
      %s50 = sadd.s32 %s49, 1
      %s51 = scalar_select %p48, %s49, %s50
      %p54 = pneg %p48
      %p55 = scmp.eq.s32.totalorder %s13, 1
      %p56 = por %p54, %p55
      %p57 = scmp.ne.s32.totalorder %s49, %s52
      %p58 = scmp.eq.s32.totalorder %s13, 0
      %p59 = por %p57, %p58
      %p60 = scmp.ne.s32.totalorder %s49, %s52
      %p61 = scmp.eq.s32.totalorder %s18, 1
      %p62 = por %p60, %p61
      %p63 = scmp.ne.s32.totalorder %s52, %s53
      %p64 = scmp.eq.s32.totalorder %s18, 0
      %p65 = por %p63, %p64
      %p66 = scmp.ne.s32.totalorder %s52, %s53
      %p67 = scmp.eq.s32.totalorder %s19, 1
      %p68 = por %p66, %p67
      %p70 = scmp.ne.s32.totalorder %s53, %s69
      %p71 = scmp.eq.s32.totalorder %s19, 0
      %p72 = por %p70, %p71
      %s74 = sadd.s32 %s73, 1
      %p77 = scmp.eq.s32.totalorder %s13, 1
      %p78 = scmp.ne.s32.totalorder %s73, %s75
      %p79 = scmp.eq.s32.totalorder %s13, 0
      %p80 = por %p78, %p79
      %p81 = scmp.ne.s32.totalorder %s73, %s75
      %p82 = scmp.eq.s32.totalorder %s18, 1
      %p83 = por %p81, %p82
      %p84 = scmp.ne.s32.totalorder %s75, %s76
      %p85 = scmp.eq.s32.totalorder %s18, 0
      %p86 = por %p84, %p85
      %p87 = scmp.ne.s32.totalorder %s75, %s76
      %p88 = scmp.eq.s32.totalorder %s19, 1
      %p89 = por %p87, %p88
      %p91 = scmp.ne.s32.totalorder %s76, %s90
      %p92 = scmp.eq.s32.totalorder %s19, 0
      %p93 = por %p91, %p92
      %s95 = sadd.s32 %s94, 1
      %p98 = scmp.eq.s32.totalorder %s13, 1
      %p99 = scmp.ne.s32.totalorder %s94, %s96
      %p100 = scmp.eq.s32.totalorder %s13, 0
      %p101 = por %p99, %p100
      %p102 = scmp.ne.s32.totalorder %s94, %s96
      %p103 = scmp.eq.s32.totalorder %s18, 1
      %p104 = por %p102, %p103
      %p105 = scmp.ne.s32.totalorder %s96, %s97
      %p106 = scmp.eq.s32.totalorder %s18, 0
      %p107 = por %p105, %p106
      %p108 = scmp.ne.s32.totalorder %s96, %s97
      %p109 = scmp.eq.s32.totalorder %s19, 1
      %p110 = por %p108, %p109
      %p112 = scmp.ne.s32.totalorder %s97, %s111
      %p113 = scmp.eq.s32.totalorder %s19, 0
      %p114 = por %p112, %p113
      %s115 = ssub.s32 %s13, %s20
      %p116 = scmp.eq.s32.totalorder %s115, 0
      %s118 = sadd.s32 %s117, 1
      %s119 = scalar_select %p116, %s117, %s118
      %p122 = pneg %p116
      %p123 = scmp.eq.s32.totalorder %s13, 1
      %p124 = por %p122, %p123
      %p125 = scmp.ne.s32.totalorder %s117, %s120
      %p126 = scmp.eq.s32.totalorder %s13, 0
      %p127 = por %p125, %p126
      %p128 = scmp.ne.s32.totalorder %s117, %s120
      %p129 = scmp.eq.s32.totalorder %s18, 1
      %p130 = por %p128, %p129
      %p131 = scmp.ne.s32.totalorder %s120, %s121
      %p132 = scmp.eq.s32.totalorder %s18, 0
      %p133 = por %p131, %p132
      %p134 = scmp.ne.s32.totalorder %s120, %s121
      %p135 = scmp.eq.s32.totalorder %s19, 1
      %p136 = por %p134, %p135
      %p138 = scmp.ne.s32.totalorder %s121, %s137
      %p139 = scmp.eq.s32.totalorder %s19, 0
      %p140 = por %p138, %p139
      %p141 = scmp.le.s32.totalorder 1, %s13
      %p142 = scmp.lt.s32.totalorder %s13, 3
      %p143 = pnand %p141, %p142
      %p144 = pneg %p143
      // Predicated region
      $region9: #{stem_block_forward.5} parent=5 // pred_check
        _
      $region10: #{stem_block_forward.5} parent=5 // pred_check_branch
        %146 = sbr.rel (%p143) target = $region12
      $region11: #{stem_block_forward.5} parent=5 // pred_region
        %s147 = ssub.s32 %s13, 1
        // Predicated region
        $region13: #{stem_block_forward.5} parent=11 // pred_check
          %p148 = pneg %p86
        $region14: #{stem_block_forward.5} parent=11 // pred_check_branch
          %150 = sbr.rel (%p148) target = $region16
        $region15: #{stem_block_forward.5} parent=11 // pred_region
          _
        $region16: #{stem_block_forward.5} parent=11 // pred_fallthru
          _
        // Predicated region
        $region17: #{stem_block_forward.5} parent=11 // pred_check
          %p151 = pneg %p107
        $region18: #{stem_block_forward.5} parent=11 // pred_check_branch
          %153 = sbr.rel (%p151) target = $region20
        $region19: #{stem_block_forward.5} parent=11 // pred_region
          _
        $region20: #{stem_block_forward.5} parent=11 // pred_fallthru
          _
      $region12: #{stem_block_forward.5} parent=5 // pred_fallthru
        _
      %p154 = scmp.lt.s32.totalorder %s13, 2
      // Predicated region
      $region21: #{stem_block_forward.5} parent=5 // pred_check
        %p155 = pneg %p154
      $region22: #{stem_block_forward.5} parent=5 // pred_check_branch
        %157 = sbr.rel (%p155) target = $region24
      $region23: #{stem_block_forward.5} parent=5 // pred_region
        // Predicated region
        $region25: #{stem_block_forward.5} parent=23 // pred_check
          %p158 = pneg %p33
        $region26: #{stem_block_forward.5} parent=23 // pred_check_branch
          %160 = sbr.rel (%p158) target = $region28
        $region27: #{stem_block_forward.5} parent=23 // pred_region
          %s161 = smul.u32 8, %s13
          %p162 = scmp.lt.s32.totalorder %s161, 15
          %s163 = scalar_select %p162, %s161, 15
          %s164 = smul.addr %s163, 8
          %s165 = scalar_lea.vmem %s0, %s164
          %s166 = smul.u32 8, %s13
        $region28: #{stem_block_forward.5} parent=23 // pred_fallthru
          _
        // Predicated region
        $region29: #{stem_block_forward.5} parent=23 // pred_check
          %p167 = pneg %p59
        $region30: #{stem_block_forward.5} parent=23 // pred_check_branch
          %169 = sbr.rel (%p167) target = $region32
        $region31: #{stem_block_forward.5} parent=23 // pred_region
          %p170 = scmp.lt.s32.totalorder %s13, 1
          %s171 = scalar_select %p170, %s13, 1
          %s172 = scalar_lea.vmem %s1, %s171
        $region32: #{stem_block_forward.5} parent=23 // pred_fallthru
          _
      $region24: #{stem_block_forward.5} parent=5 // pred_fallthru
        _
      %p173 = scmp.le.s32.totalorder 1, %s13
      %p174 = scmp.lt.s32.totalorder %s13, 3
      %p175 = pnand %p173, %p174
      %p176 = pneg %p175
      // Predicated region
      $region33: #{stem_block_forward.5} parent=5 // pred_check
        _
      $region34: #{stem_block_forward.5} parent=5 // pred_check_branch
        %178 = sbr.rel (%p175) target = $region36
      $region35: #{stem_block_forward.5} parent=5 // pred_region
        %s179 = ssub.s32 %s13, 1
        %s180 = smul.u32 8, %s18
        %p181 = scmp.lt.s32.totalorder %s180, 15
        %s182 = scalar_select %p181, %s180, 15
        %s183 = smul.addr %s182, 8
        %s184 = scalar_lea.vmem %s0, %s183
        %p185 = pneg %p39
        %p186 = pneg %p36
        %p187 = scmp.lt.s32.totalorder %s18, 1
        %s188 = scalar_select %p187, %s18, 1
        %s189 = scalar_lea.vmem %s1, %s188
        %p190 = pneg %p65
        %p191 = pneg %p62
        %p192 = pneg %p86
        %p193 = pneg %p83
        %p194 = pneg %p107
        %p195 = pneg %p104
        %p196 = pneg %p133
        %p197 = pneg %p130
        %s198 = sand.u32 %s120, 1
        %s199 = scalar_lea.sflag [#allocation3], %s198
        %s200 = sand.u32 %s120, 1
        %s201 = smul.addr %s200, 64
        %s202 = scalar_lea.vmem [#allocation2], %s201
        %s203 = smul.u32 8, %s18
        %p204 = scmp.lt.s32.totalorder %s203, 15
        %s205 = scalar_select %p204, %s203, 15
        %s206 = smul.addr %s205, 8
        %s207 = scalar_lea.vmem %s0, %s206
        %s208 = smul.u32 8, %s18
        %p209 = scmp.lt.s32.totalorder %s18, 1
        %s210 = scalar_select %p209, %s18, 1
        %s211 = scalar_lea.vmem %s1, %s210
        %s212 = smul.u32 8, %s18
        %v213 = vld [vmem:[%s211] sm:$0x1]
        %v214 = vld [vmem:[%s2] sm:$0xff]
        %v215 = vld [vmem:[%s2 + $0x8] sm:$0xff]
        %vm216 = vcmask 130048
        %v218 = vsel %vm216, %v213, 0
        %220 = vmatprep.subr.mxu0 0.0
        %221 = vmatpush1.msra.mxu0 0.0
        %222 = vmatprep.subr.mxu0 0.0
        %223 = vmatpush1.msra.mxu0 0.0
        %224 = vmatprep.subr.mxu0 0.0
        %225 = vmatpush1.msra.mxu0 0.0
        %226 = vmatprep.subr.mxu0 0.0
        %227 = vmatpush1.msra.mxu0 0.0
        %228 = vmatprep.subr.mxu0 0.0
        %229 = vmatpush1.msra.mxu0 0.0
        %230 = vmatprep.subr.mxu0 0.0
        %231 = vmatpush1.msra.mxu0 0.0
        %232 = vmatprep.subr.mxu0 0.0
        %233 = vmatpush1.msra.mxu0 0.0
        %234 = vmatprep.subr.mxu0 0.0
        %235 = vmatpush1.msra.mxu0 0.0
        %236 = vmatprep.subr.mxu0 0.0
        %237 = vmatpush1.msra.mxu0 0.0
        %238 = vmatprep.subr.mxu0 0.0
        %239 = vmatpush1.msra.mxu0 0.0
        %240 = vmatprep.subr.mxu0 0.0
        %241 = vmatpush1.msra.mxu0 0.0
        %242 = vmatprep.subr.mxu0 0.0
        %243 = vmatpush1.msra.mxu0 0.0
        %244 = vmatprep.subr.mxu0 0.0
        %245 = vmatpush1.msra.mxu0 0.0
        %246 = vmatprep.subr.mxu0 0.0
        %247 = vmatpush1.msra.mxu0 0.0
        %248 = vmatprep.subr.mxu0 0.0
        %249 = vmatpush1.msra.mxu0 %v215
        %250 = vmatprep.subr.mxu0 0.0
        %251 = vmatpush1.msra.mxu0 %v214
        %252 = vmatprep.subr.mxu0 0.0
        %253 = vmatpush2.msra.mxu0 0.0
        %254 = vmatprep.subr.mxu0 0.0
        %255 = vmatpush2.msra.mxu0 0.0
        %256 = vmatprep.subr.mxu0 0.0
        %257 = vmatpush2.msra.mxu0 0.0
        %258 = vmatprep.subr.mxu0 0.0
        %259 = vmatpush2.msra.mxu0 0.0
        %260 = vmatprep.subr.mxu0 0.0
        %261 = vmatpush2.msra.mxu0 0.0
        %262 = vmatprep.subr.mxu0 0.0
        %263 = vmatpush2.msra.mxu0 0.0
        %264 = vmatprep.subr.mxu0 0.0
        %265 = vmatpush2.msra.mxu0 0.0
        %266 = vmatprep.subr.mxu0 0.0
        %267 = vmatpush2.msra.mxu0 0.0
        %268 = vmatprep.subr.mxu0 0.0
        %269 = vmatpush2.msra.mxu0 0.0
        %270 = vmatprep.subr.mxu0 0.0
        %271 = vmatpush2.msra.mxu0 0.0
        %272 = vmatprep.subr.mxu0 0.0
        %273 = vmatpush2.msra.mxu0 0.0
        %274 = vmatprep.subr.mxu0 0.0
        %275 = vmatpush2.msra.mxu0 0.0
        %276 = vmatprep.subr.mxu0 0.0
        %277 = vmatpush2.msra.mxu0 0.0
        %278 = vmatprep.subr.mxu0 0.0
        %279 = vmatpush2.msra.mxu0 0.0
        %280 = vmatprep.subr.mxu0 0.0
        %281 = vmatpush2.msra.mxu0 0.0
        %282 = vmatprep.subr.mxu0 0.0
        %283 = vmatpush2.msra.mxu0 0.0
        %284 = vmatprep.mubr.f32.mxu0 0.0
        %285 = vmatmul.mubr.f32.gmra.mxu0 %v218
        %v286 = vpop.f32.mrf.mxu0
        %v287 = vadd.f32 0.0, %v286
        %v288 = vpop.f32.mrf.mxu0
        %289 = vdwg.mxu0
        %v290 = vmax.f32 %v287, 0.0
        %v291 = vld [vmem:[%s3] sm:$0x3]
        %vm292 = vcmask 15360
        %v294 = vsel %vm292, %v290, 0
        %vm296 = vcmask 1041408
        %v298 = vsel %vm296, %v291, 0
        %300 = vmatprep.subr.mxu0 0.0
        %301 = vmatpush1.msra.mxu0 0.0
        %302 = vmatprep.subr.mxu0 0.0
        %303 = vmatpush1.msra.mxu0 0.0
        %304 = vmatprep.subr.mxu0 0.0
        %305 = vmatpush1.msra.mxu0 0.0
        %306 = vmatprep.subr.mxu0 0.0
        %307 = vmatpush1.msra.mxu0 0.0
        %308 = vmatprep.subr.mxu0 0.0
        %309 = vmatpush1.msra.mxu0 0.0
        %310 = vmatprep.subr.mxu0 0.0
        %311 = vmatpush1.msra.mxu0 0.0
        %312 = vmatprep.subr.mxu0 0.0
        %313 = vmatpush1.msra.mxu0 0.0
        %314 = vmatprep.subr.mxu0 0.0
        %315 = vmatpush1.msra.mxu0 0.0
        %316 = vmatprep.subr.mxu0 0.0
        %317 = vmatpush1.msra.mxu0 0.0
        %318 = vmatprep.subr.mxu0 0.0
        %319 = vmatpush1.msra.mxu0 0.0
        %320 = vmatprep.subr.mxu0 0.0
        %321 = vmatpush1.msra.mxu0 0.0
        %322 = vmatprep.subr.mxu0 0.0
        %323 = vmatpush1.msra.mxu0 0.0
        %324 = vmatprep.subr.mxu0 0.0
        %325 = vmatpush1.msra.mxu0 0.0
        %326 = vmatprep.subr.mxu0 0.0
        %327 = vmatpush1.msra.mxu0 0.0
        %328 = vmatprep.subr.mxu0 0.0
        %329 = vmatpush1.msra.mxu0 0.0
        %330 = vmatprep.subr.mxu0 0.0
        %331 = vmatpush1.msra.mxu0 %v298
        %332 = vmatprep.subr.mxu0 0.0
        %333 = vmatpush2.msra.mxu0 0.0
        %334 = vmatprep.subr.mxu0 0.0
        %335 = vmatpush2.msra.mxu0 0.0
        %336 = vmatprep.subr.mxu0 0.0
        %337 = vmatpush2.msra.mxu0 0.0
        %338 = vmatprep.subr.mxu0 0.0
        %339 = vmatpush2.msra.mxu0 0.0
        %340 = vmatprep.subr.mxu0 0.0
        %341 = vmatpush2.msra.mxu0 0.0
        %342 = vmatprep.subr.mxu0 0.0
        %343 = vmatpush2.msra.mxu0 0.0
        %344 = vmatprep.subr.mxu0 0.0
        %345 = vmatpush2.msra.mxu0 0.0
        %346 = vmatprep.subr.mxu0 0.0
        %347 = vmatpush2.msra.mxu0 0.0
        %348 = vmatprep.subr.mxu0 0.0
        %349 = vmatpush2.msra.mxu0 0.0
        %350 = vmatprep.subr.mxu0 0.0
        %351 = vmatpush2.msra.mxu0 0.0
        %352 = vmatprep.subr.mxu0 0.0
        %353 = vmatpush2.msra.mxu0 0.0
        %354 = vmatprep.subr.mxu0 0.0
        %355 = vmatpush2.msra.mxu0 0.0
        %356 = vmatprep.subr.mxu0 0.0
        %357 = vmatpush2.msra.mxu0 0.0
        %358 = vmatprep.subr.mxu0 0.0
        %359 = vmatpush2.msra.mxu0 0.0
        %360 = vmatprep.subr.mxu0 0.0
        %361 = vmatpush2.msra.mxu0 0.0
        %362 = vmatprep.subr.mxu0 0.0
        %363 = vmatpush2.msra.mxu0 0.0
        %364 = vmatprep.mubr.f32.mxu0 0.0
        %365 = vmatmul.mubr.f32.gmra.mxu0 %v294
        %v366 = vpop.f32.mrf.mxu0
        %v367 = vadd.f32 0.0, %v366
        %v368 = vpop.f32.mrf.mxu0
        %369 = vdwg.mxu0
        %v370 = vxor.u32 %v367, 2147483648
        %v371 = vmul.f32 %v370, 1.442695
        %v372 = vpow.pop %v371
        %v373 = vadd.f32 %v372, 1.0
        %v374 = vrcp.pop %v373
        %v375 = vmul.f32 1.0, %v374
        %v376 = vld [vmem:[%s207] sm:$0xff]
        %v377 = vld [vmem:[%s207 + $0x8] sm:$0xff]
        %v378 = vld [vmem:[%s207 + $0x10] sm:$0xff]
        %v379 = vld [vmem:[%s207 + $0x18] sm:$0xff]
        %v380 = vld [vmem:[%s207 + $0x20] sm:$0xff]
        %v381 = vld [vmem:[%s207 + $0x28] sm:$0xff]
        %v382 = vld [vmem:[%s207 + $0x30] sm:$0xff]
        %v383 = vld [vmem:[%s207 + $0x38] sm:$0xff]
        %v384 = vlaneseq
        %v385 = vshrl.u32 %v384, 7
        %v386 = vsub.s32 0, %v385
        %v387 = vrot.slane %v375, %v386
        %v388 = vmul.f32 %v376, %v387
        %v389 = vmul.f32 %v377, %v387
        %v390 = vmul.f32 %v378, %v387
        %v391 = vmul.f32 %v379, %v387
        %v392 = vmul.f32 %v380, %v387
        %v393 = vmul.f32 %v381, %v387
        %v394 = vmul.f32 %v382, %v387
        %v395 = vmul.f32 %v383, %v387
        %396 = vst.msk [vmem:[%s202] sm:$0xff] %vm216, %v388
        %397 = vst.msk [vmem:[%s202 + $0x8] sm:$0xff] %vm216, %v389
        %398 = vst.msk [vmem:[%s202 + $0x10] sm:$0xff] %vm216, %v390
        %399 = vst.msk [vmem:[%s202 + $0x18] sm:$0xff] %vm216, %v391
        %400 = vst.msk [vmem:[%s202 + $0x20] sm:$0xff] %vm216, %v392
        %401 = vst.msk [vmem:[%s202 + $0x28] sm:$0xff] %vm216, %v393
        %402 = vst.msk [vmem:[%s202 + $0x30] sm:$0xff] %vm216, %v394
        %403 = vst.msk [vmem:[%s202 + $0x38] sm:$0xff] %vm216, %v395
        %s404 = sand.u32 %s120, 1
        %s405 = scalar_lea.sflag [#allocation3], %s404
        %s406 = sand.u32 %s120, 1
        %s407 = smul.addr %s406, 64
        %s408 = scalar_lea.vmem [#allocation2], %s407
        // Predicated region
        $region37: #{stem_block_forward.5} parent=35 // pred_check
          %p409 = pneg %p130
        $region38: #{stem_block_forward.5} parent=35 // pred_check_branch
          %411 = sbr.rel (%p409) target = $region40
        $region39: #{stem_block_forward.5} parent=35 // pred_region
          %s412 = smul.u32 8, %s18
          %s414 = ssub.s32 1024, 1024
          %415 = vsyncadd %s405, %s414
          %s416 = smul.addr %s412, 128
          %s417 = scalar_lea.hbm %s4, %s416
          %s418 = sshll.u32 %s408, 4
          %s419 = int_to_ptr.vmem [resolvable:$true] %s418
          %424 = dma.vmem_to_hbm [thread:$0]  %s419, 1024, %s417, %s405, 128, 128, 8
        $region40: #{stem_block_forward.5} parent=35 // pred_fallthru
          _
      $region36: #{stem_block_forward.5} parent=5 // pred_fallthru
        _
      %p425 = scmp.le.s32.totalorder 2, %s13
      // Predicated region
      $region41: #{stem_block_forward.5} parent=5 // pred_check
        %p426 = pneg %p425
      $region42: #{stem_block_forward.5} parent=5 // pred_check_branch
        %428 = sbr.rel (%p426) target = $region44
      $region43: #{stem_block_forward.5} parent=5 // pred_region
        %s429 = ssub.s32 %s13, 2
        // Predicated region
        $region45: #{stem_block_forward.5} parent=43 // pred_check
          %p430 = pneg %p136
        $region46: #{stem_block_forward.5} parent=43 // pred_check_branch
          %432 = sbr.rel (%p430) target = $region48
        $region47: #{stem_block_forward.5} parent=43 // pred_region
          %s433 = sand.u32 %s121, 1
          %s434 = scalar_lea.sflag [#allocation3], %s433
          %s435 = sand.u32 %s121, 1
          %s436 = smul.addr %s435, 64
          %s437 = scalar_lea.vmem [#allocation2], %s436
          %438 = dma.done %s434, 1024
        $region48: #{stem_block_forward.5} parent=43 // pred_fallthru
          _
      $region44: #{stem_block_forward.5} parent=5 // pred_fallthru
        _
    $region6: #{stem_block_forward.5} parent=1 // loop_footer
      %s17 = sadd.s32 1, %s13
    $region7: #{stem_block_forward.5} parent=1 // loop_footer_branch
      %12 = sbr.rel target = $region3
    $region8: #{stem_block_forward.5} parent=1 // loop_exit
      _
    %439 = vsyncpa [#allocation3], 1
    %s440 = scalar_lea.sflag [#allocation3], 1
    %441 = vsyncpa %s440, 1

// kernel: stem_block_forward.3
$region0: #{stem_block_forward.3}
  #allocation0 [shape = 'u32[]', space=smem, size = 0x4, offset = 0x4, fixed_abs, tag = 'smem constant byte address 0x4 - core index']
  #allocation1 [shape = 'u32[144,128]{1,0:T(1,128)}', space=vmem, size = 0x12000, scoped, tag = 'internal scratch']
  %s0 = inlined_call_operand.vmem [shape: f32[2,4,9,9,4], index: 0, kind: input, shape index: {}]
  %s1 = inlined_call_operand.vmem [shape: f32[9,4,16], index: 1, kind: input, shape index: {}]
  %s2 = inlined_call_operand.vmem [shape: f32[1,16], index: 2, kind: input, shape index: {}]
  %s3 = inlined_call_operand.vmem [shape: f32[1,16], index: 3, kind: input, shape index: {}]
  %s4 = inlined_call_operand.vmem [shape: f32[128,16], index: 4, kind: output, shape index: {}]
  %s5 = sld [smem:[#allocation0]]
  $region49: #{stem_block_forward.3} parent=0
    _
  %s7 = ssub.s32 1, %s5
  %s8 = scalar_select 0, %s7, %s5
  loop: start=0, step=1, limit=4
  $region2: #{stem_block_forward.3} parent=0 // loop_pre_header
    _
  $region3: #{stem_block_forward.3} parent=0 // loop_header
    %s10 = sphi 0, %s14
    %p11 = scmp.ge.s32.totalorder %s10, 4
    %s20 = sphi 0, %s22
    %s23 = sphi 0, %s20
    %s24 = sphi 0, %s23
    %s40 = sphi 0, %s24
    %s44 = sphi 0, %s44
    %s46 = sphi 0, %s44
    %s47 = sphi 0, %s46
    %s61 = sphi 0, %s47
    %s65 = sphi 0, %s65
    %s67 = sphi 0, %s65
    %s68 = sphi 0, %s67
    %s82 = sphi 0, %s68
    %s86 = sphi 0, %s86
    %s88 = sphi 0, %s86
    %s89 = sphi 0, %s88
    %s103 = sphi 0, %s89
    %s109 = sphi 0, %s111
    %s112 = sphi 0, %s109
    %s113 = sphi 0, %s112
    %s129 = sphi 0, %s113
  $region4: #{stem_block_forward.3} parent=0 // loop_header_branch
    %13 = sbr.rel (%p11) target = $region8
  $region5: #{stem_block_forward.3} parent=0 // loop_body
    %s15 = ssub.s32 %s10, 1
    %s16 = ssub.s32 %s10, 2
    %s17 = sadd.s32 %s10, 1
    %s18 = ssub.s32 %s10, %s17
    %p19 = scmp.eq.s32.totalorder %s18, 0
    %s21 = sadd.s32 %s20, 1
    %s22 = scalar_select %p19, %s20, %s21
    %p25 = pneg %p19
    %p26 = scmp.eq.s32.totalorder %s10, 1
    %p27 = por %p25, %p26
    %p28 = scmp.ne.s32.totalorder %s20, %s23
    %p29 = scmp.eq.s32.totalorder %s10, 0
    %p30 = por %p28, %p29
    %p31 = scmp.ne.s32.totalorder %s20, %s23
    %p32 = scmp.eq.s32.totalorder %s15, 1
    %p33 = por %p31, %p32
    %p34 = scmp.ne.s32.totalorder %s23, %s24
    %p35 = scmp.eq.s32.totalorder %s15, 0
    %p36 = por %p34, %p35
    %p37 = scmp.ne.s32.totalorder %s23, %s24
    %p38 = scmp.eq.s32.totalorder %s16, 1
    %p39 = por %p37, %p38
    %p41 = scmp.ne.s32.totalorder %s24, %s40
    %p42 = scmp.eq.s32.totalorder %s16, 0
    %p43 = por %p41, %p42
    %s45 = sadd.s32 %s44, 1
    %p48 = scmp.eq.s32.totalorder %s10, 1
    %p49 = scmp.ne.s32.totalorder %s44, %s46
    %p50 = scmp.eq.s32.totalorder %s10, 0
    %p51 = por %p49, %p50
    %p52 = scmp.ne.s32.totalorder %s44, %s46
    %p53 = scmp.eq.s32.totalorder %s15, 1
    %p54 = por %p52, %p53
    %p55 = scmp.ne.s32.totalorder %s46, %s47
    %p56 = scmp.eq.s32.totalorder %s15, 0
    %p57 = por %p55, %p56
    %p58 = scmp.ne.s32.totalorder %s46, %s47
    %p59 = scmp.eq.s32.totalorder %s16, 1
    %p60 = por %p58, %p59
    %p62 = scmp.ne.s32.totalorder %s47, %s61
    %p63 = scmp.eq.s32.totalorder %s16, 0
    %p64 = por %p62, %p63
    %s66 = sadd.s32 %s65, 1
    %p69 = scmp.eq.s32.totalorder %s10, 1
    %p70 = scmp.ne.s32.totalorder %s65, %s67
    %p71 = scmp.eq.s32.totalorder %s10, 0
    %p72 = por %p70, %p71
    %p73 = scmp.ne.s32.totalorder %s65, %s67
    %p74 = scmp.eq.s32.totalorder %s15, 1
    %p75 = por %p73, %p74
    %p76 = scmp.ne.s32.totalorder %s67, %s68
    %p77 = scmp.eq.s32.totalorder %s15, 0
    %p78 = por %p76, %p77
    %p79 = scmp.ne.s32.totalorder %s67, %s68
    %p80 = scmp.eq.s32.totalorder %s16, 1
    %p81 = por %p79, %p80
    %p83 = scmp.ne.s32.totalorder %s68, %s82
    %p84 = scmp.eq.s32.totalorder %s16, 0
    %p85 = por %p83, %p84
    %s87 = sadd.s32 %s86, 1
    %p90 = scmp.eq.s32.totalorder %s10, 1
    %p91 = scmp.ne.s32.totalorder %s86, %s88
    %p92 = scmp.eq.s32.totalorder %s10, 0
    %p93 = por %p91, %p92
    %p94 = scmp.ne.s32.totalorder %s86, %s88
    %p95 = scmp.eq.s32.totalorder %s15, 1
    %p96 = por %p94, %p95
    %p97 = scmp.ne.s32.totalorder %s88, %s89
    %p98 = scmp.eq.s32.totalorder %s15, 0
    %p99 = por %p97, %p98
    %p100 = scmp.ne.s32.totalorder %s88, %s89
    %p101 = scmp.eq.s32.totalorder %s16, 1
    %p102 = por %p100, %p101
    %p104 = scmp.ne.s32.totalorder %s89, %s103
    %p105 = scmp.eq.s32.totalorder %s16, 0
    %p106 = por %p104, %p105
    %s107 = ssub.s32 %s10, %s17
    %p108 = scmp.eq.s32.totalorder %s107, 0
    %s110 = sadd.s32 %s109, 1
    %s111 = scalar_select %p108, %s109, %s110
    %p114 = pneg %p108
    %p115 = scmp.eq.s32.totalorder %s10, 1
    %p116 = por %p114, %p115
    %p117 = scmp.ne.s32.totalorder %s109, %s112
    %p118 = scmp.eq.s32.totalorder %s10, 0
    %p119 = por %p117, %p118
    %p120 = scmp.ne.s32.totalorder %s109, %s112
    %p121 = scmp.eq.s32.totalorder %s15, 1
    %p122 = por %p120, %p121
    %p123 = scmp.ne.s32.totalorder %s112, %s113
    %p124 = scmp.eq.s32.totalorder %s15, 0
    %p125 = por %p123, %p124
    %p126 = scmp.ne.s32.totalorder %s112, %s113
    %p127 = scmp.eq.s32.totalorder %s16, 1
    %p128 = por %p126, %p127
    %p130 = scmp.ne.s32.totalorder %s113, %s129
    %p131 = scmp.eq.s32.totalorder %s16, 0
    %p132 = por %p130, %p131
    %p133 = scmp.le.s32.totalorder 1, %s10
    %p134 = scmp.lt.s32.totalorder %s10, 3
    %p135 = pnand %p133, %p134
    %p136 = pneg %p135
    // Predicated region
    $region9: #{stem_block_forward.3} parent=5 // pred_check
      _
    $region10: #{stem_block_forward.3} parent=5 // pred_check_branch
      %138 = sbr.rel (%p135) target = $region12
    $region11: #{stem_block_forward.3} parent=5 // pred_region
      %s139 = ssub.s32 %s10, 1
      // Predicated region
      $region13: #{stem_block_forward.3} parent=11 // pred_check
        %p140 = pneg %p57
      $region14: #{stem_block_forward.3} parent=11 // pred_check_branch
        %142 = sbr.rel (%p140) target = $region16
      $region15: #{stem_block_forward.3} parent=11 // pred_region
        _
      $region16: #{stem_block_forward.3} parent=11 // pred_fallthru
        _
      // Predicated region
      $region17: #{stem_block_forward.3} parent=11 // pred_check
        %p143 = pneg %p78
      $region18: #{stem_block_forward.3} parent=11 // pred_check_branch
        %145 = sbr.rel (%p143) target = $region20
      $region19: #{stem_block_forward.3} parent=11 // pred_region
        _
      $region20: #{stem_block_forward.3} parent=11 // pred_fallthru
        _
      // Predicated region
      $region21: #{stem_block_forward.3} parent=11 // pred_check
        %p146 = pneg %p99
      $region22: #{stem_block_forward.3} parent=11 // pred_check_branch
        %148 = sbr.rel (%p146) target = $region24
      $region23: #{stem_block_forward.3} parent=11 // pred_region
        _
      $region24: #{stem_block_forward.3} parent=11 // pred_fallthru
        _
    $region12: #{stem_block_forward.3} parent=5 // pred_fallthru
      _
    %p149 = scmp.lt.s32.totalorder %s10, 2
    // Predicated region
    $region25: #{stem_block_forward.3} parent=5 // pred_check
      %p150 = pneg %p149
    $region26: #{stem_block_forward.3} parent=5 // pred_check_branch
      %152 = sbr.rel (%p150) target = $region28
    $region27: #{stem_block_forward.3} parent=5 // pred_region
      // Predicated region
      $region29: #{stem_block_forward.3} parent=27 // pred_check
        %p153 = pneg %p30
      $region30: #{stem_block_forward.3} parent=27 // pred_check_branch
        %155 = sbr.rel (%p153) target = $region32
      $region31: #{stem_block_forward.3} parent=27 // pred_region
        %p156 = scmp.lt.s32.totalorder %s10, 1
        %s157 = scalar_select %p156, %s10, 1
        %s158 = smul.addr %s157, 72
        %s159 = smul.addr %s158, 8
        %s160 = scalar_lea.vmem %s0, %s159
      $region32: #{stem_block_forward.3} parent=27 // pred_fallthru
        _
    $region28: #{stem_block_forward.3} parent=5 // pred_fallthru
      _
    %p161 = scmp.le.s32.totalorder 1, %s10
    %p162 = scmp.lt.s32.totalorder %s10, 3
    %p163 = pnand %p161, %p162
    %p164 = pneg %p163
    // Predicated region
    $region33: #{stem_block_forward.3} parent=5 // pred_check
      _
    $region34: #{stem_block_forward.3} parent=5 // pred_check_branch
      %166 = sbr.rel (%p163) target = $region36
    $region35: #{stem_block_forward.3} parent=5 // pred_region
      %s167 = ssub.s32 %s10, 1
      %p168 = scmp.lt.s32.totalorder %s15, 1
      %s169 = scalar_select %p168, %s15, 1
      %s170 = smul.addr %s169, 72
      %s171 = smul.addr %s170, 8
      %s172 = scalar_lea.vmem %s0, %s171
      %p173 = pneg %p36
      %p174 = pneg %p33
      %p175 = pneg %p57
      %p176 = pneg %p54
      %p177 = pneg %p78
      %p178 = pneg %p75
      %p179 = pneg %p99
      %p180 = pneg %p96
      %p181 = pneg %p125
      %p182 = pneg %p122
      %s183 = smul.u32 8, %s15
      %p184 = scmp.lt.s32.totalorder %s183, 15
      %s185 = scalar_select %p184, %s183, 15
      %s186 = smul.addr %s185, 8
      %s187 = scalar_lea.vmem %s4, %s186
      %p188 = scmp.lt.s32.totalorder %s15, 1
      %s189 = scalar_select %p188, %s15, 1
      %s190 = smul.addr %s189, 72
      %s191 = smul.addr %s190, 8
      %s192 = scalar_lea.vmem %s0, %s191
      %s193 = smul.u32 8, %s15
      %p194 = scmp.lt.s32.totalorder %s193, 15
      %s195 = scalar_select %p194, %s193, 15
      %s196 = smul.addr %s195, 8
      %s197 = scalar_lea.vmem %s4, %s196
      %s198 = smul.u32 8, %s15
      %v199 = vld [vmem:[%s192] sm:$0xff]
      %v200 = vld [vmem:[%s192 + $0x10] sm:$0xff]
      %v201 = vld [vmem:[%s192 + $0x20] sm:$0xff]
      %v202 = vld [vmem:[%s192 + $0x30] sm:$0xff]
      %v203 = vld [vmem:[%s192 + $0x40] sm:$0xff]
      %v204 = vld [vmem:[%s192 + $0x50] sm:$0xff]
      %v205 = vld [vmem:[%s192 + $0x60] sm:$0xff]
      %v206 = vld [vmem:[%s192 + $0x70] sm:$0xff]
      %v207 = vld [vmem:[%s1] sm:$0xf]
      %s208 = scalar_lea.vmem %s192, 144
      %v209 = vld [vmem:[%s208] sm:$0xff]
      %v210 = vld [vmem:[%s208 + $0x10] sm:$0xff]
      %v211 = vld [vmem:[%s208 + $0x20] sm:$0xff]
      %v212 = vld [vmem:[%s208 + $0x30] sm:$0xff]
      %v213 = vld [vmem:[%s208 + $0x40] sm:$0xff]
      %v214 = vld [vmem:[%s208 + $0x50] sm:$0xff]
      %v215 = vld [vmem:[%s208 + $0x60] sm:$0xff]
      %v216 = vld [vmem:[%s208 + $0x70] sm:$0xff]
      %s217 = scalar_lea.vmem %s1, 4
      %v218 = vld [vmem:[%s217] sm:$0xf]
      %vm219 = vcmask 31744
      %v221 = vsel %vm219, %v209, 0
      %v224 = vsel %vm219, %v210, 0
      %v227 = vsel %vm219, %v211, 0
      %v230 = vsel %vm219, %v212, 0
      %v233 = vsel %vm219, %v213, 0
      %v236 = vsel %vm219, %v214, 0
      %v239 = vsel %vm219, %v215, 0
      %v242 = vsel %vm219, %v216, 0
      %vm244 = vcmask 1043456
      %v246 = vsel %vm244, %v218, 0
      %248 = vmatprep.subr.mxu0 0.0
      %249 = vmatpush1.msra.mxu0 0.0
      %250 = vmatprep.subr.mxu0 0.0
      %251 = vmatpush1.msra.mxu0 0.0
      %252 = vmatprep.subr.mxu0 0.0
      %253 = vmatpush1.msra.mxu0 0.0
      %254 = vmatprep.subr.mxu0 0.0
      %255 = vmatpush1.msra.mxu0 0.0
      %256 = vmatprep.subr.mxu0 0.0
      %257 = vmatpush1.msra.mxu0 0.0
      %258 = vmatprep.subr.mxu0 0.0
      %259 = vmatpush1.msra.mxu0 0.0
      %260 = vmatprep.subr.mxu0 0.0
      %261 = vmatpush1.msra.mxu0 0.0
      %262 = vmatprep.subr.mxu0 0.0
      %263 = vmatpush1.msra.mxu0 0.0
      %264 = vmatprep.subr.mxu0 0.0
      %265 = vmatpush1.msra.mxu0 0.0
      %266 = vmatprep.subr.mxu0 0.0
      %267 = vmatpush1.msra.mxu0 0.0
      %268 = vmatprep.subr.mxu0 0.0
      %269 = vmatpush1.msra.mxu0 0.0
      %270 = vmatprep.subr.mxu0 0.0
      %271 = vmatpush1.msra.mxu0 0.0
      %272 = vmatprep.subr.mxu0 0.0
      %273 = vmatpush1.msra.mxu0 0.0
      %274 = vmatprep.subr.mxu0 0.0
      %275 = vmatpush1.msra.mxu0 0.0
      %276 = vmatprep.subr.mxu0 0.0
      %277 = vmatpush1.msra.mxu0 0.0
      %278 = vmatprep.subr.mxu0 0.0
      %279 = vmatpush1.msra.mxu0 %v246
      %280 = vmatprep.subr.mxu0 0.0
      %281 = vmatpush2.msra.mxu0 0.0
      %282 = vmatprep.subr.mxu0 0.0
      %283 = vmatpush2.msra.mxu0 0.0
      %284 = vmatprep.subr.mxu0 0.0
      %285 = vmatpush2.msra.mxu0 0.0
      %286 = vmatprep.subr.mxu0 0.0
      %287 = vmatpush2.msra.mxu0 0.0
      %288 = vmatprep.subr.mxu0 0.0
      %289 = vmatpush2.msra.mxu0 0.0
      %290 = vmatprep.subr.mxu0 0.0
      %291 = vmatpush2.msra.mxu0 0.0
      %292 = vmatprep.subr.mxu0 0.0
      %293 = vmatpush2.msra.mxu0 0.0
      %294 = vmatprep.subr.mxu0 0.0
      %295 = vmatpush2.msra.mxu0 0.0
      %296 = vmatprep.subr.mxu0 0.0
      %297 = vmatpush2.msra.mxu0 0.0
      %298 = vmatprep.subr.mxu0 0.0
      %299 = vmatpush2.msra.mxu0 0.0
      %300 = vmatprep.subr.mxu0 0.0
      %301 = vmatpush2.msra.mxu0 0.0
      %302 = vmatprep.subr.mxu0 0.0
      %303 = vmatpush2.msra.mxu0 0.0
      %304 = vmatprep.subr.mxu0 0.0
      %305 = vmatpush2.msra.mxu0 0.0
      %306 = vmatprep.subr.mxu0 0.0
      %307 = vmatpush2.msra.mxu0 0.0
      %308 = vmatprep.subr.mxu0 0.0
      %309 = vmatpush2.msra.mxu0 0.0
      %310 = vmatprep.subr.mxu0 0.0
      %311 = vmatpush2.msra.mxu0 0.0
      %312 = vmatprep.mubr.f32.mxu0 0.0
      %313 = vmatmul.mubr.f32.gmra.mxu0 %v221
      %v314 = vpop.f32.mrf.mxu0
      %v315 = vadd.f32 0.0, %v314
      %v316 = vpop.f32.mrf.mxu0
      %317 = vmatprep.mubr.f32.mxu0 0.0
      %318 = vmatmul.mubr.f32.gmra.mxu0 %v224
      %v319 = vpop.f32.mrf.mxu0
      %v320 = vadd.f32 0.0, %v319
      %v321 = vpop.f32.mrf.mxu0
      %322 = vmatprep.mubr.f32.mxu0 0.0
      %323 = vmatmul.mubr.f32.gmra.mxu0 %v227
      %v324 = vpop.f32.mrf.mxu0
      %v325 = vadd.f32 0.0, %v324
      %v326 = vpop.f32.mrf.mxu0
      %327 = vmatprep.mubr.f32.mxu0 0.0
      %328 = vmatmul.mubr.f32.gmra.mxu0 %v230
      %v329 = vpop.f32.mrf.mxu0
      %v330 = vadd.f32 0.0, %v329
      %v331 = vpop.f32.mrf.mxu0
      %332 = vmatprep.mubr.f32.mxu0 0.0
      %333 = vmatmul.mubr.f32.gmra.mxu0 %v233
      %v334 = vpop.f32.mrf.mxu0
      %v335 = vadd.f32 0.0, %v334
      %v336 = vpop.f32.mrf.mxu0
      %337 = vmatprep.mubr.f32.mxu0 0.0
      %338 = vmatmul.mubr.f32.gmra.mxu0 %v236
      %v339 = vpop.f32.mrf.mxu0
      %v340 = vadd.f32 0.0, %v339
      %v341 = vpop.f32.mrf.mxu0
      %342 = vmatprep.mubr.f32.mxu0 0.0
      %343 = vmatmul.mubr.f32.gmra.mxu0 %v239
      %v344 = vpop.f32.mrf.mxu0
      %v345 = vadd.f32 0.0, %v344
      %v346 = vpop.f32.mrf.mxu0
      %347 = vmatprep.mubr.f32.mxu0 0.0
      %348 = vmatmul.mubr.f32.gmra.mxu0 %v242
      %v349 = vpop.f32.mrf.mxu0
      %v350 = vadd.f32 0.0, %v349
      %v351 = vpop.f32.mrf.mxu0
      %352 = vdwg.mxu0
      %v354 = vsel %vm219, %v199, 0
      %v357 = vsel %vm219, %v200, 0
      %v360 = vsel %vm219, %v201, 0
      %v363 = vsel %vm219, %v202, 0
      %v366 = vsel %vm219, %v203, 0
      %v369 = vsel %vm219, %v204, 0
      %v372 = vsel %vm219, %v205, 0
      %v375 = vsel %vm219, %v206, 0
      %v378 = vsel %vm244, %v207, 0
      %380 = vmatprep.subr.mxu0 0.0
      %381 = vmatpush1.msra.mxu0 0.0
      %382 = vmatprep.subr.mxu0 0.0
      %383 = vmatpush1.msra.mxu0 0.0
      %384 = vmatprep.subr.mxu0 0.0
      %385 = vmatpush1.msra.mxu0 0.0
      %386 = vmatprep.subr.mxu0 0.0
      %387 = vmatpush1.msra.mxu0 0.0
      %388 = vmatprep.subr.mxu0 0.0
      %389 = vmatpush1.msra.mxu0 0.0
      %390 = vmatprep.subr.mxu0 0.0
      %391 = vmatpush1.msra.mxu0 0.0
      %392 = vmatprep.subr.mxu0 0.0
      %393 = vmatpush1.msra.mxu0 0.0
      %394 = vmatprep.subr.mxu0 0.0
      %395 = vmatpush1.msra.mxu0 0.0
      %396 = vmatprep.subr.mxu0 0.0
      %397 = vmatpush1.msra.mxu0 0.0
      %398 = vmatprep.subr.mxu0 0.0
      %399 = vmatpush1.msra.mxu0 0.0
      %400 = vmatprep.subr.mxu0 0.0
      %401 = vmatpush1.msra.mxu0 0.0
      %402 = vmatprep.subr.mxu0 0.0
      %403 = vmatpush1.msra.mxu0 0.0
      %404 = vmatprep.subr.mxu0 0.0
      %405 = vmatpush1.msra.mxu0 0.0
      %406 = vmatprep.subr.mxu0 0.0
      %407 = vmatpush1.msra.mxu0 0.0
      %408 = vmatprep.subr.mxu0 0.0
      %409 = vmatpush1.msra.mxu0 0.0
      %410 = vmatprep.subr.mxu0 0.0
      %411 = vmatpush1.msra.mxu0 %v378
      %412 = vmatprep.subr.mxu0 0.0
      %413 = vmatpush2.msra.mxu0 0.0
      %414 = vmatprep.subr.mxu0 0.0
      %415 = vmatpush2.msra.mxu0 0.0
      %416 = vmatprep.subr.mxu0 0.0
      %417 = vmatpush2.msra.mxu0 0.0
      %418 = vmatprep.subr.mxu0 0.0
      %419 = vmatpush2.msra.mxu0 0.0
      %420 = vmatprep.subr.mxu0 0.0
      %421 = vmatpush2.msra.mxu0 0.0
      %422 = vmatprep.subr.mxu0 0.0
      %423 = vmatpush2.msra.mxu0 0.0
      %424 = vmatprep.subr.mxu0 0.0
      %425 = vmatpush2.msra.mxu0 0.0
      %426 = vmatprep.subr.mxu0 0.0
      %427 = vmatpush2.msra.mxu0 0.0
      %428 = vmatprep.subr.mxu0 0.0
      %429 = vmatpush2.msra.mxu0 0.0
      %430 = vmatprep.subr.mxu0 0.0
      %431 = vmatpush2.msra.mxu0 0.0
      %432 = vmatprep.subr.mxu0 0.0
      %433 = vmatpush2.msra.mxu0 0.0
      %434 = vmatprep.subr.mxu0 0.0
      %435 = vmatpush2.msra.mxu0 0.0
      %436 = vmatprep.subr.mxu0 0.0
      %437 = vmatpush2.msra.mxu0 0.0
      %438 = vmatprep.subr.mxu0 0.0
      %439 = vmatpush2.msra.mxu0 0.0
      %440 = vmatprep.subr.mxu0 0.0
      %441 = vmatpush2.msra.mxu0 0.0
      %442 = vmatprep.subr.mxu0 0.0
      %443 = vmatpush2.msra.mxu0 0.0
      %444 = vmatprep.mubr.f32.mxu0 0.0
      %445 = vmatmul.mubr.f32.gmra.mxu0 %v354
      %v446 = vpop.f32.mrf.mxu0
      %v447 = vadd.f32 %v315, %v446
      %v448 = vpop.f32.mrf.mxu0
      %449 = vmatprep.mubr.f32.mxu0 0.0
      %450 = vmatmul.mubr.f32.gmra.mxu0 %v357
      %v451 = vpop.f32.mrf.mxu0
      %v452 = vadd.f32 %v320, %v451
      %v453 = vpop.f32.mrf.mxu0
      %454 = vmatprep.mubr.f32.mxu0 0.0
      %455 = vmatmul.mubr.f32.gmra.mxu0 %v360
      %v456 = vpop.f32.mrf.mxu0
      %v457 = vadd.f32 %v325, %v456
      %v458 = vpop.f32.mrf.mxu0
      %459 = vmatprep.mubr.f32.mxu0 0.0
      %460 = vmatmul.mubr.f32.gmra.mxu0 %v363
      %v461 = vpop.f32.mrf.mxu0
      %v462 = vadd.f32 %v330, %v461
      %v463 = vpop.f32.mrf.mxu0
      %464 = vmatprep.mubr.f32.mxu0 0.0
      %465 = vmatmul.mubr.f32.gmra.mxu0 %v366
      %v466 = vpop.f32.mrf.mxu0
      %v467 = vadd.f32 %v335, %v466
      %v468 = vpop.f32.mrf.mxu0
      %469 = vmatprep.mubr.f32.mxu0 0.0
      %470 = vmatmul.mubr.f32.gmra.mxu0 %v369
      %v471 = vpop.f32.mrf.mxu0
      %v472 = vadd.f32 %v340, %v471
      %v473 = vpop.f32.mrf.mxu0
      %474 = vmatprep.mubr.f32.mxu0 0.0
      %475 = vmatmul.mubr.f32.gmra.mxu0 %v372
      %v476 = vpop.f32.mrf.mxu0
      %v477 = vadd.f32 %v345, %v476
      %v478 = vpop.f32.mrf.mxu0
      %479 = vmatprep.mubr.f32.mxu0 0.0
      %480 = vmatmul.mubr.f32.gmra.mxu0 %v375
      %v481 = vpop.f32.mrf.mxu0
      %v482 = vadd.f32 %v350, %v481
      %v483 = vpop.f32.mrf.mxu0
      %484 = vdwg.mxu0
      %v485 = vld [vmem:[%s192 + $0x1] sm:$0xff]
      %v486 = vld [vmem:[%s192 + $0x11] sm:$0xff]
      %v487 = vld [vmem:[%s192 + $0x21] sm:$0xff]
      %v488 = vld [vmem:[%s192 + $0x31] sm:$0xff]
      %v489 = vld [vmem:[%s192 + $0x41] sm:$0xff]
      %v490 = vld [vmem:[%s192 + $0x51] sm:$0xff]
      %v491 = vld [vmem:[%s192 + $0x61] sm:$0xff]
      %v492 = vld [vmem:[%s192 + $0x71] sm:$0xff]
      %s493 = scalar_lea.vmem %s1, 8
      %v494 = vld [vmem:[%s493] sm:$0xf]
      %v496 = vsel %vm219, %v485, 0
      %v499 = vsel %vm219, %v486, 0
      %v502 = vsel %vm219, %v487, 0
      %v505 = vsel %vm219, %v488, 0
      %v508 = vsel %vm219, %v489, 0
      %v511 = vsel %vm219, %v490, 0
      %v514 = vsel %vm219, %v491, 0
      %v517 = vsel %vm219, %v492, 0
      %v520 = vsel %vm244, %v494, 0
      %522 = vmatprep.subr.mxu0 0.0
      %523 = vmatpush1.msra.mxu0 0.0
      %524 = vmatprep.subr.mxu0 0.0
      %525 = vmatpush1.msra.mxu0 0.0
      %526 = vmatprep.subr.mxu0 0.0
      %527 = vmatpush1.msra.mxu0 0.0
      %528 = vmatprep.subr.mxu0 0.0
      %529 = vmatpush1.msra.mxu0 0.0
      %530 = vmatprep.subr.mxu0 0.0
      %531 = vmatpush1.msra.mxu0 0.0
      %532 = vmatprep.subr.mxu0 0.0
      %533 = vmatpush1.msra.mxu0 0.0
      %534 = vmatprep.subr.mxu0 0.0
      %535 = vmatpush1.msra.mxu0 0.0
      %536 = vmatprep.subr.mxu0 0.0
      %537 = vmatpush1.msra.mxu0 0.0
      %538 = vmatprep.subr.mxu0 0.0
      %539 = vmatpush1.msra.mxu0 0.0
      %540 = vmatprep.subr.mxu0 0.0
      %541 = vmatpush1.msra.mxu0 0.0
      %542 = vmatprep.subr.mxu0 0.0
      %543 = vmatpush1.msra.mxu0 0.0
      %544 = vmatprep.subr.mxu0 0.0
      %545 = vmatpush1.msra.mxu0 0.0
      %546 = vmatprep.subr.mxu0 0.0
      %547 = vmatpush1.msra.mxu0 0.0
      %548 = vmatprep.subr.mxu0 0.0
      %549 = vmatpush1.msra.mxu0 0.0
      %550 = vmatprep.subr.mxu0 0.0
      %551 = vmatpush1.msra.mxu0 0.0
      %552 = vmatprep.subr.mxu0 0.0
      %553 = vmatpush1.msra.mxu0 %v520
      %554 = vmatprep.subr.mxu0 0.0
      %555 = vmatpush2.msra.mxu0 0.0
      %556 = vmatprep.subr.mxu0 0.0
      %557 = vmatpush2.msra.mxu0 0.0
      %558 = vmatprep.subr.mxu0 0.0
      %559 = vmatpush2.msra.mxu0 0.0
      %560 = vmatprep.subr.mxu0 0.0
      %561 = vmatpush2.msra.mxu0 0.0
      %562 = vmatprep.subr.mxu0 0.0
      %563 = vmatpush2.msra.mxu0 0.0
      %564 = vmatprep.subr.mxu0 0.0
      %565 = vmatpush2.msra.mxu0 0.0
      %566 = vmatprep.subr.mxu0 0.0
      %567 = vmatpush2.msra.mxu0 0.0
      %568 = vmatprep.subr.mxu0 0.0
      %569 = vmatpush2.msra.mxu0 0.0
      %570 = vmatprep.subr.mxu0 0.0
      %571 = vmatpush2.msra.mxu0 0.0
      %572 = vmatprep.subr.mxu0 0.0
      %573 = vmatpush2.msra.mxu0 0.0
      %574 = vmatprep.subr.mxu0 0.0
      %575 = vmatpush2.msra.mxu0 0.0
      %576 = vmatprep.subr.mxu0 0.0
      %577 = vmatpush2.msra.mxu0 0.0
      %578 = vmatprep.subr.mxu0 0.0
      %579 = vmatpush2.msra.mxu0 0.0
      %580 = vmatprep.subr.mxu0 0.0
      %581 = vmatpush2.msra.mxu0 0.0
      %582 = vmatprep.subr.mxu0 0.0
      %583 = vmatpush2.msra.mxu0 0.0
      %584 = vmatprep.subr.mxu0 0.0
      %585 = vmatpush2.msra.mxu0 0.0
      %586 = vmatprep.mubr.f32.mxu0 0.0
      %587 = vmatmul.mubr.f32.gmra.mxu0 %v496
      %v588 = vpop.f32.mrf.mxu0
      %v589 = vadd.f32 0.0, %v588
      %v590 = vpop.f32.mrf.mxu0
      %591 = vmatprep.mubr.f32.mxu0 0.0
      %592 = vmatmul.mubr.f32.gmra.mxu0 %v499
      %v593 = vpop.f32.mrf.mxu0
      %v594 = vadd.f32 0.0, %v593
      %v595 = vpop.f32.mrf.mxu0
      %596 = vmatprep.mubr.f32.mxu0 0.0
      %597 = vmatmul.mubr.f32.gmra.mxu0 %v502
      %v598 = vpop.f32.mrf.mxu0
      %v599 = vadd.f32 0.0, %v598
      %v600 = vpop.f32.mrf.mxu0
      %601 = vmatprep.mubr.f32.mxu0 0.0
      %602 = vmatmul.mubr.f32.gmra.mxu0 %v505
      %v603 = vpop.f32.mrf.mxu0
      %v604 = vadd.f32 0.0, %v603
      %v605 = vpop.f32.mrf.mxu0
      %606 = vmatprep.mubr.f32.mxu0 0.0
      %607 = vmatmul.mubr.f32.gmra.mxu0 %v508
      %v608 = vpop.f32.mrf.mxu0
      %v609 = vadd.f32 0.0, %v608
      %v610 = vpop.f32.mrf.mxu0
      %611 = vmatprep.mubr.f32.mxu0 0.0
      %612 = vmatmul.mubr.f32.gmra.mxu0 %v511
      %v613 = vpop.f32.mrf.mxu0
      %v614 = vadd.f32 0.0, %v613
      %v615 = vpop.f32.mrf.mxu0
      %616 = vmatprep.mubr.f32.mxu0 0.0
      %617 = vmatmul.mubr.f32.gmra.mxu0 %v514
      %v618 = vpop.f32.mrf.mxu0
      %v619 = vadd.f32 0.0, %v618
      %v620 = vpop.f32.mrf.mxu0
      %621 = vmatprep.mubr.f32.mxu0 0.0
      %622 = vmatmul.mubr.f32.gmra.mxu0 %v517
      %v623 = vpop.f32.mrf.mxu0
      %v624 = vadd.f32 0.0, %v623
      %v625 = vpop.f32.mrf.mxu0
      %626 = vdwg.mxu0
      %v627 = vadd.f32 %v447, %v589
      %v628 = vadd.f32 %v452, %v594
      %v629 = vadd.f32 %v457, %v599
      %v630 = vadd.f32 %v462, %v604
      %v631 = vadd.f32 %v467, %v609
      %v632 = vadd.f32 %v472, %v614
      %v633 = vadd.f32 %v477, %v619
      %v634 = vadd.f32 %v482, %v624
      %s635 = scalar_lea.vmem %s192, 288
      %v636 = vld [vmem:[%s635] sm:$0xff]
      %v637 = vld [vmem:[%s635 + $0x10] sm:$0xff]
      %v638 = vld [vmem:[%s635 + $0x20] sm:$0xff]
      %v639 = vld [vmem:[%s635 + $0x30] sm:$0xff]
      %v640 = vld [vmem:[%s635 + $0x40] sm:$0xff]
      %v641 = vld [vmem:[%s635 + $0x50] sm:$0xff]
      %v642 = vld [vmem:[%s635 + $0x60] sm:$0xff]
      %v643 = vld [vmem:[%s635 + $0x70] sm:$0xff]
      %s644 = scalar_lea.vmem %s1, 12
      %v645 = vld [vmem:[%s644] sm:$0xf]
      %v647 = vsel %vm219, %v636, 0
      %v650 = vsel %vm219, %v637, 0
      %v653 = vsel %vm219, %v638, 0
      %v656 = vsel %vm219, %v639, 0
      %v659 = vsel %vm219, %v640, 0
      %v662 = vsel %vm219, %v641, 0
      %v665 = vsel %vm219, %v642, 0
      %v668 = vsel %vm219, %v643, 0
      %v671 = vsel %vm244, %v645, 0
      %673 = vmatprep.subr.mxu0 0.0
      %674 = vmatpush1.msra.mxu0 0.0
      %675 = vmatprep.subr.mxu0 0.0
      %676 = vmatpush1.msra.mxu0 0.0
      %677 = vmatprep.subr.mxu0 0.0
      %678 = vmatpush1.msra.mxu0 0.0
      %679 = vmatprep.subr.mxu0 0.0
      %680 = vmatpush1.msra.mxu0 0.0
      %681 = vmatprep.subr.mxu0 0.0
      %682 = vmatpush1.msra.mxu0 0.0
      %683 = vmatprep.subr.mxu0 0.0
      %684 = vmatpush1.msra.mxu0 0.0
      %685 = vmatprep.subr.mxu0 0.0
      %686 = vmatpush1.msra.mxu0 0.0
      %687 = vmatprep.subr.mxu0 0.0
      %688 = vmatpush1.msra.mxu0 0.0
      %689 = vmatprep.subr.mxu0 0.0
      %690 = vmatpush1.msra.mxu0 0.0
      %691 = vmatprep.subr.mxu0 0.0
      %692 = vmatpush1.msra.mxu0 0.0
      %693 = vmatprep.subr.mxu0 0.0
      %694 = vmatpush1.msra.mxu0 0.0
      %695 = vmatprep.subr.mxu0 0.0
      %696 = vmatpush1.msra.mxu0 0.0
      %697 = vmatprep.subr.mxu0 0.0
      %698 = vmatpush1.msra.mxu0 0.0
      %699 = vmatprep.subr.mxu0 0.0
      %700 = vmatpush1.msra.mxu0 0.0
      %701 = vmatprep.subr.mxu0 0.0
      %702 = vmatpush1.msra.mxu0 0.0
      %703 = vmatprep.subr.mxu0 0.0
      %704 = vmatpush1.msra.mxu0 %v671
      %705 = vmatprep.subr.mxu0 0.0
      %706 = vmatpush2.msra.mxu0 0.0
      %707 = vmatprep.subr.mxu0 0.0
      %708 = vmatpush2.msra.mxu0 0.0
      %709 = vmatprep.subr.mxu0 0.0
      %710 = vmatpush2.msra.mxu0 0.0
      %711 = vmatprep.subr.mxu0 0.0
      %712 = vmatpush2.msra.mxu0 0.0
      %713 = vmatprep.subr.mxu0 0.0
      %714 = vmatpush2.msra.mxu0 0.0
      %715 = vmatprep.subr.mxu0 0.0
      %716 = vmatpush2.msra.mxu0 0.0
      %717 = vmatprep.subr.mxu0 0.0
      %718 = vmatpush2.msra.mxu0 0.0
      %719 = vmatprep.subr.mxu0 0.0
      %720 = vmatpush2.msra.mxu0 0.0
      %721 = vmatprep.subr.mxu0 0.0
      %722 = vmatpush2.msra.mxu0 0.0
      %723 = vmatprep.subr.mxu0 0.0
      %724 = vmatpush2.msra.mxu0 0.0
      %725 = vmatprep.subr.mxu0 0.0
      %726 = vmatpush2.msra.mxu0 0.0
      %727 = vmatprep.subr.mxu0 0.0
      %728 = vmatpush2.msra.mxu0 0.0
      %729 = vmatprep.subr.mxu0 0.0
      %730 = vmatpush2.msra.mxu0 0.0
      %731 = vmatprep.subr.mxu0 0.0
      %732 = vmatpush2.msra.mxu0 0.0
      %733 = vmatprep.subr.mxu0 0.0
      %734 = vmatpush2.msra.mxu0 0.0
      %735 = vmatprep.subr.mxu0 0.0
      %736 = vmatpush2.msra.mxu0 0.0
      %737 = vmatprep.mubr.f32.mxu0 0.0
      %738 = vmatmul.mubr.f32.gmra.mxu0 %v647
      %v739 = vpop.f32.mrf.mxu0
      %v740 = vadd.f32 0.0, %v739
      %v741 = vpop.f32.mrf.mxu0
      %742 = vmatprep.mubr.f32.mxu0 0.0
      %743 = vmatmul.mubr.f32.gmra.mxu0 %v650
      %v744 = vpop.f32.mrf.mxu0
      %v745 = vadd.f32 0.0, %v744
      %v746 = vpop.f32.mrf.mxu0
      %747 = vmatprep.mubr.f32.mxu0 0.0
      %748 = vmatmul.mubr.f32.gmra.mxu0 %v653
      %v749 = vpop.f32.mrf.mxu0
      %v750 = vadd.f32 0.0, %v749
      %v751 = vpop.f32.mrf.mxu0
      %752 = vmatprep.mubr.f32.mxu0 0.0
      %753 = vmatmul.mubr.f32.gmra.mxu0 %v656
      %v754 = vpop.f32.mrf.mxu0
      %v755 = vadd.f32 0.0, %v754
      %v756 = vpop.f32.mrf.mxu0
      %757 = vmatprep.mubr.f32.mxu0 0.0
      %758 = vmatmul.mubr.f32.gmra.mxu0 %v659
      %v759 = vpop.f32.mrf.mxu0
      %v760 = vadd.f32 0.0, %v759
      %v761 = vpop.f32.mrf.mxu0
      %762 = vmatprep.mubr.f32.mxu0 0.0
      %763 = vmatmul.mubr.f32.gmra.mxu0 %v662
      %v764 = vpop.f32.mrf.mxu0
      %v765 = vadd.f32 0.0, %v764
      %v766 = vpop.f32.mrf.mxu0
      %767 = vmatprep.mubr.f32.mxu0 0.0
      %768 = vmatmul.mubr.f32.gmra.mxu0 %v665
      %v769 = vpop.f32.mrf.mxu0
      %v770 = vadd.f32 0.0, %v769
      %v771 = vpop.f32.mrf.mxu0
      %772 = vmatprep.mubr.f32.mxu0 0.0
      %773 = vmatmul.mubr.f32.gmra.mxu0 %v668
      %v774 = vpop.f32.mrf.mxu0
      %v775 = vadd.f32 0.0, %v774
      %v776 = vpop.f32.mrf.mxu0
      %777 = vdwg.mxu0
      %v778 = vadd.f32 %v627, %v740
      %v779 = vadd.f32 %v628, %v745
      %v780 = vadd.f32 %v629, %v750
      %v781 = vadd.f32 %v630, %v755
      %v782 = vadd.f32 %v631, %v760
      %v783 = vadd.f32 %v632, %v765
      %v784 = vadd.f32 %v633, %v770
      %v785 = vadd.f32 %v634, %v775
      %s786 = scalar_lea.vmem %s192, 432
      %v787 = vld [vmem:[%s786] sm:$0xff]
      %v788 = vld [vmem:[%s786 + $0x10] sm:$0xff]
      %v789 = vld [vmem:[%s786 + $0x20] sm:$0xff]
      %v790 = vld [vmem:[%s786 + $0x30] sm:$0xff]
      %v791 = vld [vmem:[%s786 + $0x40] sm:$0xff]
      %v792 = vld [vmem:[%s786 + $0x50] sm:$0xff]
      %v793 = vld [vmem:[%s786 + $0x60] sm:$0xff]
      %v794 = vld [vmem:[%s786 + $0x70] sm:$0xff]
      %s795 = scalar_lea.vmem %s1, 16
      %v796 = vld [vmem:[%s795] sm:$0xf]
      %v798 = vsel %vm219, %v787, 0
      %v801 = vsel %vm219, %v788, 0
      %v804 = vsel %vm219, %v789, 0
      %v807 = vsel %vm219, %v790, 0
      %v810 = vsel %vm219, %v791, 0
      %v813 = vsel %vm219, %v792, 0
      %v816 = vsel %vm219, %v793, 0
      %v819 = vsel %vm219, %v794, 0
      %v822 = vsel %vm244, %v796, 0
      %824 = vmatprep.subr.mxu0 0.0
      %825 = vmatpush1.msra.mxu0 0.0
      %826 = vmatprep.subr.mxu0 0.0
      %827 = vmatpush1.msra.mxu0 0.0
      %828 = vmatprep.subr.mxu0 0.0
      %829 = vmatpush1.msra.mxu0 0.0
      %830 = vmatprep.subr.mxu0 0.0
      %831 = vmatpush1.msra.mxu0 0.0
      %832 = vmatprep.subr.mxu0 0.0
      %833 = vmatpush1.msra.mxu0 0.0
      %834 = vmatprep.subr.mxu0 0.0
      %835 = vmatpush1.msra.mxu0 0.0
      %836 = vmatprep.subr.mxu0 0.0
      %837 = vmatpush1.msra.mxu0 0.0
      %838 = vmatprep.subr.mxu0 0.0
      %839 = vmatpush1.msra.mxu0 0.0
      %840 = vmatprep.subr.mxu0 0.0
      %841 = vmatpush1.msra.mxu0 0.0
      %842 = vmatprep.subr.mxu0 0.0
      %843 = vmatpush1.msra.mxu0 0.0
      %844 = vmatprep.subr.mxu0 0.0
      %845 = vmatpush1.msra.mxu0 0.0
      %846 = vmatprep.subr.mxu0 0.0
      %847 = vmatpush1.msra.mxu0 0.0
      %848 = vmatprep.subr.mxu0 0.0
      %849 = vmatpush1.msra.mxu0 0.0
      %850 = vmatprep.subr.mxu0 0.0
      %851 = vmatpush1.msra.mxu0 0.0
      %852 = vmatprep.subr.mxu0 0.0
      %853 = vmatpush1.msra.mxu0 0.0
      %854 = vmatprep.subr.mxu0 0.0
      %855 = vmatpush1.msra.mxu0 %v822
      %856 = vmatprep.subr.mxu0 0.0
      %857 = vmatpush2.msra.mxu0 0.0
      %858 = vmatprep.subr.mxu0 0.0
      %859 = vmatpush2.msra.mxu0 0.0
      %860 = vmatprep.subr.mxu0 0.0
      %861 = vmatpush2.msra.mxu0 0.0
      %862 = vmatprep.subr.mxu0 0.0
      %863 = vmatpush2.msra.mxu0 0.0
      %864 = vmatprep.subr.mxu0 0.0
      %865 = vmatpush2.msra.mxu0 0.0
      %866 = vmatprep.subr.mxu0 0.0
      %867 = vmatpush2.msra.mxu0 0.0
      %868 = vmatprep.subr.mxu0 0.0
      %869 = vmatpush2.msra.mxu0 0.0
      %870 = vmatprep.subr.mxu0 0.0
      %871 = vmatpush2.msra.mxu0 0.0
      %872 = vmatprep.subr.mxu0 0.0
      %873 = vmatpush2.msra.mxu0 0.0
      %874 = vmatprep.subr.mxu0 0.0
      %875 = vmatpush2.msra.mxu0 0.0
      %876 = vmatprep.subr.mxu0 0.0
      %877 = vmatpush2.msra.mxu0 0.0
      %878 = vmatprep.subr.mxu0 0.0
      %879 = vmatpush2.msra.mxu0 0.0
      %880 = vmatprep.subr.mxu0 0.0
      %881 = vmatpush2.msra.mxu0 0.0
      %882 = vmatprep.subr.mxu0 0.0
      %883 = vmatpush2.msra.mxu0 0.0
      %884 = vmatprep.subr.mxu0 0.0
      %885 = vmatpush2.msra.mxu0 0.0
      %886 = vmatprep.subr.mxu0 0.0
      %887 = vmatpush2.msra.mxu0 0.0
      %888 = vmatprep.mubr.f32.mxu0 0.0
      %889 = vmatmul.mubr.f32.gmra.mxu0 %v798
      %v890 = vpop.f32.mrf.mxu0
      %v891 = vadd.f32 0.0, %v890
      %v892 = vpop.f32.mrf.mxu0
      %893 = vmatprep.mubr.f32.mxu0 0.0
      %894 = vmatmul.mubr.f32.gmra.mxu0 %v801
      %v895 = vpop.f32.mrf.mxu0
      %v896 = vadd.f32 0.0, %v895
      %v897 = vpop.f32.mrf.mxu0
      %898 = vmatprep.mubr.f32.mxu0 0.0
      %899 = vmatmul.mubr.f32.gmra.mxu0 %v804
      %v900 = vpop.f32.mrf.mxu0
      %v901 = vadd.f32 0.0, %v900
      %v902 = vpop.f32.mrf.mxu0
      %903 = vmatprep.mubr.f32.mxu0 0.0
      %904 = vmatmul.mubr.f32.gmra.mxu0 %v807
      %v905 = vpop.f32.mrf.mxu0
      %v906 = vadd.f32 0.0, %v905
      %v907 = vpop.f32.mrf.mxu0
      %908 = vmatprep.mubr.f32.mxu0 0.0
      %909 = vmatmul.mubr.f32.gmra.mxu0 %v810
      %v910 = vpop.f32.mrf.mxu0
      %v911 = vadd.f32 0.0, %v910
      %v912 = vpop.f32.mrf.mxu0
      %913 = vmatprep.mubr.f32.mxu0 0.0
      %914 = vmatmul.mubr.f32.gmra.mxu0 %v813
      %v915 = vpop.f32.mrf.mxu0
      %v916 = vadd.f32 0.0, %v915
      %v917 = vpop.f32.mrf.mxu0
      %918 = vmatprep.mubr.f32.mxu0 0.0
      %919 = vmatmul.mubr.f32.gmra.mxu0 %v816
      %v920 = vpop.f32.mrf.mxu0
      %v921 = vadd.f32 0.0, %v920
      %v922 = vpop.f32.mrf.mxu0
      %923 = vmatprep.mubr.f32.mxu0 0.0
      %924 = vmatmul.mubr.f32.gmra.mxu0 %v819
      %v925 = vpop.f32.mrf.mxu0
      %v926 = vadd.f32 0.0, %v925
      %v927 = vpop.f32.mrf.mxu0
      %928 = vdwg.mxu0
      %v929 = vadd.f32 %v778, %v891
      %v930 = vadd.f32 %v779, %v896
      %v931 = vadd.f32 %v780, %v901
      %v932 = vadd.f32 %v781, %v906
      %v933 = vadd.f32 %v782, %v911
      %v934 = vadd.f32 %v783, %v916
      %v935 = vadd.f32 %v784, %v921
      %v936 = vadd.f32 %v785, %v926
      %v937 = vld [vmem:[%s635 + $0x1] sm:$0xff]
      %v938 = vld [vmem:[%s635 + $0x11] sm:$0xff]
      %v939 = vld [vmem:[%s635 + $0x21] sm:$0xff]
      %v940 = vld [vmem:[%s635 + $0x31] sm:$0xff]
      %v941 = vld [vmem:[%s635 + $0x41] sm:$0xff]
      %v942 = vld [vmem:[%s635 + $0x51] sm:$0xff]
      %v943 = vld [vmem:[%s635 + $0x61] sm:$0xff]
      %v944 = vld [vmem:[%s635 + $0x71] sm:$0xff]
      %s945 = scalar_lea.vmem %s1, 20
      %v946 = vld [vmem:[%s945] sm:$0xf]
      %v948 = vsel %vm219, %v937, 0
      %v951 = vsel %vm219, %v938, 0
      %v954 = vsel %vm219, %v939, 0
      %v957 = vsel %vm219, %v940, 0
      %v960 = vsel %vm219, %v941, 0
      %v963 = vsel %vm219, %v942, 0
      %v966 = vsel %vm219, %v943, 0
      %v969 = vsel %vm219, %v944, 0
      %v972 = vsel %vm244, %v946, 0
      %974 = vmatprep.subr.mxu0 0.0
      %975 = vmatpush1.msra.mxu0 0.0
      %976 = vmatprep.subr.mxu0 0.0
      %977 = vmatpush1.msra.mxu0 0.0
      %978 = vmatprep.subr.mxu0 0.0
      %979 = vmatpush1.msra.mxu0 0.0
      %980 = vmatprep.subr.mxu0 0.0
      %981 = vmatpush1.msra.mxu0 0.0
      %982 = vmatprep.subr.mxu0 0.0
      %983 = vmatpush1.msra.mxu0 0.0
      %984 = vmatprep.subr.mxu0 0.0
      %985 = vmatpush1.msra.mxu0 0.0
      %986 = vmatprep.subr.mxu0 0.0
      %987 = vmatpush1.msra.mxu0 0.0
      %988 = vmatprep.subr.mxu0 0.0
      %989 = vmatpush1.msra.mxu0 0.0
      %990 = vmatprep.subr.mxu0 0.0
      %991 = vmatpush1.msra.mxu0 0.0
      %992 = vmatprep.subr.mxu0 0.0
      %993 = vmatpush1.msra.mxu0 0.0
      %994 = vmatprep.subr.mxu0 0.0
      %995 = vmatpush1.msra.mxu0 0.0
      %996 = vmatprep.subr.mxu0 0.0
      %997 = vmatpush1.msra.mxu0 0.0
      %998 = vmatprep.subr.mxu0 0.0
      %999 = vmatpush1.msra.mxu0 0.0
      %1000 = vmatprep.subr.mxu0 0.0
      %1001 = vmatpush1.msra.mxu0 0.0
      %1002 = vmatprep.subr.mxu0 0.0
      %1003 = vmatpush1.msra.mxu0 0.0
      %1004 = vmatprep.subr.mxu0 0.0
      %1005 = vmatpush1.msra.mxu0 %v972
      %1006 = vmatprep.subr.mxu0 0.0
      %1007 = vmatpush2.msra.mxu0 0.0
      %1008 = vmatprep.subr.mxu0 0.0
      %1009 = vmatpush2.msra.mxu0 0.0
      %1010 = vmatprep.subr.mxu0 0.0
      %1011 = vmatpush2.msra.mxu0 0.0
      %1012 = vmatprep.subr.mxu0 0.0
      %1013 = vmatpush2.msra.mxu0 0.0
      %1014 = vmatprep.subr.mxu0 0.0
      %1015 = vmatpush2.msra.mxu0 0.0
      %1016 = vmatprep.subr.mxu0 0.0
      %1017 = vmatpush2.msra.mxu0 0.0
      %1018 = vmatprep.subr.mxu0 0.0
      %1019 = vmatpush2.msra.mxu0 0.0
      %1020 = vmatprep.subr.mxu0 0.0
      %1021 = vmatpush2.msra.mxu0 0.0
      %1022 = vmatprep.subr.mxu0 0.0
      %1023 = vmatpush2.msra.mxu0 0.0
      %1024 = vmatprep.subr.mxu0 0.0
      %1025 = vmatpush2.msra.mxu0 0.0
      %1026 = vmatprep.subr.mxu0 0.0
      %1027 = vmatpush2.msra.mxu0 0.0
      %1028 = vmatprep.subr.mxu0 0.0
      %1029 = vmatpush2.msra.mxu0 0.0
      %1030 = vmatprep.subr.mxu0 0.0
      %1031 = vmatpush2.msra.mxu0 0.0
      %1032 = vmatprep.subr.mxu0 0.0
      %1033 = vmatpush2.msra.mxu0 0.0
      %1034 = vmatprep.subr.mxu0 0.0
      %1035 = vmatpush2.msra.mxu0 0.0
      %1036 = vmatprep.subr.mxu0 0.0
      %1037 = vmatpush2.msra.mxu0 0.0
      %1038 = vmatprep.mubr.f32.mxu0 0.0
      %1039 = vmatmul.mubr.f32.gmra.mxu0 %v948
      %v1040 = vpop.f32.mrf.mxu0
      %v1041 = vadd.f32 0.0, %v1040
      %v1042 = vpop.f32.mrf.mxu0
      %1043 = vmatprep.mubr.f32.mxu0 0.0
      %1044 = vmatmul.mubr.f32.gmra.mxu0 %v951
      %v1045 = vpop.f32.mrf.mxu0
      %v1046 = vadd.f32 0.0, %v1045
      %v1047 = vpop.f32.mrf.mxu0
      %1048 = vmatprep.mubr.f32.mxu0 0.0
      %1049 = vmatmul.mubr.f32.gmra.mxu0 %v954
      %v1050 = vpop.f32.mrf.mxu0
      %v1051 = vadd.f32 0.0, %v1050
      %v1052 = vpop.f32.mrf.mxu0
      %1053 = vmatprep.mubr.f32.mxu0 0.0
      %1054 = vmatmul.mubr.f32.gmra.mxu0 %v957
      %v1055 = vpop.f32.mrf.mxu0
      %v1056 = vadd.f32 0.0, %v1055
      %v1057 = vpop.f32.mrf.mxu0
      %1058 = vmatprep.mubr.f32.mxu0 0.0
      %1059 = vmatmul.mubr.f32.gmra.mxu0 %v960
      %v1060 = vpop.f32.mrf.mxu0
      %v1061 = vadd.f32 0.0, %v1060
      %v1062 = vpop.f32.mrf.mxu0
      %1063 = vmatprep.mubr.f32.mxu0 0.0
      %1064 = vmatmul.mubr.f32.gmra.mxu0 %v963
      %v1065 = vpop.f32.mrf.mxu0
      %v1066 = vadd.f32 0.0, %v1065
      %v1067 = vpop.f32.mrf.mxu0
      %1068 = vmatprep.mubr.f32.mxu0 0.0
      %1069 = vmatmul.mubr.f32.gmra.mxu0 %v966
      %v1070 = vpop.f32.mrf.mxu0
      %v1071 = vadd.f32 0.0, %v1070
      %v1072 = vpop.f32.mrf.mxu0
      %1073 = vmatprep.mubr.f32.mxu0 0.0
      %1074 = vmatmul.mubr.f32.gmra.mxu0 %v969
      %v1075 = vpop.f32.mrf.mxu0
      %v1076 = vadd.f32 0.0, %v1075
      %v1077 = vpop.f32.mrf.mxu0
      %1078 = vdwg.mxu0
      %v1079 = vadd.f32 %v929, %v1041
      %v1080 = vadd.f32 %v930, %v1046
      %v1081 = vadd.f32 %v931, %v1051
      %v1082 = vadd.f32 %v932, %v1056
      %v1083 = vadd.f32 %v933, %v1061
      %v1084 = vadd.f32 %v934, %v1066
      %v1085 = vadd.f32 %v935, %v1071
      %v1086 = vadd.f32 %v936, %v1076
      %s1087 = scalar_lea.vmem %s192, 16
      %v1088 = vld [vmem:[%s1087] sm:$0xff]
      %v1089 = vld [vmem:[%s1087 + $0x10] sm:$0xff]
      %v1090 = vld [vmem:[%s1087 + $0x20] sm:$0xff]
      %v1091 = vld [vmem:[%s1087 + $0x30] sm:$0xff]
      %v1092 = vld [vmem:[%s1087 + $0x40] sm:$0xff]
      %v1093 = vld [vmem:[%s1087 + $0x50] sm:$0xff]
      %v1094 = vld [vmem:[%s1087 + $0x60] sm:$0xff]
      %v1095 = vld [vmem:[%s1087 + $0x70] sm:$0xff]
      %s1096 = scalar_lea.vmem %s1, 24
      %v1097 = vld [vmem:[%s1096] sm:$0xf]
      %v1099 = vsel %vm219, %v1088, 0
      %v1102 = vsel %vm219, %v1089, 0
      %v1105 = vsel %vm219, %v1090, 0
      %v1108 = vsel %vm219, %v1091, 0
      %v1111 = vsel %vm219, %v1092, 0
      %v1114 = vsel %vm219, %v1093, 0
      %v1117 = vsel %vm219, %v1094, 0
      %v1120 = vsel %vm219, %v1095, 0
      %v1123 = vsel %vm244, %v1097, 0
      %1125 = vmatprep.subr.mxu0 0.0
      %1126 = vmatpush1.msra.mxu0 0.0
      %1127 = vmatprep.subr.mxu0 0.0
      %1128 = vmatpush1.msra.mxu0 0.0
      %1129 = vmatprep.subr.mxu0 0.0
      %1130 = vmatpush1.msra.mxu0 0.0
      %1131 = vmatprep.subr.mxu0 0.0
      %1132 = vmatpush1.msra.mxu0 0.0
      %1133 = vmatprep.subr.mxu0 0.0
      %1134 = vmatpush1.msra.mxu0 0.0
      %1135 = vmatprep.subr.mxu0 0.0
      %1136 = vmatpush1.msra.mxu0 0.0
      %1137 = vmatprep.subr.mxu0 0.0
      %1138 = vmatpush1.msra.mxu0 0.0
      %1139 = vmatprep.subr.mxu0 0.0
      %1140 = vmatpush1.msra.mxu0 0.0
      %1141 = vmatprep.subr.mxu0 0.0
      %1142 = vmatpush1.msra.mxu0 0.0
      %1143 = vmatprep.subr.mxu0 0.0
      %1144 = vmatpush1.msra.mxu0 0.0
      %1145 = vmatprep.subr.mxu0 0.0
      %1146 = vmatpush1.msra.mxu0 0.0
      %1147 = vmatprep.subr.mxu0 0.0
      %1148 = vmatpush1.msra.mxu0 0.0
      %1149 = vmatprep.subr.mxu0 0.0
      %1150 = vmatpush1.msra.mxu0 0.0
      %1151 = vmatprep.subr.mxu0 0.0
      %1152 = vmatpush1.msra.mxu0 0.0
      %1153 = vmatprep.subr.mxu0 0.0
      %1154 = vmatpush1.msra.mxu0 0.0
      %1155 = vmatprep.subr.mxu0 0.0
      %1156 = vmatpush1.msra.mxu0 %v1123
      %1157 = vmatprep.subr.mxu0 0.0
      %1158 = vmatpush2.msra.mxu0 0.0
      %1159 = vmatprep.subr.mxu0 0.0
      %1160 = vmatpush2.msra.mxu0 0.0
      %1161 = vmatprep.subr.mxu0 0.0
      %1162 = vmatpush2.msra.mxu0 0.0
      %1163 = vmatprep.subr.mxu0 0.0
      %1164 = vmatpush2.msra.mxu0 0.0
      %1165 = vmatprep.subr.mxu0 0.0
      %1166 = vmatpush2.msra.mxu0 0.0
      %1167 = vmatprep.subr.mxu0 0.0
      %1168 = vmatpush2.msra.mxu0 0.0
      %1169 = vmatprep.subr.mxu0 0.0
      %1170 = vmatpush2.msra.mxu0 0.0
      %1171 = vmatprep.subr.mxu0 0.0
      %1172 = vmatpush2.msra.mxu0 0.0
      %1173 = vmatprep.subr.mxu0 0.0
      %1174 = vmatpush2.msra.mxu0 0.0
      %1175 = vmatprep.subr.mxu0 0.0
      %1176 = vmatpush2.msra.mxu0 0.0
      %1177 = vmatprep.subr.mxu0 0.0
      %1178 = vmatpush2.msra.mxu0 0.0
      %1179 = vmatprep.subr.mxu0 0.0
      %1180 = vmatpush2.msra.mxu0 0.0
      %1181 = vmatprep.subr.mxu0 0.0
      %1182 = vmatpush2.msra.mxu0 0.0
      %1183 = vmatprep.subr.mxu0 0.0
      %1184 = vmatpush2.msra.mxu0 0.0
      %1185 = vmatprep.subr.mxu0 0.0
      %1186 = vmatpush2.msra.mxu0 0.0
      %1187 = vmatprep.subr.mxu0 0.0
      %1188 = vmatpush2.msra.mxu0 0.0
      %1189 = vmatprep.mubr.f32.mxu0 0.0
      %1190 = vmatmul.mubr.f32.gmra.mxu0 %v1099
      %v1191 = vpop.f32.mrf.mxu0
      %v1192 = vadd.f32 0.0, %v1191
      %v1193 = vpop.f32.mrf.mxu0
      %1194 = vmatprep.mubr.f32.mxu0 0.0
      %1195 = vmatmul.mubr.f32.gmra.mxu0 %v1102
      %v1196 = vpop.f32.mrf.mxu0
      %v1197 = vadd.f32 0.0, %v1196
      %v1198 = vpop.f32.mrf.mxu0
      %1199 = vmatprep.mubr.f32.mxu0 0.0
      %1200 = vmatmul.mubr.f32.gmra.mxu0 %v1105
      %v1201 = vpop.f32.mrf.mxu0
      %v1202 = vadd.f32 0.0, %v1201
      %v1203 = vpop.f32.mrf.mxu0
      %1204 = vmatprep.mubr.f32.mxu0 0.0
      %1205 = vmatmul.mubr.f32.gmra.mxu0 %v1108
      %v1206 = vpop.f32.mrf.mxu0
      %v1207 = vadd.f32 0.0, %v1206
      %v1208 = vpop.f32.mrf.mxu0
      %1209 = vmatprep.mubr.f32.mxu0 0.0
      %1210 = vmatmul.mubr.f32.gmra.mxu0 %v1111
      %v1211 = vpop.f32.mrf.mxu0
      %v1212 = vadd.f32 0.0, %v1211
      %v1213 = vpop.f32.mrf.mxu0
      %1214 = vmatprep.mubr.f32.mxu0 0.0
      %1215 = vmatmul.mubr.f32.gmra.mxu0 %v1114
      %v1216 = vpop.f32.mrf.mxu0
      %v1217 = vadd.f32 0.0, %v1216
      %v1218 = vpop.f32.mrf.mxu0
      %1219 = vmatprep.mubr.f32.mxu0 0.0
      %1220 = vmatmul.mubr.f32.gmra.mxu0 %v1117
      %v1221 = vpop.f32.mrf.mxu0
      %v1222 = vadd.f32 0.0, %v1221
      %v1223 = vpop.f32.mrf.mxu0
      %1224 = vmatprep.mubr.f32.mxu0 0.0
      %1225 = vmatmul.mubr.f32.gmra.mxu0 %v1120
      %v1226 = vpop.f32.mrf.mxu0
      %v1227 = vadd.f32 0.0, %v1226
      %v1228 = vpop.f32.mrf.mxu0
      %1229 = vdwg.mxu0
      %v1230 = vadd.f32 %v1079, %v1192
      %v1231 = vadd.f32 %v1080, %v1197
      %v1232 = vadd.f32 %v1081, %v1202
      %v1233 = vadd.f32 %v1082, %v1207
      %v1234 = vadd.f32 %v1083, %v1212
      %v1235 = vadd.f32 %v1084, %v1217
      %v1236 = vadd.f32 %v1085, %v1222
      %v1237 = vadd.f32 %v1086, %v1227
      %s1238 = scalar_lea.vmem %s192, 160
      %v1239 = vld [vmem:[%s1238] sm:$0xff]
      %v1240 = vld [vmem:[%s1238 + $0x10] sm:$0xff]
      %v1241 = vld [vmem:[%s1238 + $0x20] sm:$0xff]
      %v1242 = vld [vmem:[%s1238 + $0x30] sm:$0xff]
      %v1243 = vld [vmem:[%s1238 + $0x40] sm:$0xff]
      %v1244 = vld [vmem:[%s1238 + $0x50] sm:$0xff]
      %v1245 = vld [vmem:[%s1238 + $0x60] sm:$0xff]
      %v1246 = vld [vmem:[%s1238 + $0x70] sm:$0xff]
      %s1247 = scalar_lea.vmem %s1, 28
      %v1248 = vld [vmem:[%s1247] sm:$0xf]
      %v1250 = vsel %vm219, %v1239, 0
      %v1253 = vsel %vm219, %v1240, 0
      %v1256 = vsel %vm219, %v1241, 0
      %v1259 = vsel %vm219, %v1242, 0
      %v1262 = vsel %vm219, %v1243, 0
      %v1265 = vsel %vm219, %v1244, 0
      %v1268 = vsel %vm219, %v1245, 0
      %v1271 = vsel %vm219, %v1246, 0
      %v1274 = vsel %vm244, %v1248, 0
      %1276 = vmatprep.subr.mxu0 0.0
      %1277 = vmatpush1.msra.mxu0 0.0
      %1278 = vmatprep.subr.mxu0 0.0
      %1279 = vmatpush1.msra.mxu0 0.0
      %1280 = vmatprep.subr.mxu0 0.0
      %1281 = vmatpush1.msra.mxu0 0.0
      %1282 = vmatprep.subr.mxu0 0.0
      %1283 = vmatpush1.msra.mxu0 0.0
      %1284 = vmatprep.subr.mxu0 0.0
      %1285 = vmatpush1.msra.mxu0 0.0
      %1286 = vmatprep.subr.mxu0 0.0
      %1287 = vmatpush1.msra.mxu0 0.0
      %1288 = vmatprep.subr.mxu0 0.0
      %1289 = vmatpush1.msra.mxu0 0.0
      %1290 = vmatprep.subr.mxu0 0.0
      %1291 = vmatpush1.msra.mxu0 0.0
      %1292 = vmatprep.subr.mxu0 0.0
      %1293 = vmatpush1.msra.mxu0 0.0
      %1294 = vmatprep.subr.mxu0 0.0
      %1295 = vmatpush1.msra.mxu0 0.0
      %1296 = vmatprep.subr.mxu0 0.0
      %1297 = vmatpush1.msra.mxu0 0.0
      %1298 = vmatprep.subr.mxu0 0.0
      %1299 = vmatpush1.msra.mxu0 0.0
      %1300 = vmatprep.subr.mxu0 0.0
      %1301 = vmatpush1.msra.mxu0 0.0
      %1302 = vmatprep.subr.mxu0 0.0
      %1303 = vmatpush1.msra.mxu0 0.0
      %1304 = vmatprep.subr.mxu0 0.0
      %1305 = vmatpush1.msra.mxu0 0.0
      %1306 = vmatprep.subr.mxu0 0.0
      %1307 = vmatpush1.msra.mxu0 %v1274
      %1308 = vmatprep.subr.mxu0 0.0
      %1309 = vmatpush2.msra.mxu0 0.0
      %1310 = vmatprep.subr.mxu0 0.0
      %1311 = vmatpush2.msra.mxu0 0.0
      %1312 = vmatprep.subr.mxu0 0.0
      %1313 = vmatpush2.msra.mxu0 0.0
      %1314 = vmatprep.subr.mxu0 0.0
      %1315 = vmatpush2.msra.mxu0 0.0
      %1316 = vmatprep.subr.mxu0 0.0
      %1317 = vmatpush2.msra.mxu0 0.0
      %1318 = vmatprep.subr.mxu0 0.0
      %1319 = vmatpush2.msra.mxu0 0.0
      %1320 = vmatprep.subr.mxu0 0.0
      %1321 = vmatpush2.msra.mxu0 0.0
      %1322 = vmatprep.subr.mxu0 0.0
      %1323 = vmatpush2.msra.mxu0 0.0
      %1324 = vmatprep.subr.mxu0 0.0
      %1325 = vmatpush2.msra.mxu0 0.0
      %1326 = vmatprep.subr.mxu0 0.0
      %1327 = vmatpush2.msra.mxu0 0.0
      %1328 = vmatprep.subr.mxu0 0.0
      %1329 = vmatpush2.msra.mxu0 0.0
      %1330 = vmatprep.subr.mxu0 0.0
      %1331 = vmatpush2.msra.mxu0 0.0
      %1332 = vmatprep.subr.mxu0 0.0
      %1333 = vmatpush2.msra.mxu0 0.0
      %1334 = vmatprep.subr.mxu0 0.0
      %1335 = vmatpush2.msra.mxu0 0.0
      %1336 = vmatprep.subr.mxu0 0.0
      %1337 = vmatpush2.msra.mxu0 0.0
      %1338 = vmatprep.subr.mxu0 0.0
      %1339 = vmatpush2.msra.mxu0 0.0
      %1340 = vmatprep.mubr.f32.mxu0 0.0
      %1341 = vmatmul.mubr.f32.gmra.mxu0 %v1250
      %v1342 = vpop.f32.mrf.mxu0
      %v1343 = vadd.f32 0.0, %v1342
      %v1344 = vpop.f32.mrf.mxu0
      %1345 = vmatprep.mubr.f32.mxu0 0.0
      %1346 = vmatmul.mubr.f32.gmra.mxu0 %v1253
      %v1347 = vpop.f32.mrf.mxu0
      %v1348 = vadd.f32 0.0, %v1347
      %v1349 = vpop.f32.mrf.mxu0
      %1350 = vmatprep.mubr.f32.mxu0 0.0
      %1351 = vmatmul.mubr.f32.gmra.mxu0 %v1256
      %v1352 = vpop.f32.mrf.mxu0
      %v1353 = vadd.f32 0.0, %v1352
      %v1354 = vpop.f32.mrf.mxu0
      %1355 = vmatprep.mubr.f32.mxu0 0.0
      %1356 = vmatmul.mubr.f32.gmra.mxu0 %v1259
      %v1357 = vpop.f32.mrf.mxu0
      %v1358 = vadd.f32 0.0, %v1357
      %v1359 = vpop.f32.mrf.mxu0
      %1360 = vmatprep.mubr.f32.mxu0 0.0
      %1361 = vmatmul.mubr.f32.gmra.mxu0 %v1262
      %v1362 = vpop.f32.mrf.mxu0
      %v1363 = vadd.f32 0.0, %v1362
      %v1364 = vpop.f32.mrf.mxu0
      %1365 = vmatprep.mubr.f32.mxu0 0.0
      %1366 = vmatmul.mubr.f32.gmra.mxu0 %v1265
      %v1367 = vpop.f32.mrf.mxu0
      %v1368 = vadd.f32 0.0, %v1367
      %v1369 = vpop.f32.mrf.mxu0
      %1370 = vmatprep.mubr.f32.mxu0 0.0
      %1371 = vmatmul.mubr.f32.gmra.mxu0 %v1268
      %v1372 = vpop.f32.mrf.mxu0
      %v1373 = vadd.f32 0.0, %v1372
      %v1374 = vpop.f32.mrf.mxu0
      %1375 = vmatprep.mubr.f32.mxu0 0.0
      %1376 = vmatmul.mubr.f32.gmra.mxu0 %v1271
      %v1377 = vpop.f32.mrf.mxu0
      %v1378 = vadd.f32 0.0, %v1377
      %v1379 = vpop.f32.mrf.mxu0
      %1380 = vdwg.mxu0
      %v1381 = vadd.f32 %v1230, %v1343
      %v1382 = vadd.f32 %v1231, %v1348
      %v1383 = vadd.f32 %v1232, %v1353
      %v1384 = vadd.f32 %v1233, %v1358
      %v1385 = vadd.f32 %v1234, %v1363
      %v1386 = vadd.f32 %v1235, %v1368
      %v1387 = vadd.f32 %v1236, %v1373
      %v1388 = vadd.f32 %v1237, %v1378
      %v1389 = vld [vmem:[%s1087 + $0x1] sm:$0xff]
      %v1390 = vld [vmem:[%s1087 + $0x11] sm:$0xff]
      %v1391 = vld [vmem:[%s1087 + $0x21] sm:$0xff]
      %v1392 = vld [vmem:[%s1087 + $0x31] sm:$0xff]
      %v1393 = vld [vmem:[%s1087 + $0x41] sm:$0xff]
      %v1394 = vld [vmem:[%s1087 + $0x51] sm:$0xff]
      %v1395 = vld [vmem:[%s1087 + $0x61] sm:$0xff]
      %v1396 = vld [vmem:[%s1087 + $0x71] sm:$0xff]
      %s1397 = scalar_lea.vmem %s1, 32
      %v1398 = vld [vmem:[%s1397] sm:$0xf]
      %v1400 = vsel %vm219, %v1389, 0
      %v1403 = vsel %vm219, %v1390, 0
      %v1406 = vsel %vm219, %v1391, 0
      %v1409 = vsel %vm219, %v1392, 0
      %v1412 = vsel %vm219, %v1393, 0
      %v1415 = vsel %vm219, %v1394, 0
      %v1418 = vsel %vm219, %v1395, 0
      %v1421 = vsel %vm219, %v1396, 0
      %v1424 = vsel %vm244, %v1398, 0
      %1426 = vmatprep.subr.mxu0 0.0
      %1427 = vmatpush1.msra.mxu0 0.0
      %1428 = vmatprep.subr.mxu0 0.0
      %1429 = vmatpush1.msra.mxu0 0.0
      %1430 = vmatprep.subr.mxu0 0.0
      %1431 = vmatpush1.msra.mxu0 0.0
      %1432 = vmatprep.subr.mxu0 0.0
      %1433 = vmatpush1.msra.mxu0 0.0
      %1434 = vmatprep.subr.mxu0 0.0
      %1435 = vmatpush1.msra.mxu0 0.0
      %1436 = vmatprep.subr.mxu0 0.0
      %1437 = vmatpush1.msra.mxu0 0.0
      %1438 = vmatprep.subr.mxu0 0.0
      %1439 = vmatpush1.msra.mxu0 0.0
      %1440 = vmatprep.subr.mxu0 0.0
      %1441 = vmatpush1.msra.mxu0 0.0
      %1442 = vmatprep.subr.mxu0 0.0
      %1443 = vmatpush1.msra.mxu0 0.0
      %1444 = vmatprep.subr.mxu0 0.0
      %1445 = vmatpush1.msra.mxu0 0.0
      %1446 = vmatprep.subr.mxu0 0.0
      %1447 = vmatpush1.msra.mxu0 0.0
      %1448 = vmatprep.subr.mxu0 0.0
      %1449 = vmatpush1.msra.mxu0 0.0
      %1450 = vmatprep.subr.mxu0 0.0
      %1451 = vmatpush1.msra.mxu0 0.0
      %1452 = vmatprep.subr.mxu0 0.0
      %1453 = vmatpush1.msra.mxu0 0.0
      %1454 = vmatprep.subr.mxu0 0.0
      %1455 = vmatpush1.msra.mxu0 0.0
      %1456 = vmatprep.subr.mxu0 0.0
      %1457 = vmatpush1.msra.mxu0 %v1424
      %1458 = vmatprep.subr.mxu0 0.0
      %1459 = vmatpush2.msra.mxu0 0.0
      %1460 = vmatprep.subr.mxu0 0.0
      %1461 = vmatpush2.msra.mxu0 0.0
      %1462 = vmatprep.subr.mxu0 0.0
      %1463 = vmatpush2.msra.mxu0 0.0
      %1464 = vmatprep.subr.mxu0 0.0
      %1465 = vmatpush2.msra.mxu0 0.0
      %1466 = vmatprep.subr.mxu0 0.0
      %1467 = vmatpush2.msra.mxu0 0.0
      %1468 = vmatprep.subr.mxu0 0.0
      %1469 = vmatpush2.msra.mxu0 0.0
      %1470 = vmatprep.subr.mxu0 0.0
      %1471 = vmatpush2.msra.mxu0 0.0
      %1472 = vmatprep.subr.mxu0 0.0
      %1473 = vmatpush2.msra.mxu0 0.0
      %1474 = vmatprep.subr.mxu0 0.0
      %1475 = vmatpush2.msra.mxu0 0.0
      %1476 = vmatprep.subr.mxu0 0.0
      %1477 = vmatpush2.msra.mxu0 0.0
      %1478 = vmatprep.subr.mxu0 0.0
      %1479 = vmatpush2.msra.mxu0 0.0
      %1480 = vmatprep.subr.mxu0 0.0
      %1481 = vmatpush2.msra.mxu0 0.0
      %1482 = vmatprep.subr.mxu0 0.0
      %1483 = vmatpush2.msra.mxu0 0.0
      %1484 = vmatprep.subr.mxu0 0.0
      %1485 = vmatpush2.msra.mxu0 0.0
      %1486 = vmatprep.subr.mxu0 0.0
      %1487 = vmatpush2.msra.mxu0 0.0
      %1488 = vmatprep.subr.mxu0 0.0
      %1489 = vmatpush2.msra.mxu0 0.0
      %1490 = vmatprep.mubr.f32.mxu0 0.0
      %1491 = vmatmul.mubr.f32.gmra.mxu0 %v1400
      %v1492 = vpop.f32.mrf.mxu0
      %v1493 = vadd.f32 0.0, %v1492
      %v1494 = vpop.f32.mrf.mxu0
      %1495 = vmatprep.mubr.f32.mxu0 0.0
      %1496 = vmatmul.mubr.f32.gmra.mxu0 %v1403
      %v1497 = vpop.f32.mrf.mxu0
      %v1498 = vadd.f32 0.0, %v1497
      %v1499 = vpop.f32.mrf.mxu0
      %1500 = vmatprep.mubr.f32.mxu0 0.0
      %1501 = vmatmul.mubr.f32.gmra.mxu0 %v1406
      %v1502 = vpop.f32.mrf.mxu0
      %v1503 = vadd.f32 0.0, %v1502
      %v1504 = vpop.f32.mrf.mxu0
      %1505 = vmatprep.mubr.f32.mxu0 0.0
      %1506 = vmatmul.mubr.f32.gmra.mxu0 %v1409
      %v1507 = vpop.f32.mrf.mxu0
      %v1508 = vadd.f32 0.0, %v1507
      %v1509 = vpop.f32.mrf.mxu0
      %1510 = vmatprep.mubr.f32.mxu0 0.0
      %1511 = vmatmul.mubr.f32.gmra.mxu0 %v1412
      %v1512 = vpop.f32.mrf.mxu0
      %v1513 = vadd.f32 0.0, %v1512
      %v1514 = vpop.f32.mrf.mxu0
      %1515 = vmatprep.mubr.f32.mxu0 0.0
      %1516 = vmatmul.mubr.f32.gmra.mxu0 %v1415
      %v1517 = vpop.f32.mrf.mxu0
      %v1518 = vadd.f32 0.0, %v1517
      %v1519 = vpop.f32.mrf.mxu0
      %1520 = vmatprep.mubr.f32.mxu0 0.0
      %1521 = vmatmul.mubr.f32.gmra.mxu0 %v1418
      %v1522 = vpop.f32.mrf.mxu0
      %v1523 = vadd.f32 0.0, %v1522
      %v1524 = vpop.f32.mrf.mxu0
      %1525 = vmatprep.mubr.f32.mxu0 0.0
      %1526 = vmatmul.mubr.f32.gmra.mxu0 %v1421
      %v1527 = vpop.f32.mrf.mxu0
      %v1528 = vadd.f32 0.0, %v1527
      %v1529 = vpop.f32.mrf.mxu0
      %1530 = vdwg.mxu0
      %v1531 = vadd.f32 %v1381, %v1493
      %v1532 = vadd.f32 %v1382, %v1498
      %v1533 = vadd.f32 %v1383, %v1503
      %v1534 = vadd.f32 %v1384, %v1508
      %v1535 = vadd.f32 %v1385, %v1513
      %v1536 = vadd.f32 %v1386, %v1518
      %v1537 = vadd.f32 %v1387, %v1523
      %v1538 = vadd.f32 %v1388, %v1528
      %v1539 = vld [vmem:[%s2] sm:$0x1]
      %v1541 = vlaneseq
      %v1542 = vshrl.u32 %v1541, 7
      %v1543 = vsub.s32 0, %v1542
      %v1544 = vrot.slane %v1539, %v1543
      %v1546 = vmul.f32 %v1531, %v1544
      %v1547 = vmul.f32 %v1532, %v1544
      %v1548 = vmul.f32 %v1533, %v1544
      %v1549 = vmul.f32 %v1534, %v1544
      %v1550 = vmul.f32 %v1535, %v1544
      %v1551 = vmul.f32 %v1536, %v1544
      %v1552 = vmul.f32 %v1537, %v1544
      %v1553 = vmul.f32 %v1538, %v1544
      %v1554 = vld [vmem:[%s3] sm:$0x1]
      %v1556 = vlaneseq
      %v1557 = vshrl.u32 %v1556, 7
      %v1558 = vsub.s32 0, %v1557
      %v1559 = vrot.slane %v1554, %v1558
      %v1561 = vadd.f32 %v1546, %v1559
      %v1562 = vadd.f32 %v1547, %v1559
      %v1563 = vadd.f32 %v1548, %v1559
      %v1564 = vadd.f32 %v1549, %v1559
      %v1565 = vadd.f32 %v1550, %v1559
      %v1566 = vadd.f32 %v1551, %v1559
      %v1567 = vadd.f32 %v1552, %v1559
      %v1568 = vadd.f32 %v1553, %v1559
      %v1569 = vmax.f32 %v1561, 0.0
      %v1570 = vmax.f32 %v1562, 0.0
      %v1571 = vmax.f32 %v1563, 0.0
      %v1572 = vmax.f32 %v1564, 0.0
      %v1573 = vmax.f32 %v1565, 0.0
      %v1574 = vmax.f32 %v1566, 0.0
      %v1575 = vmax.f32 %v1567, 0.0
      %v1576 = vmax.f32 %v1568, 0.0
      %vm1577 = vcmask 130048
      %1578 = vst.msk [vmem:[%s197] sm:$0xff] %vm1577, %v1569
      %1579 = vst.msk [vmem:[%s197 + $0x8] sm:$0xff] %vm1577, %v1570
      %1580 = vst.msk [vmem:[%s197 + $0x10] sm:$0xff] %vm1577, %v1571
      %1581 = vst.msk [vmem:[%s197 + $0x18] sm:$0xff] %vm1577, %v1572
      %1582 = vst.msk [vmem:[%s197 + $0x20] sm:$0xff] %vm1577, %v1573
      %1583 = vst.msk [vmem:[%s197 + $0x28] sm:$0xff] %vm1577, %v1574
      %1584 = vst.msk [vmem:[%s197 + $0x30] sm:$0xff] %vm1577, %v1575
      %1585 = vst.msk [vmem:[%s197 + $0x38] sm:$0xff] %vm1577, %v1576
      %s1586 = smul.u32 8, %s15
      %p1587 = scmp.lt.s32.totalorder %s1586, 15
      %s1588 = scalar_select %p1587, %s1586, 15
      %s1589 = smul.addr %s1588, 8
      %s1590 = scalar_lea.vmem %s4, %s1589
      // Predicated region
      $region37: #{stem_block_forward.3} parent=35 // pred_check
        %p1591 = pneg %p122
      $region38: #{stem_block_forward.3} parent=35 // pred_check_branch
        %1593 = sbr.rel (%p1591) target = $region40
      $region39: #{stem_block_forward.3} parent=35 // pred_region
        %s1594 = smul.u32 8, %s15
      $region40: #{stem_block_forward.3} parent=35 // pred_fallthru
        _
    $region36: #{stem_block_forward.3} parent=5 // pred_fallthru
      _
    %p1595 = scmp.le.s32.totalorder 2, %s10
    // Predicated region
    $region41: #{stem_block_forward.3} parent=5 // pred_check
      %p1596 = pneg %p1595
    $region42: #{stem_block_forward.3} parent=5 // pred_check_branch
      %1598 = sbr.rel (%p1596) target = $region44
    $region43: #{stem_block_forward.3} parent=5 // pred_region
      %s1599 = ssub.s32 %s10, 2
      // Predicated region
      $region45: #{stem_block_forward.3} parent=43 // pred_check
        %p1600 = pneg %p128
      $region46: #{stem_block_forward.3} parent=43 // pred_check_branch
        %1602 = sbr.rel (%p1600) target = $region48
      $region47: #{stem_block_forward.3} parent=43 // pred_region
        %s1603 = smul.u32 8, %s16
        %p1604 = scmp.lt.s32.totalorder %s1603, 15
        %s1605 = scalar_select %p1604, %s1603, 15
        %s1606 = smul.addr %s1605, 8
        %s1607 = scalar_lea.vmem %s4, %s1606
      $region48: #{stem_block_forward.3} parent=43 // pred_fallthru
        _
    $region44: #{stem_block_forward.3} parent=5 // pred_fallthru
      _
  $region6: #{stem_block_forward.3} parent=0 // loop_footer
    %s14 = sadd.s32 1, %s10
  $region7: #{stem_block_forward.3} parent=0 // loop_footer_branch
    %9 = sbr.rel target = $region3
  $region8: #{stem_block_forward.3} parent=0 // loop_exit
    _

// kernel: stem_block_forward.4
$region0: #{stem_block_forward.4}
  #allocation0 [shape = 'u32[]', space=smem, size = 0x4, offset = 0x4, fixed_abs, tag = 'smem constant byte address 0x4 - core index']
  #allocation1 [shape = 'u32[144,128]{1,0:T(1,128)}', space=vmem, size = 0x12000, scoped, tag = 'internal scratch']
  %s0 = inlined_call_operand.vmem [shape: f32[2,1,10,10,16], index: 0, kind: input, shape index: {}]
  %s1 = inlined_call_operand.vmem [shape: f32[9,16,16], index: 1, kind: input, shape index: {}]
  %s2 = inlined_call_operand.vmem [shape: f32[128,4], index: 2, kind: input, shape index: {}]
  %s3 = inlined_call_operand.vmem [shape: f32[4,16], index: 3, kind: input, shape index: {}]
  %s4 = inlined_call_operand.vmem [shape: f32[1,16], index: 4, kind: input, shape index: {}]
  %s5 = inlined_call_operand.vmem [shape: f32[128,16], index: 5, kind: output, shape index: {0}]
  %s6 = inlined_call_operand.vmem [shape: f32[2,1,16], index: 6, kind: output, shape index: {1}]
  %7 = xla_tuple %s5, %s6
  %s8 = sld [smem:[#allocation0]]
  $region61: #{stem_block_forward.4} parent=0
    _
  %s10 = ssub.s32 1, %s8
  %s11 = scalar_select 0, %s10, %s8
  loop: start=0, step=1, limit=4
  $region2: #{stem_block_forward.4} parent=0 // loop_pre_header
    _
  $region3: #{stem_block_forward.4} parent=0 // loop_header
    %s13 = sphi 0, %s17
    %p14 = scmp.ge.s32.totalorder %s13, 4
    %s23 = sphi 0, %s25
    %s26 = sphi 0, %s23
    %s27 = sphi 0, %s26
    %s43 = sphi 0, %s27
    %s47 = sphi 0, %s47
    %s49 = sphi 0, %s47
    %s50 = sphi 0, %s49
    %s64 = sphi 0, %s50
    %s70 = sphi 0, %s72
    %s73 = sphi 0, %s70
    %s74 = sphi 0, %s73
    %s90 = sphi 0, %s74
    %s94 = sphi 0, %s94
    %s96 = sphi 0, %s94
    %s97 = sphi 0, %s96
    %s111 = sphi 0, %s97
    %s115 = sphi 0, %s115
    %s117 = sphi 0, %s115
    %s118 = sphi 0, %s117
    %s132 = sphi 0, %s118
    %s138 = sphi 0, %s140
    %s141 = sphi 0, %s138
    %s142 = sphi 0, %s141
    %s158 = sphi 0, %s142
    %s164 = sphi 0, %s166
    %s167 = sphi 0, %s164
    %s168 = sphi 0, %s167
    %s184 = sphi 0, %s168
  $region4: #{stem_block_forward.4} parent=0 // loop_header_branch
    %16 = sbr.rel (%p14) target = $region8
  $region5: #{stem_block_forward.4} parent=0 // loop_body
    %s18 = ssub.s32 %s13, 1
    %s19 = ssub.s32 %s13, 2
    %s20 = sadd.s32 %s13, 1
    %s21 = ssub.s32 %s13, %s20
    %p22 = scmp.eq.s32.totalorder %s21, 0
    %s24 = sadd.s32 %s23, 1
    %s25 = scalar_select %p22, %s23, %s24
    %p28 = pneg %p22
    %p29 = scmp.eq.s32.totalorder %s13, 1
    %p30 = por %p28, %p29
    %p31 = scmp.ne.s32.totalorder %s23, %s26
    %p32 = scmp.eq.s32.totalorder %s13, 0
    %p33 = por %p31, %p32
    %p34 = scmp.ne.s32.totalorder %s23, %s26
    %p35 = scmp.eq.s32.totalorder %s18, 1
    %p36 = por %p34, %p35
    %p37 = scmp.ne.s32.totalorder %s26, %s27
    %p38 = scmp.eq.s32.totalorder %s18, 0
    %p39 = por %p37, %p38
    %p40 = scmp.ne.s32.totalorder %s26, %s27
    %p41 = scmp.eq.s32.totalorder %s19, 1
    %p42 = por %p40, %p41
    %p44 = scmp.ne.s32.totalorder %s27, %s43
    %p45 = scmp.eq.s32.totalorder %s19, 0
    %p46 = por %p44, %p45
    %s48 = sadd.s32 %s47, 1
    %p51 = scmp.eq.s32.totalorder %s13, 1
    %p52 = scmp.ne.s32.totalorder %s47, %s49
    %p53 = scmp.eq.s32.totalorder %s13, 0
    %p54 = por %p52, %p53
    %p55 = scmp.ne.s32.totalorder %s47, %s49
    %p56 = scmp.eq.s32.totalorder %s18, 1
    %p57 = por %p55, %p56
    %p58 = scmp.ne.s32.totalorder %s49, %s50
    %p59 = scmp.eq.s32.totalorder %s18, 0
    %p60 = por %p58, %p59
    %p61 = scmp.ne.s32.totalorder %s49, %s50
    %p62 = scmp.eq.s32.totalorder %s19, 1
    %p63 = por %p61, %p62
    %p65 = scmp.ne.s32.totalorder %s50, %s64
    %p66 = scmp.eq.s32.totalorder %s19, 0
    %p67 = por %p65, %p66
    %s68 = ssub.s32 %s13, %s20
    %p69 = scmp.eq.s32.totalorder %s68, 0
    %s71 = sadd.s32 %s70, 1
    %s72 = scalar_select %p69, %s70, %s71
    %p75 = pneg %p69
    %p76 = scmp.eq.s32.totalorder %s13, 1
    %p77 = por %p75, %p76
    %p78 = scmp.ne.s32.totalorder %s70, %s73
    %p79 = scmp.eq.s32.totalorder %s13, 0
    %p80 = por %p78, %p79
    %p81 = scmp.ne.s32.totalorder %s70, %s73
    %p82 = scmp.eq.s32.totalorder %s18, 1
    %p83 = por %p81, %p82
    %p84 = scmp.ne.s32.totalorder %s73, %s74
    %p85 = scmp.eq.s32.totalorder %s18, 0
    %p86 = por %p84, %p85
    %p87 = scmp.ne.s32.totalorder %s73, %s74
    %p88 = scmp.eq.s32.totalorder %s19, 1
    %p89 = por %p87, %p88
    %p91 = scmp.ne.s32.totalorder %s74, %s90
    %p92 = scmp.eq.s32.totalorder %s19, 0
    %p93 = por %p91, %p92
    %s95 = sadd.s32 %s94, 1
    %p98 = scmp.eq.s32.totalorder %s13, 1
    %p99 = scmp.ne.s32.totalorder %s94, %s96
    %p100 = scmp.eq.s32.totalorder %s13, 0
    %p101 = por %p99, %p100
    %p102 = scmp.ne.s32.totalorder %s94, %s96
    %p103 = scmp.eq.s32.totalorder %s18, 1
    %p104 = por %p102, %p103
    %p105 = scmp.ne.s32.totalorder %s96, %s97
    %p106 = scmp.eq.s32.totalorder %s18, 0
    %p107 = por %p105, %p106
    %p108 = scmp.ne.s32.totalorder %s96, %s97
    %p109 = scmp.eq.s32.totalorder %s19, 1
    %p110 = por %p108, %p109
    %p112 = scmp.ne.s32.totalorder %s97, %s111
    %p113 = scmp.eq.s32.totalorder %s19, 0
    %p114 = por %p112, %p113
    %s116 = sadd.s32 %s115, 1
    %p119 = scmp.eq.s32.totalorder %s13, 1
    %p120 = scmp.ne.s32.totalorder %s115, %s117
    %p121 = scmp.eq.s32.totalorder %s13, 0
    %p122 = por %p120, %p121
    %p123 = scmp.ne.s32.totalorder %s115, %s117
    %p124 = scmp.eq.s32.totalorder %s18, 1
    %p125 = por %p123, %p124
    %p126 = scmp.ne.s32.totalorder %s117, %s118
    %p127 = scmp.eq.s32.totalorder %s18, 0
    %p128 = por %p126, %p127
    %p129 = scmp.ne.s32.totalorder %s117, %s118
    %p130 = scmp.eq.s32.totalorder %s19, 1
    %p131 = por %p129, %p130
    %p133 = scmp.ne.s32.totalorder %s118, %s132
    %p134 = scmp.eq.s32.totalorder %s19, 0
    %p135 = por %p133, %p134
    %s136 = ssub.s32 %s13, %s20
    %p137 = scmp.eq.s32.totalorder %s136, 0
    %s139 = sadd.s32 %s138, 1
    %s140 = scalar_select %p137, %s138, %s139
    %p143 = pneg %p137
    %p144 = scmp.eq.s32.totalorder %s13, 1
    %p145 = por %p143, %p144
    %p146 = scmp.ne.s32.totalorder %s138, %s141
    %p147 = scmp.eq.s32.totalorder %s13, 0
    %p148 = por %p146, %p147
    %p149 = scmp.ne.s32.totalorder %s138, %s141
    %p150 = scmp.eq.s32.totalorder %s18, 1
    %p151 = por %p149, %p150
    %p152 = scmp.ne.s32.totalorder %s141, %s142
    %p153 = scmp.eq.s32.totalorder %s18, 0
    %p154 = por %p152, %p153
    %p155 = scmp.ne.s32.totalorder %s141, %s142
    %p156 = scmp.eq.s32.totalorder %s19, 1
    %p157 = por %p155, %p156
    %p159 = scmp.ne.s32.totalorder %s142, %s158
    %p160 = scmp.eq.s32.totalorder %s19, 0
    %p161 = por %p159, %p160
    %s162 = ssub.s32 %s13, %s20
    %p163 = scmp.eq.s32.totalorder %s162, 0
    %s165 = sadd.s32 %s164, 1
    %s166 = scalar_select %p163, %s164, %s165
    %p169 = pneg %p163
    %p170 = scmp.eq.s32.totalorder %s13, 1
    %p171 = por %p169, %p170
    %p172 = scmp.ne.s32.totalorder %s164, %s167
    %p173 = scmp.eq.s32.totalorder %s13, 0
    %p174 = por %p172, %p173
    %p175 = scmp.ne.s32.totalorder %s164, %s167
    %p176 = scmp.eq.s32.totalorder %s18, 1
    %p177 = por %p175, %p176
    %p178 = scmp.ne.s32.totalorder %s167, %s168
    %p179 = scmp.eq.s32.totalorder %s18, 0
    %p180 = por %p178, %p179
    %p181 = scmp.ne.s32.totalorder %s167, %s168
    %p182 = scmp.eq.s32.totalorder %s19, 1
    %p183 = por %p181, %p182
    %p185 = scmp.ne.s32.totalorder %s168, %s184
    %p186 = scmp.eq.s32.totalorder %s19, 0
    %p187 = por %p185, %p186
    %p188 = scmp.le.s32.totalorder 1, %s13
    %p189 = scmp.lt.s32.totalorder %s13, 3
    %p190 = pnand %p188, %p189
    %p191 = pneg %p190
    // Predicated region
    $region9: #{stem_block_forward.4} parent=5 // pred_check
      _
    $region10: #{stem_block_forward.4} parent=5 // pred_check_branch
      %193 = sbr.rel (%p190) target = $region12
    $region11: #{stem_block_forward.4} parent=5 // pred_region
      %s194 = ssub.s32 %s13, 1
      // Predicated region
      $region13: #{stem_block_forward.4} parent=11 // pred_check
        %p195 = pneg %p60
      $region14: #{stem_block_forward.4} parent=11 // pred_check_branch
        %197 = sbr.rel (%p195) target = $region16
      $region15: #{stem_block_forward.4} parent=11 // pred_region
        _
      $region16: #{stem_block_forward.4} parent=11 // pred_fallthru
        _
      // Predicated region
      $region17: #{stem_block_forward.4} parent=11 // pred_check
        %p198 = pneg %p107
      $region18: #{stem_block_forward.4} parent=11 // pred_check_branch
        %200 = sbr.rel (%p198) target = $region20
      $region19: #{stem_block_forward.4} parent=11 // pred_region
        _
      $region20: #{stem_block_forward.4} parent=11 // pred_fallthru
        _
      // Predicated region
      $region21: #{stem_block_forward.4} parent=11 // pred_check
        %p201 = pneg %p128
      $region22: #{stem_block_forward.4} parent=11 // pred_check_branch
        %203 = sbr.rel (%p201) target = $region24
      $region23: #{stem_block_forward.4} parent=11 // pred_region
        _
      $region24: #{stem_block_forward.4} parent=11 // pred_fallthru
        _
    $region12: #{stem_block_forward.4} parent=5 // pred_fallthru
      _
    %p204 = scmp.lt.s32.totalorder %s13, 2
    // Predicated region
    $region25: #{stem_block_forward.4} parent=5 // pred_check
      %p205 = pneg %p204
    $region26: #{stem_block_forward.4} parent=5 // pred_check_branch
      %207 = sbr.rel (%p205) target = $region28
    $region27: #{stem_block_forward.4} parent=5 // pred_region
      // Predicated region
      $region29: #{stem_block_forward.4} parent=27 // pred_check
        %p208 = pneg %p33
      $region30: #{stem_block_forward.4} parent=27 // pred_check_branch
        %210 = sbr.rel (%p208) target = $region32
      $region31: #{stem_block_forward.4} parent=27 // pred_region
        %p211 = scmp.lt.s32.totalorder %s13, 1
        %s212 = scalar_select %p211, %s13, 1
        %s213 = smul.addr %s212, 20
        %s214 = smul.addr %s213, 8
        %s215 = scalar_lea.vmem %s0, %s214
      $region32: #{stem_block_forward.4} parent=27 // pred_fallthru
        _
      // Predicated region
      $region33: #{stem_block_forward.4} parent=27 // pred_check
        %p216 = pneg %p80
      $region34: #{stem_block_forward.4} parent=27 // pred_check_branch
        %218 = sbr.rel (%p216) target = $region36
      $region35: #{stem_block_forward.4} parent=27 // pred_region
        %s219 = smul.u32 8, %s13
        %p220 = scmp.lt.s32.totalorder %s219, 15
        %s221 = scalar_select %p220, %s219, 15
        %s222 = smul.addr %s221, 8
        %s223 = scalar_lea.vmem %s2, %s222
        %s224 = smul.u32 8, %s13
      $region36: #{stem_block_forward.4} parent=27 // pred_fallthru
        _
    $region28: #{stem_block_forward.4} parent=5 // pred_fallthru
      _
    %p225 = scmp.le.s32.totalorder 1, %s13
    %p226 = scmp.lt.s32.totalorder %s13, 3
    %p227 = pnand %p225, %p226
    %p228 = pneg %p227
    // Predicated region
    $region37: #{stem_block_forward.4} parent=5 // pred_check
      _
    $region38: #{stem_block_forward.4} parent=5 // pred_check_branch
      %230 = sbr.rel (%p227) target = $region40
    $region39: #{stem_block_forward.4} parent=5 // pred_region
      %s231 = ssub.s32 %s13, 1
      %p232 = scmp.lt.s32.totalorder %s18, 1
      %s233 = scalar_select %p232, %s18, 1
      %s234 = smul.addr %s233, 20
      %s235 = smul.addr %s234, 8
      %s236 = scalar_lea.vmem %s0, %s235
      %p237 = pneg %p39
      %p238 = pneg %p36
      %p239 = pneg %p60
      %p240 = pneg %p57
      %s241 = smul.u32 8, %s18
      %p242 = scmp.lt.s32.totalorder %s241, 15
      %s243 = scalar_select %p242, %s241, 15
      %s244 = smul.addr %s243, 8
      %s245 = scalar_lea.vmem %s2, %s244
      %p246 = pneg %p86
      %p247 = pneg %p83
      %p248 = pneg %p107
      %p249 = pneg %p104
      %p250 = pneg %p128
      %p251 = pneg %p125
      %p252 = pneg %p154
      %p253 = pneg %p151
      %s254 = smul.u32 8, %s18
      %p255 = scmp.lt.s32.totalorder %s254, 15
      %s256 = scalar_select %p255, %s254, 15
      %s257 = smul.addr %s256, 8
      %s258 = scalar_lea.vmem %s5, %s257
      %p259 = pneg %p180
      %p260 = pneg %p177
      %p261 = scmp.lt.s32.totalorder %s18, 1
      %s262 = scalar_select %p261, %s18, 1
      %s263 = scalar_lea.vmem %s6, %s262
      %p264 = scmp.lt.s32.totalorder %s18, 1
      %s265 = scalar_select %p264, %s18, 1
      %s266 = smul.addr %s265, 20
      %s267 = smul.addr %s266, 8
      %s268 = scalar_lea.vmem %s0, %s267
      %s269 = smul.u32 8, %s18
      %p270 = scmp.lt.s32.totalorder %s269, 15
      %s271 = scalar_select %p270, %s269, 15
      %s272 = smul.addr %s271, 8
      %s273 = scalar_lea.vmem %s2, %s272
      %s274 = smul.u32 8, %s18
      %s275 = smul.u32 8, %s18
      %p276 = scmp.lt.s32.totalorder %s275, 15
      %s277 = scalar_select %p276, %s275, 15
      %s278 = smul.addr %s277, 8
      %s279 = scalar_lea.vmem %s5, %s278
      %s280 = smul.u32 8, %s18
      %p281 = scmp.lt.s32.totalorder %s18, 1
      %s282 = scalar_select %p281, %s18, 1
      %s283 = scalar_lea.vmem %s6, %s282
      %v284 = vld [vmem:[%s268] sm:$0xff]
      %v285 = vld [vmem:[%s268 + $0x10] sm:$0xff]
      %v286 = vld [vmem:[%s268 + $0x20] sm:$0xff]
      %v287 = vld [vmem:[%s268 + $0x30] sm:$0xff]
      %v288 = vld [vmem:[%s268 + $0x40] sm:$0xff]
      %v289 = vld [vmem:[%s268 + $0x50] sm:$0xff]
      %v290 = vld [vmem:[%s268 + $0x60] sm:$0xff]
      %v291 = vld [vmem:[%s268 + $0x70] sm:$0xff]
      %v292 = vld [vmem:[%s1] sm:$0xff]
      %v293 = vld [vmem:[%s1 + $0x8] sm:$0xff]
      %v294 = vld [vmem:[%s268 + $0x1] sm:$0xff]
      %v295 = vld [vmem:[%s268 + $0x11] sm:$0xff]
      %v296 = vld [vmem:[%s268 + $0x21] sm:$0xff]
      %v297 = vld [vmem:[%s268 + $0x31] sm:$0xff]
      %v298 = vld [vmem:[%s268 + $0x41] sm:$0xff]
      %v299 = vld [vmem:[%s268 + $0x51] sm:$0xff]
      %v300 = vld [vmem:[%s268 + $0x61] sm:$0xff]
      %v301 = vld [vmem:[%s268 + $0x71] sm:$0xff]
      %s302 = scalar_lea.vmem %s1, 16
      %v303 = vld [vmem:[%s302] sm:$0xff]
      %v304 = vld [vmem:[%s302 + $0x8] sm:$0xff]
      %vm305 = vcmask 130048
      %v307 = vsel %vm305, %v294, 0
      %v310 = vsel %vm305, %v295, 0
      %v313 = vsel %vm305, %v296, 0
      %v316 = vsel %vm305, %v297, 0
      %v319 = vsel %vm305, %v298, 0
      %v322 = vsel %vm305, %v299, 0
      %v325 = vsel %vm305, %v300, 0
      %v328 = vsel %vm305, %v301, 0
      %330 = vmatprep.subr.mxu0 0.0
      %331 = vmatpush1.msra.mxu0 0.0
      %332 = vmatprep.subr.mxu0 0.0
      %333 = vmatpush1.msra.mxu0 0.0
      %334 = vmatprep.subr.mxu0 0.0
      %335 = vmatpush1.msra.mxu0 0.0
      %336 = vmatprep.subr.mxu0 0.0
      %337 = vmatpush1.msra.mxu0 0.0
      %338 = vmatprep.subr.mxu0 0.0
      %339 = vmatpush1.msra.mxu0 0.0
      %340 = vmatprep.subr.mxu0 0.0
      %341 = vmatpush1.msra.mxu0 0.0
      %342 = vmatprep.subr.mxu0 0.0
      %343 = vmatpush1.msra.mxu0 0.0
      %344 = vmatprep.subr.mxu0 0.0
      %345 = vmatpush1.msra.mxu0 0.0
      %346 = vmatprep.subr.mxu0 0.0
      %347 = vmatpush1.msra.mxu0 0.0
      %348 = vmatprep.subr.mxu0 0.0
      %349 = vmatpush1.msra.mxu0 0.0
      %350 = vmatprep.subr.mxu0 0.0
      %351 = vmatpush1.msra.mxu0 0.0
      %352 = vmatprep.subr.mxu0 0.0
      %353 = vmatpush1.msra.mxu0 0.0
      %354 = vmatprep.subr.mxu0 0.0
      %355 = vmatpush1.msra.mxu0 0.0
      %356 = vmatprep.subr.mxu0 0.0
      %357 = vmatpush1.msra.mxu0 0.0
      %358 = vmatprep.subr.mxu0 0.0
      %359 = vmatpush1.msra.mxu0 %v304
      %360 = vmatprep.subr.mxu0 0.0
      %361 = vmatpush1.msra.mxu0 %v303
      %362 = vmatprep.subr.mxu0 0.0
      %363 = vmatpush2.msra.mxu0 0.0
      %364 = vmatprep.subr.mxu0 0.0
      %365 = vmatpush2.msra.mxu0 0.0
      %366 = vmatprep.subr.mxu0 0.0
      %367 = vmatpush2.msra.mxu0 0.0
      %368 = vmatprep.subr.mxu0 0.0
      %369 = vmatpush2.msra.mxu0 0.0
      %370 = vmatprep.subr.mxu0 0.0
      %371 = vmatpush2.msra.mxu0 0.0
      %372 = vmatprep.subr.mxu0 0.0
      %373 = vmatpush2.msra.mxu0 0.0
      %374 = vmatprep.subr.mxu0 0.0
      %375 = vmatpush2.msra.mxu0 0.0
      %376 = vmatprep.subr.mxu0 0.0
      %377 = vmatpush2.msra.mxu0 0.0
      %378 = vmatprep.subr.mxu0 0.0
      %379 = vmatpush2.msra.mxu0 0.0
      %380 = vmatprep.subr.mxu0 0.0
      %381 = vmatpush2.msra.mxu0 0.0
      %382 = vmatprep.subr.mxu0 0.0
      %383 = vmatpush2.msra.mxu0 0.0
      %384 = vmatprep.subr.mxu0 0.0
      %385 = vmatpush2.msra.mxu0 0.0
      %386 = vmatprep.subr.mxu0 0.0
      %387 = vmatpush2.msra.mxu0 0.0
      %388 = vmatprep.subr.mxu0 0.0
      %389 = vmatpush2.msra.mxu0 0.0
      %390 = vmatprep.subr.mxu0 0.0
      %391 = vmatpush2.msra.mxu0 0.0
      %392 = vmatprep.subr.mxu0 0.0
      %393 = vmatpush2.msra.mxu0 0.0
      %394 = vmatprep.mubr.f32.mxu0 0.0
      %395 = vmatmul.mubr.f32.gmra.mxu0 %v307
      %v396 = vpop.f32.mrf.mxu0
      %v397 = vadd.f32 0.0, %v396
      %v398 = vpop.f32.mrf.mxu0
      %399 = vmatprep.mubr.f32.mxu0 0.0
      %400 = vmatmul.mubr.f32.gmra.mxu0 %v310
      %v401 = vpop.f32.mrf.mxu0
      %v402 = vadd.f32 0.0, %v401
      %v403 = vpop.f32.mrf.mxu0
      %404 = vmatprep.mubr.f32.mxu0 0.0
      %405 = vmatmul.mubr.f32.gmra.mxu0 %v313
      %v406 = vpop.f32.mrf.mxu0
      %v407 = vadd.f32 0.0, %v406
      %v408 = vpop.f32.mrf.mxu0
      %409 = vmatprep.mubr.f32.mxu0 0.0
      %410 = vmatmul.mubr.f32.gmra.mxu0 %v316
      %v411 = vpop.f32.mrf.mxu0
      %v412 = vadd.f32 0.0, %v411
      %v413 = vpop.f32.mrf.mxu0
      %414 = vmatprep.mubr.f32.mxu0 0.0
      %415 = vmatmul.mubr.f32.gmra.mxu0 %v319
      %v416 = vpop.f32.mrf.mxu0
      %v417 = vadd.f32 0.0, %v416
      %v418 = vpop.f32.mrf.mxu0
      %419 = vmatprep.mubr.f32.mxu0 0.0
      %420 = vmatmul.mubr.f32.gmra.mxu0 %v322
      %v421 = vpop.f32.mrf.mxu0
      %v422 = vadd.f32 0.0, %v421
      %v423 = vpop.f32.mrf.mxu0
      %424 = vmatprep.mubr.f32.mxu0 0.0
      %425 = vmatmul.mubr.f32.gmra.mxu0 %v325
      %v426 = vpop.f32.mrf.mxu0
      %v427 = vadd.f32 0.0, %v426
      %v428 = vpop.f32.mrf.mxu0
      %429 = vmatprep.mubr.f32.mxu0 0.0
      %430 = vmatmul.mubr.f32.gmra.mxu0 %v328
      %v431 = vpop.f32.mrf.mxu0
      %v432 = vadd.f32 0.0, %v431
      %v433 = vpop.f32.mrf.mxu0
      %434 = vdwg.mxu0
      %v436 = vsel %vm305, %v284, 0
      %v439 = vsel %vm305, %v285, 0
      %v442 = vsel %vm305, %v286, 0
      %v445 = vsel %vm305, %v287, 0
      %v448 = vsel %vm305, %v288, 0
      %v451 = vsel %vm305, %v289, 0
      %v454 = vsel %vm305, %v290, 0
      %v457 = vsel %vm305, %v291, 0
      %459 = vmatprep.subr.mxu0 0.0
      %460 = vmatpush1.msra.mxu0 0.0
      %461 = vmatprep.subr.mxu0 0.0
      %462 = vmatpush1.msra.mxu0 0.0
      %463 = vmatprep.subr.mxu0 0.0
      %464 = vmatpush1.msra.mxu0 0.0
      %465 = vmatprep.subr.mxu0 0.0
      %466 = vmatpush1.msra.mxu0 0.0
      %467 = vmatprep.subr.mxu0 0.0
      %468 = vmatpush1.msra.mxu0 0.0
      %469 = vmatprep.subr.mxu0 0.0
      %470 = vmatpush1.msra.mxu0 0.0
      %471 = vmatprep.subr.mxu0 0.0
      %472 = vmatpush1.msra.mxu0 0.0
      %473 = vmatprep.subr.mxu0 0.0
      %474 = vmatpush1.msra.mxu0 0.0
      %475 = vmatprep.subr.mxu0 0.0
      %476 = vmatpush1.msra.mxu0 0.0
      %477 = vmatprep.subr.mxu0 0.0
      %478 = vmatpush1.msra.mxu0 0.0
      %479 = vmatprep.subr.mxu0 0.0
      %480 = vmatpush1.msra.mxu0 0.0
      %481 = vmatprep.subr.mxu0 0.0
      %482 = vmatpush1.msra.mxu0 0.0
      %483 = vmatprep.subr.mxu0 0.0
      %484 = vmatpush1.msra.mxu0 0.0
      %485 = vmatprep.subr.mxu0 0.0
      %486 = vmatpush1.msra.mxu0 0.0
      %487 = vmatprep.subr.mxu0 0.0
      %488 = vmatpush1.msra.mxu0 %v293
      %489 = vmatprep.subr.mxu0 0.0
      %490 = vmatpush1.msra.mxu0 %v292
      %491 = vmatprep.subr.mxu0 0.0
      %492 = vmatpush2.msra.mxu0 0.0
      %493 = vmatprep.subr.mxu0 0.0
      %494 = vmatpush2.msra.mxu0 0.0
      %495 = vmatprep.subr.mxu0 0.0
      %496 = vmatpush2.msra.mxu0 0.0
      %497 = vmatprep.subr.mxu0 0.0
      %498 = vmatpush2.msra.mxu0 0.0
      %499 = vmatprep.subr.mxu0 0.0
      %500 = vmatpush2.msra.mxu0 0.0
      %501 = vmatprep.subr.mxu0 0.0
      %502 = vmatpush2.msra.mxu0 0.0
      %503 = vmatprep.subr.mxu0 0.0
      %504 = vmatpush2.msra.mxu0 0.0
      %505 = vmatprep.subr.mxu0 0.0
      %506 = vmatpush2.msra.mxu0 0.0
      %507 = vmatprep.subr.mxu0 0.0
      %508 = vmatpush2.msra.mxu0 0.0
      %509 = vmatprep.subr.mxu0 0.0
      %510 = vmatpush2.msra.mxu0 0.0
      %511 = vmatprep.subr.mxu0 0.0
      %512 = vmatpush2.msra.mxu0 0.0
      %513 = vmatprep.subr.mxu0 0.0
      %514 = vmatpush2.msra.mxu0 0.0
      %515 = vmatprep.subr.mxu0 0.0
      %516 = vmatpush2.msra.mxu0 0.0
      %517 = vmatprep.subr.mxu0 0.0
      %518 = vmatpush2.msra.mxu0 0.0
      %519 = vmatprep.subr.mxu0 0.0
      %520 = vmatpush2.msra.mxu0 0.0
      %521 = vmatprep.subr.mxu0 0.0
      %522 = vmatpush2.msra.mxu0 0.0
      %523 = vmatprep.mubr.f32.mxu0 0.0
      %524 = vmatmul.mubr.f32.gmra.mxu0 %v436
      %v525 = vpop.f32.mrf.mxu0
      %v526 = vadd.f32 %v397, %v525
      %v527 = vpop.f32.mrf.mxu0
      %528 = vmatprep.mubr.f32.mxu0 0.0
      %529 = vmatmul.mubr.f32.gmra.mxu0 %v439
      %v530 = vpop.f32.mrf.mxu0
      %v531 = vadd.f32 %v402, %v530
      %v532 = vpop.f32.mrf.mxu0
      %533 = vmatprep.mubr.f32.mxu0 0.0
      %534 = vmatmul.mubr.f32.gmra.mxu0 %v442
      %v535 = vpop.f32.mrf.mxu0
      %v536 = vadd.f32 %v407, %v535
      %v537 = vpop.f32.mrf.mxu0
      %538 = vmatprep.mubr.f32.mxu0 0.0
      %539 = vmatmul.mubr.f32.gmra.mxu0 %v445
      %v540 = vpop.f32.mrf.mxu0
      %v541 = vadd.f32 %v412, %v540
      %v542 = vpop.f32.mrf.mxu0
      %543 = vmatprep.mubr.f32.mxu0 0.0
      %544 = vmatmul.mubr.f32.gmra.mxu0 %v448
      %v545 = vpop.f32.mrf.mxu0
      %v546 = vadd.f32 %v417, %v545
      %v547 = vpop.f32.mrf.mxu0
      %548 = vmatprep.mubr.f32.mxu0 0.0
      %549 = vmatmul.mubr.f32.gmra.mxu0 %v451
      %v550 = vpop.f32.mrf.mxu0
      %v551 = vadd.f32 %v422, %v550
      %v552 = vpop.f32.mrf.mxu0
      %553 = vmatprep.mubr.f32.mxu0 0.0
      %554 = vmatmul.mubr.f32.gmra.mxu0 %v454
      %v555 = vpop.f32.mrf.mxu0
      %v556 = vadd.f32 %v427, %v555
      %v557 = vpop.f32.mrf.mxu0
      %558 = vmatprep.mubr.f32.mxu0 0.0
      %559 = vmatmul.mubr.f32.gmra.mxu0 %v457
      %v560 = vpop.f32.mrf.mxu0
      %v561 = vadd.f32 %v432, %v560
      %v562 = vpop.f32.mrf.mxu0
      %563 = vdwg.mxu0
      %v564 = vld [vmem:[%s268 + $0x2] sm:$0xff]
      %v565 = vld [vmem:[%s268 + $0x12] sm:$0xff]
      %v566 = vld [vmem:[%s268 + $0x22] sm:$0xff]
      %v567 = vld [vmem:[%s268 + $0x32] sm:$0xff]
      %v568 = vld [vmem:[%s268 + $0x42] sm:$0xff]
      %v569 = vld [vmem:[%s268 + $0x52] sm:$0xff]
      %v570 = vld [vmem:[%s268 + $0x62] sm:$0xff]
      %v571 = vld [vmem:[%s268 + $0x72] sm:$0xff]
      %s572 = scalar_lea.vmem %s1, 32
      %v573 = vld [vmem:[%s572] sm:$0xff]
      %v574 = vld [vmem:[%s572 + $0x8] sm:$0xff]
      %v576 = vsel %vm305, %v564, 0
      %v579 = vsel %vm305, %v565, 0
      %v582 = vsel %vm305, %v566, 0
      %v585 = vsel %vm305, %v567, 0
      %v588 = vsel %vm305, %v568, 0
      %v591 = vsel %vm305, %v569, 0
      %v594 = vsel %vm305, %v570, 0
      %v597 = vsel %vm305, %v571, 0
      %599 = vmatprep.subr.mxu0 0.0
      %600 = vmatpush1.msra.mxu0 0.0
      %601 = vmatprep.subr.mxu0 0.0
      %602 = vmatpush1.msra.mxu0 0.0
      %603 = vmatprep.subr.mxu0 0.0
      %604 = vmatpush1.msra.mxu0 0.0
      %605 = vmatprep.subr.mxu0 0.0
      %606 = vmatpush1.msra.mxu0 0.0
      %607 = vmatprep.subr.mxu0 0.0
      %608 = vmatpush1.msra.mxu0 0.0
      %609 = vmatprep.subr.mxu0 0.0
      %610 = vmatpush1.msra.mxu0 0.0
      %611 = vmatprep.subr.mxu0 0.0
      %612 = vmatpush1.msra.mxu0 0.0
      %613 = vmatprep.subr.mxu0 0.0
      %614 = vmatpush1.msra.mxu0 0.0
      %615 = vmatprep.subr.mxu0 0.0
      %616 = vmatpush1.msra.mxu0 0.0
      %617 = vmatprep.subr.mxu0 0.0
      %618 = vmatpush1.msra.mxu0 0.0
      %619 = vmatprep.subr.mxu0 0.0
      %620 = vmatpush1.msra.mxu0 0.0
      %621 = vmatprep.subr.mxu0 0.0
      %622 = vmatpush1.msra.mxu0 0.0
      %623 = vmatprep.subr.mxu0 0.0
      %624 = vmatpush1.msra.mxu0 0.0
      %625 = vmatprep.subr.mxu0 0.0
      %626 = vmatpush1.msra.mxu0 0.0
      %627 = vmatprep.subr.mxu0 0.0
      %628 = vmatpush1.msra.mxu0 %v574
      %629 = vmatprep.subr.mxu0 0.0
      %630 = vmatpush1.msra.mxu0 %v573
      %631 = vmatprep.subr.mxu0 0.0
      %632 = vmatpush2.msra.mxu0 0.0
      %633 = vmatprep.subr.mxu0 0.0
      %634 = vmatpush2.msra.mxu0 0.0
      %635 = vmatprep.subr.mxu0 0.0
      %636 = vmatpush2.msra.mxu0 0.0
      %637 = vmatprep.subr.mxu0 0.0
      %638 = vmatpush2.msra.mxu0 0.0
      %639 = vmatprep.subr.mxu0 0.0
      %640 = vmatpush2.msra.mxu0 0.0
      %641 = vmatprep.subr.mxu0 0.0
      %642 = vmatpush2.msra.mxu0 0.0
      %643 = vmatprep.subr.mxu0 0.0
      %644 = vmatpush2.msra.mxu0 0.0
      %645 = vmatprep.subr.mxu0 0.0
      %646 = vmatpush2.msra.mxu0 0.0
      %647 = vmatprep.subr.mxu0 0.0
      %648 = vmatpush2.msra.mxu0 0.0
      %649 = vmatprep.subr.mxu0 0.0
      %650 = vmatpush2.msra.mxu0 0.0
      %651 = vmatprep.subr.mxu0 0.0
      %652 = vmatpush2.msra.mxu0 0.0
      %653 = vmatprep.subr.mxu0 0.0
      %654 = vmatpush2.msra.mxu0 0.0
      %655 = vmatprep.subr.mxu0 0.0
      %656 = vmatpush2.msra.mxu0 0.0
      %657 = vmatprep.subr.mxu0 0.0
      %658 = vmatpush2.msra.mxu0 0.0
      %659 = vmatprep.subr.mxu0 0.0
      %660 = vmatpush2.msra.mxu0 0.0
      %661 = vmatprep.subr.mxu0 0.0
      %662 = vmatpush2.msra.mxu0 0.0
      %663 = vmatprep.mubr.f32.mxu0 0.0
      %664 = vmatmul.mubr.f32.gmra.mxu0 %v576
      %v665 = vpop.f32.mrf.mxu0
      %v666 = vadd.f32 0.0, %v665
      %v667 = vpop.f32.mrf.mxu0
      %668 = vmatprep.mubr.f32.mxu0 0.0
      %669 = vmatmul.mubr.f32.gmra.mxu0 %v579
      %v670 = vpop.f32.mrf.mxu0
      %v671 = vadd.f32 0.0, %v670
      %v672 = vpop.f32.mrf.mxu0
      %673 = vmatprep.mubr.f32.mxu0 0.0
      %674 = vmatmul.mubr.f32.gmra.mxu0 %v582
      %v675 = vpop.f32.mrf.mxu0
      %v676 = vadd.f32 0.0, %v675
      %v677 = vpop.f32.mrf.mxu0
      %678 = vmatprep.mubr.f32.mxu0 0.0
      %679 = vmatmul.mubr.f32.gmra.mxu0 %v585
      %v680 = vpop.f32.mrf.mxu0
      %v681 = vadd.f32 0.0, %v680
      %v682 = vpop.f32.mrf.mxu0
      %683 = vmatprep.mubr.f32.mxu0 0.0
      %684 = vmatmul.mubr.f32.gmra.mxu0 %v588
      %v685 = vpop.f32.mrf.mxu0
      %v686 = vadd.f32 0.0, %v685
      %v687 = vpop.f32.mrf.mxu0
      %688 = vmatprep.mubr.f32.mxu0 0.0
      %689 = vmatmul.mubr.f32.gmra.mxu0 %v591
      %v690 = vpop.f32.mrf.mxu0
      %v691 = vadd.f32 0.0, %v690
      %v692 = vpop.f32.mrf.mxu0
      %693 = vmatprep.mubr.f32.mxu0 0.0
      %694 = vmatmul.mubr.f32.gmra.mxu0 %v594
      %v695 = vpop.f32.mrf.mxu0
      %v696 = vadd.f32 0.0, %v695
      %v697 = vpop.f32.mrf.mxu0
      %698 = vmatprep.mubr.f32.mxu0 0.0
      %699 = vmatmul.mubr.f32.gmra.mxu0 %v597
      %v700 = vpop.f32.mrf.mxu0
      %v701 = vadd.f32 0.0, %v700
      %v702 = vpop.f32.mrf.mxu0
      %703 = vdwg.mxu0
      %v704 = vadd.f32 %v526, %v666
      %v705 = vadd.f32 %v531, %v671
      %v706 = vadd.f32 %v536, %v676
      %v707 = vadd.f32 %v541, %v681
      %v708 = vadd.f32 %v546, %v686
      %v709 = vadd.f32 %v551, %v691
      %v710 = vadd.f32 %v556, %v696
      %v711 = vadd.f32 %v561, %v701
      %s712 = scalar_lea.vmem %s268, 16
      %v713 = vld [vmem:[%s712] sm:$0xff]
      %v714 = vld [vmem:[%s712 + $0x10] sm:$0xff]
      %v715 = vld [vmem:[%s712 + $0x20] sm:$0xff]
      %v716 = vld [vmem:[%s712 + $0x30] sm:$0xff]
      %v717 = vld [vmem:[%s712 + $0x40] sm:$0xff]
      %v718 = vld [vmem:[%s712 + $0x50] sm:$0xff]
      %v719 = vld [vmem:[%s712 + $0x60] sm:$0xff]
      %v720 = vld [vmem:[%s712 + $0x70] sm:$0xff]
      %s721 = scalar_lea.vmem %s1, 48
      %v722 = vld [vmem:[%s721] sm:$0xff]
      %v723 = vld [vmem:[%s721 + $0x8] sm:$0xff]
      %v725 = vsel %vm305, %v713, 0
      %v728 = vsel %vm305, %v714, 0
      %v731 = vsel %vm305, %v715, 0
      %v734 = vsel %vm305, %v716, 0
      %v737 = vsel %vm305, %v717, 0
      %v740 = vsel %vm305, %v718, 0
      %v743 = vsel %vm305, %v719, 0
      %v746 = vsel %vm305, %v720, 0
      %748 = vmatprep.subr.mxu0 0.0
      %749 = vmatpush1.msra.mxu0 0.0
      %750 = vmatprep.subr.mxu0 0.0
      %751 = vmatpush1.msra.mxu0 0.0
      %752 = vmatprep.subr.mxu0 0.0
      %753 = vmatpush1.msra.mxu0 0.0
      %754 = vmatprep.subr.mxu0 0.0
      %755 = vmatpush1.msra.mxu0 0.0
      %756 = vmatprep.subr.mxu0 0.0
      %757 = vmatpush1.msra.mxu0 0.0
      %758 = vmatprep.subr.mxu0 0.0
      %759 = vmatpush1.msra.mxu0 0.0
      %760 = vmatprep.subr.mxu0 0.0
      %761 = vmatpush1.msra.mxu0 0.0
      %762 = vmatprep.subr.mxu0 0.0
      %763 = vmatpush1.msra.mxu0 0.0
      %764 = vmatprep.subr.mxu0 0.0
      %765 = vmatpush1.msra.mxu0 0.0
      %766 = vmatprep.subr.mxu0 0.0
      %767 = vmatpush1.msra.mxu0 0.0
      %768 = vmatprep.subr.mxu0 0.0
      %769 = vmatpush1.msra.mxu0 0.0
      %770 = vmatprep.subr.mxu0 0.0
      %771 = vmatpush1.msra.mxu0 0.0
      %772 = vmatprep.subr.mxu0 0.0
      %773 = vmatpush1.msra.mxu0 0.0
      %774 = vmatprep.subr.mxu0 0.0
      %775 = vmatpush1.msra.mxu0 0.0
      %776 = vmatprep.subr.mxu0 0.0
      %777 = vmatpush1.msra.mxu0 %v723
      %778 = vmatprep.subr.mxu0 0.0
      %779 = vmatpush1.msra.mxu0 %v722
      %780 = vmatprep.subr.mxu0 0.0
      %781 = vmatpush2.msra.mxu0 0.0
      %782 = vmatprep.subr.mxu0 0.0
      %783 = vmatpush2.msra.mxu0 0.0
      %784 = vmatprep.subr.mxu0 0.0
      %785 = vmatpush2.msra.mxu0 0.0
      %786 = vmatprep.subr.mxu0 0.0
      %787 = vmatpush2.msra.mxu0 0.0
      %788 = vmatprep.subr.mxu0 0.0
      %789 = vmatpush2.msra.mxu0 0.0
      %790 = vmatprep.subr.mxu0 0.0
      %791 = vmatpush2.msra.mxu0 0.0
      %792 = vmatprep.subr.mxu0 0.0
      %793 = vmatpush2.msra.mxu0 0.0
      %794 = vmatprep.subr.mxu0 0.0
      %795 = vmatpush2.msra.mxu0 0.0
      %796 = vmatprep.subr.mxu0 0.0
      %797 = vmatpush2.msra.mxu0 0.0
      %798 = vmatprep.subr.mxu0 0.0
      %799 = vmatpush2.msra.mxu0 0.0
      %800 = vmatprep.subr.mxu0 0.0
      %801 = vmatpush2.msra.mxu0 0.0
      %802 = vmatprep.subr.mxu0 0.0
      %803 = vmatpush2.msra.mxu0 0.0
      %804 = vmatprep.subr.mxu0 0.0
      %805 = vmatpush2.msra.mxu0 0.0
      %806 = vmatprep.subr.mxu0 0.0
      %807 = vmatpush2.msra.mxu0 0.0
      %808 = vmatprep.subr.mxu0 0.0
      %809 = vmatpush2.msra.mxu0 0.0
      %810 = vmatprep.subr.mxu0 0.0
      %811 = vmatpush2.msra.mxu0 0.0
      %812 = vmatprep.mubr.f32.mxu0 0.0
      %813 = vmatmul.mubr.f32.gmra.mxu0 %v725
      %v814 = vpop.f32.mrf.mxu0
      %v815 = vadd.f32 0.0, %v814
      %v816 = vpop.f32.mrf.mxu0
      %817 = vmatprep.mubr.f32.mxu0 0.0
      %818 = vmatmul.mubr.f32.gmra.mxu0 %v728
      %v819 = vpop.f32.mrf.mxu0
      %v820 = vadd.f32 0.0, %v819
      %v821 = vpop.f32.mrf.mxu0
      %822 = vmatprep.mubr.f32.mxu0 0.0
      %823 = vmatmul.mubr.f32.gmra.mxu0 %v731
      %v824 = vpop.f32.mrf.mxu0
      %v825 = vadd.f32 0.0, %v824
      %v826 = vpop.f32.mrf.mxu0
      %827 = vmatprep.mubr.f32.mxu0 0.0
      %828 = vmatmul.mubr.f32.gmra.mxu0 %v734
      %v829 = vpop.f32.mrf.mxu0
      %v830 = vadd.f32 0.0, %v829
      %v831 = vpop.f32.mrf.mxu0
      %832 = vmatprep.mubr.f32.mxu0 0.0
      %833 = vmatmul.mubr.f32.gmra.mxu0 %v737
      %v834 = vpop.f32.mrf.mxu0
      %v835 = vadd.f32 0.0, %v834
      %v836 = vpop.f32.mrf.mxu0
      %837 = vmatprep.mubr.f32.mxu0 0.0
      %838 = vmatmul.mubr.f32.gmra.mxu0 %v740
      %v839 = vpop.f32.mrf.mxu0
      %v840 = vadd.f32 0.0, %v839
      %v841 = vpop.f32.mrf.mxu0
      %842 = vmatprep.mubr.f32.mxu0 0.0
      %843 = vmatmul.mubr.f32.gmra.mxu0 %v743
      %v844 = vpop.f32.mrf.mxu0
      %v845 = vadd.f32 0.0, %v844
      %v846 = vpop.f32.mrf.mxu0
      %847 = vmatprep.mubr.f32.mxu0 0.0
      %848 = vmatmul.mubr.f32.gmra.mxu0 %v746
      %v849 = vpop.f32.mrf.mxu0
      %v850 = vadd.f32 0.0, %v849
      %v851 = vpop.f32.mrf.mxu0
      %852 = vdwg.mxu0
      %v853 = vadd.f32 %v704, %v815
      %v854 = vadd.f32 %v705, %v820
      %v855 = vadd.f32 %v706, %v825
      %v856 = vadd.f32 %v707, %v830
      %v857 = vadd.f32 %v708, %v835
      %v858 = vadd.f32 %v709, %v840
      %v859 = vadd.f32 %v710, %v845
      %v860 = vadd.f32 %v711, %v850
      %v861 = vld [vmem:[%s712 + $0x1] sm:$0xff]
      %v862 = vld [vmem:[%s712 + $0x11] sm:$0xff]
      %v863 = vld [vmem:[%s712 + $0x21] sm:$0xff]
      %v864 = vld [vmem:[%s712 + $0x31] sm:$0xff]
      %v865 = vld [vmem:[%s712 + $0x41] sm:$0xff]
      %v866 = vld [vmem:[%s712 + $0x51] sm:$0xff]
      %v867 = vld [vmem:[%s712 + $0x61] sm:$0xff]
      %v868 = vld [vmem:[%s712 + $0x71] sm:$0xff]
      %s869 = scalar_lea.vmem %s1, 64
      %v870 = vld [vmem:[%s869] sm:$0xff]
      %v871 = vld [vmem:[%s869 + $0x8] sm:$0xff]
      %v873 = vsel %vm305, %v861, 0
      %v876 = vsel %vm305, %v862, 0
      %v879 = vsel %vm305, %v863, 0
      %v882 = vsel %vm305, %v864, 0
      %v885 = vsel %vm305, %v865, 0
      %v888 = vsel %vm305, %v866, 0
      %v891 = vsel %vm305, %v867, 0
      %v894 = vsel %vm305, %v868, 0
      %896 = vmatprep.subr.mxu0 0.0
      %897 = vmatpush1.msra.mxu0 0.0
      %898 = vmatprep.subr.mxu0 0.0
      %899 = vmatpush1.msra.mxu0 0.0
      %900 = vmatprep.subr.mxu0 0.0
      %901 = vmatpush1.msra.mxu0 0.0
      %902 = vmatprep.subr.mxu0 0.0
      %903 = vmatpush1.msra.mxu0 0.0
      %904 = vmatprep.subr.mxu0 0.0
      %905 = vmatpush1.msra.mxu0 0.0
      %906 = vmatprep.subr.mxu0 0.0
      %907 = vmatpush1.msra.mxu0 0.0
      %908 = vmatprep.subr.mxu0 0.0
      %909 = vmatpush1.msra.mxu0 0.0
      %910 = vmatprep.subr.mxu0 0.0
      %911 = vmatpush1.msra.mxu0 0.0
      %912 = vmatprep.subr.mxu0 0.0
      %913 = vmatpush1.msra.mxu0 0.0
      %914 = vmatprep.subr.mxu0 0.0
      %915 = vmatpush1.msra.mxu0 0.0
      %916 = vmatprep.subr.mxu0 0.0
      %917 = vmatpush1.msra.mxu0 0.0
      %918 = vmatprep.subr.mxu0 0.0
      %919 = vmatpush1.msra.mxu0 0.0
      %920 = vmatprep.subr.mxu0 0.0
      %921 = vmatpush1.msra.mxu0 0.0
      %922 = vmatprep.subr.mxu0 0.0
      %923 = vmatpush1.msra.mxu0 0.0
      %924 = vmatprep.subr.mxu0 0.0
      %925 = vmatpush1.msra.mxu0 %v871
      %926 = vmatprep.subr.mxu0 0.0
      %927 = vmatpush1.msra.mxu0 %v870
      %928 = vmatprep.subr.mxu0 0.0
      %929 = vmatpush2.msra.mxu0 0.0
      %930 = vmatprep.subr.mxu0 0.0
      %931 = vmatpush2.msra.mxu0 0.0
      %932 = vmatprep.subr.mxu0 0.0
      %933 = vmatpush2.msra.mxu0 0.0
      %934 = vmatprep.subr.mxu0 0.0
      %935 = vmatpush2.msra.mxu0 0.0
      %936 = vmatprep.subr.mxu0 0.0
      %937 = vmatpush2.msra.mxu0 0.0
      %938 = vmatprep.subr.mxu0 0.0
      %939 = vmatpush2.msra.mxu0 0.0
      %940 = vmatprep.subr.mxu0 0.0
      %941 = vmatpush2.msra.mxu0 0.0
      %942 = vmatprep.subr.mxu0 0.0
      %943 = vmatpush2.msra.mxu0 0.0
      %944 = vmatprep.subr.mxu0 0.0
      %945 = vmatpush2.msra.mxu0 0.0
      %946 = vmatprep.subr.mxu0 0.0
      %947 = vmatpush2.msra.mxu0 0.0
      %948 = vmatprep.subr.mxu0 0.0
      %949 = vmatpush2.msra.mxu0 0.0
      %950 = vmatprep.subr.mxu0 0.0
      %951 = vmatpush2.msra.mxu0 0.0
      %952 = vmatprep.subr.mxu0 0.0
      %953 = vmatpush2.msra.mxu0 0.0
      %954 = vmatprep.subr.mxu0 0.0
      %955 = vmatpush2.msra.mxu0 0.0
      %956 = vmatprep.subr.mxu0 0.0
      %957 = vmatpush2.msra.mxu0 0.0
      %958 = vmatprep.subr.mxu0 0.0
      %959 = vmatpush2.msra.mxu0 0.0
      %960 = vmatprep.mubr.f32.mxu0 0.0
      %961 = vmatmul.mubr.f32.gmra.mxu0 %v873
      %v962 = vpop.f32.mrf.mxu0
      %v963 = vadd.f32 0.0, %v962
      %v964 = vpop.f32.mrf.mxu0
      %965 = vmatprep.mubr.f32.mxu0 0.0
      %966 = vmatmul.mubr.f32.gmra.mxu0 %v876
      %v967 = vpop.f32.mrf.mxu0
      %v968 = vadd.f32 0.0, %v967
      %v969 = vpop.f32.mrf.mxu0
      %970 = vmatprep.mubr.f32.mxu0 0.0
      %971 = vmatmul.mubr.f32.gmra.mxu0 %v879
      %v972 = vpop.f32.mrf.mxu0
      %v973 = vadd.f32 0.0, %v972
      %v974 = vpop.f32.mrf.mxu0
      %975 = vmatprep.mubr.f32.mxu0 0.0
      %976 = vmatmul.mubr.f32.gmra.mxu0 %v882
      %v977 = vpop.f32.mrf.mxu0
      %v978 = vadd.f32 0.0, %v977
      %v979 = vpop.f32.mrf.mxu0
      %980 = vmatprep.mubr.f32.mxu0 0.0
      %981 = vmatmul.mubr.f32.gmra.mxu0 %v885
      %v982 = vpop.f32.mrf.mxu0
      %v983 = vadd.f32 0.0, %v982
      %v984 = vpop.f32.mrf.mxu0
      %985 = vmatprep.mubr.f32.mxu0 0.0
      %986 = vmatmul.mubr.f32.gmra.mxu0 %v888
      %v987 = vpop.f32.mrf.mxu0
      %v988 = vadd.f32 0.0, %v987
      %v989 = vpop.f32.mrf.mxu0
      %990 = vmatprep.mubr.f32.mxu0 0.0
      %991 = vmatmul.mubr.f32.gmra.mxu0 %v891
      %v992 = vpop.f32.mrf.mxu0
      %v993 = vadd.f32 0.0, %v992
      %v994 = vpop.f32.mrf.mxu0
      %995 = vmatprep.mubr.f32.mxu0 0.0
      %996 = vmatmul.mubr.f32.gmra.mxu0 %v894
      %v997 = vpop.f32.mrf.mxu0
      %v998 = vadd.f32 0.0, %v997
      %v999 = vpop.f32.mrf.mxu0
      %1000 = vdwg.mxu0
      %v1001 = vadd.f32 %v853, %v963
      %v1002 = vadd.f32 %v854, %v968
      %v1003 = vadd.f32 %v855, %v973
      %v1004 = vadd.f32 %v856, %v978
      %v1005 = vadd.f32 %v857, %v983
      %v1006 = vadd.f32 %v858, %v988
      %v1007 = vadd.f32 %v859, %v993
      %v1008 = vadd.f32 %v860, %v998
      %v1009 = vld [vmem:[%s712 + $0x2] sm:$0xff]
      %v1010 = vld [vmem:[%s712 + $0x12] sm:$0xff]
      %v1011 = vld [vmem:[%s712 + $0x22] sm:$0xff]
      %v1012 = vld [vmem:[%s712 + $0x32] sm:$0xff]
      %v1013 = vld [vmem:[%s712 + $0x42] sm:$0xff]
      %v1014 = vld [vmem:[%s712 + $0x52] sm:$0xff]
      %v1015 = vld [vmem:[%s712 + $0x62] sm:$0xff]
      %v1016 = vld [vmem:[%s712 + $0x72] sm:$0xff]
      %s1017 = scalar_lea.vmem %s1, 80
      %v1018 = vld [vmem:[%s1017] sm:$0xff]
      %v1019 = vld [vmem:[%s1017 + $0x8] sm:$0xff]
      %v1021 = vsel %vm305, %v1009, 0
      %v1024 = vsel %vm305, %v1010, 0
      %v1027 = vsel %vm305, %v1011, 0
      %v1030 = vsel %vm305, %v1012, 0
      %v1033 = vsel %vm305, %v1013, 0
      %v1036 = vsel %vm305, %v1014, 0
      %v1039 = vsel %vm305, %v1015, 0
      %v1042 = vsel %vm305, %v1016, 0
      %1044 = vmatprep.subr.mxu0 0.0
      %1045 = vmatpush1.msra.mxu0 0.0
      %1046 = vmatprep.subr.mxu0 0.0
      %1047 = vmatpush1.msra.mxu0 0.0
      %1048 = vmatprep.subr.mxu0 0.0
      %1049 = vmatpush1.msra.mxu0 0.0
      %1050 = vmatprep.subr.mxu0 0.0
      %1051 = vmatpush1.msra.mxu0 0.0
      %1052 = vmatprep.subr.mxu0 0.0
      %1053 = vmatpush1.msra.mxu0 0.0
      %1054 = vmatprep.subr.mxu0 0.0
      %1055 = vmatpush1.msra.mxu0 0.0
      %1056 = vmatprep.subr.mxu0 0.0
      %1057 = vmatpush1.msra.mxu0 0.0
      %1058 = vmatprep.subr.mxu0 0.0
      %1059 = vmatpush1.msra.mxu0 0.0
      %1060 = vmatprep.subr.mxu0 0.0
      %1061 = vmatpush1.msra.mxu0 0.0
      %1062 = vmatprep.subr.mxu0 0.0
      %1063 = vmatpush1.msra.mxu0 0.0
      %1064 = vmatprep.subr.mxu0 0.0
      %1065 = vmatpush1.msra.mxu0 0.0
      %1066 = vmatprep.subr.mxu0 0.0
      %1067 = vmatpush1.msra.mxu0 0.0
      %1068 = vmatprep.subr.mxu0 0.0
      %1069 = vmatpush1.msra.mxu0 0.0
      %1070 = vmatprep.subr.mxu0 0.0
      %1071 = vmatpush1.msra.mxu0 0.0
      %1072 = vmatprep.subr.mxu0 0.0
      %1073 = vmatpush1.msra.mxu0 %v1019
      %1074 = vmatprep.subr.mxu0 0.0
      %1075 = vmatpush1.msra.mxu0 %v1018
      %1076 = vmatprep.subr.mxu0 0.0
      %1077 = vmatpush2.msra.mxu0 0.0
      %1078 = vmatprep.subr.mxu0 0.0
      %1079 = vmatpush2.msra.mxu0 0.0
      %1080 = vmatprep.subr.mxu0 0.0
      %1081 = vmatpush2.msra.mxu0 0.0
      %1082 = vmatprep.subr.mxu0 0.0
      %1083 = vmatpush2.msra.mxu0 0.0
      %1084 = vmatprep.subr.mxu0 0.0
      %1085 = vmatpush2.msra.mxu0 0.0
      %1086 = vmatprep.subr.mxu0 0.0
      %1087 = vmatpush2.msra.mxu0 0.0
      %1088 = vmatprep.subr.mxu0 0.0
      %1089 = vmatpush2.msra.mxu0 0.0
      %1090 = vmatprep.subr.mxu0 0.0
      %1091 = vmatpush2.msra.mxu0 0.0
      %1092 = vmatprep.subr.mxu0 0.0
      %1093 = vmatpush2.msra.mxu0 0.0
      %1094 = vmatprep.subr.mxu0 0.0
      %1095 = vmatpush2.msra.mxu0 0.0
      %1096 = vmatprep.subr.mxu0 0.0
      %1097 = vmatpush2.msra.mxu0 0.0
      %1098 = vmatprep.subr.mxu0 0.0
      %1099 = vmatpush2.msra.mxu0 0.0
      %1100 = vmatprep.subr.mxu0 0.0
      %1101 = vmatpush2.msra.mxu0 0.0
      %1102 = vmatprep.subr.mxu0 0.0
      %1103 = vmatpush2.msra.mxu0 0.0
      %1104 = vmatprep.subr.mxu0 0.0
      %1105 = vmatpush2.msra.mxu0 0.0
      %1106 = vmatprep.subr.mxu0 0.0
      %1107 = vmatpush2.msra.mxu0 0.0
      %1108 = vmatprep.mubr.f32.mxu0 0.0
      %1109 = vmatmul.mubr.f32.gmra.mxu0 %v1021
      %v1110 = vpop.f32.mrf.mxu0
      %v1111 = vadd.f32 0.0, %v1110
      %v1112 = vpop.f32.mrf.mxu0
      %1113 = vmatprep.mubr.f32.mxu0 0.0
      %1114 = vmatmul.mubr.f32.gmra.mxu0 %v1024
      %v1115 = vpop.f32.mrf.mxu0
      %v1116 = vadd.f32 0.0, %v1115
      %v1117 = vpop.f32.mrf.mxu0
      %1118 = vmatprep.mubr.f32.mxu0 0.0
      %1119 = vmatmul.mubr.f32.gmra.mxu0 %v1027
      %v1120 = vpop.f32.mrf.mxu0
      %v1121 = vadd.f32 0.0, %v1120
      %v1122 = vpop.f32.mrf.mxu0
      %1123 = vmatprep.mubr.f32.mxu0 0.0
      %1124 = vmatmul.mubr.f32.gmra.mxu0 %v1030
      %v1125 = vpop.f32.mrf.mxu0
      %v1126 = vadd.f32 0.0, %v1125
      %v1127 = vpop.f32.mrf.mxu0
      %1128 = vmatprep.mubr.f32.mxu0 0.0
      %1129 = vmatmul.mubr.f32.gmra.mxu0 %v1033
      %v1130 = vpop.f32.mrf.mxu0
      %v1131 = vadd.f32 0.0, %v1130
      %v1132 = vpop.f32.mrf.mxu0
      %1133 = vmatprep.mubr.f32.mxu0 0.0
      %1134 = vmatmul.mubr.f32.gmra.mxu0 %v1036
      %v1135 = vpop.f32.mrf.mxu0
      %v1136 = vadd.f32 0.0, %v1135
      %v1137 = vpop.f32.mrf.mxu0
      %1138 = vmatprep.mubr.f32.mxu0 0.0
      %1139 = vmatmul.mubr.f32.gmra.mxu0 %v1039
      %v1140 = vpop.f32.mrf.mxu0
      %v1141 = vadd.f32 0.0, %v1140
      %v1142 = vpop.f32.mrf.mxu0
      %1143 = vmatprep.mubr.f32.mxu0 0.0
      %1144 = vmatmul.mubr.f32.gmra.mxu0 %v1042
      %v1145 = vpop.f32.mrf.mxu0
      %v1146 = vadd.f32 0.0, %v1145
      %v1147 = vpop.f32.mrf.mxu0
      %1148 = vdwg.mxu0
      %v1149 = vadd.f32 %v1001, %v1111
      %v1150 = vadd.f32 %v1002, %v1116
      %v1151 = vadd.f32 %v1003, %v1121
      %v1152 = vadd.f32 %v1004, %v1126
      %v1153 = vadd.f32 %v1005, %v1131
      %v1154 = vadd.f32 %v1006, %v1136
      %v1155 = vadd.f32 %v1007, %v1141
      %v1156 = vadd.f32 %v1008, %v1146
      %s1157 = scalar_lea.vmem %s268, 32
      %v1158 = vld [vmem:[%s1157] sm:$0xff]
      %v1159 = vld [vmem:[%s1157 + $0x10] sm:$0xff]
      %v1160 = vld [vmem:[%s1157 + $0x20] sm:$0xff]
      %v1161 = vld [vmem:[%s1157 + $0x30] sm:$0xff]
      %v1162 = vld [vmem:[%s1157 + $0x40] sm:$0xff]
      %v1163 = vld [vmem:[%s1157 + $0x50] sm:$0xff]
      %v1164 = vld [vmem:[%s1157 + $0x60] sm:$0xff]
      %v1165 = vld [vmem:[%s1157 + $0x70] sm:$0xff]
      %s1166 = scalar_lea.vmem %s1, 96
      %v1167 = vld [vmem:[%s1166] sm:$0xff]
      %v1168 = vld [vmem:[%s1166 + $0x8] sm:$0xff]
      %v1170 = vsel %vm305, %v1158, 0
      %v1173 = vsel %vm305, %v1159, 0
      %v1176 = vsel %vm305, %v1160, 0
      %v1179 = vsel %vm305, %v1161, 0
      %v1182 = vsel %vm305, %v1162, 0
      %v1185 = vsel %vm305, %v1163, 0
      %v1188 = vsel %vm305, %v1164, 0
      %v1191 = vsel %vm305, %v1165, 0
      %1193 = vmatprep.subr.mxu0 0.0
      %1194 = vmatpush1.msra.mxu0 0.0
      %1195 = vmatprep.subr.mxu0 0.0
      %1196 = vmatpush1.msra.mxu0 0.0
      %1197 = vmatprep.subr.mxu0 0.0
      %1198 = vmatpush1.msra.mxu0 0.0
      %1199 = vmatprep.subr.mxu0 0.0
      %1200 = vmatpush1.msra.mxu0 0.0
      %1201 = vmatprep.subr.mxu0 0.0
      %1202 = vmatpush1.msra.mxu0 0.0
      %1203 = vmatprep.subr.mxu0 0.0
      %1204 = vmatpush1.msra.mxu0 0.0
      %1205 = vmatprep.subr.mxu0 0.0
      %1206 = vmatpush1.msra.mxu0 0.0
      %1207 = vmatprep.subr.mxu0 0.0
      %1208 = vmatpush1.msra.mxu0 0.0
      %1209 = vmatprep.subr.mxu0 0.0
      %1210 = vmatpush1.msra.mxu0 0.0
      %1211 = vmatprep.subr.mxu0 0.0
      %1212 = vmatpush1.msra.mxu0 0.0
      %1213 = vmatprep.subr.mxu0 0.0
      %1214 = vmatpush1.msra.mxu0 0.0
      %1215 = vmatprep.subr.mxu0 0.0
      %1216 = vmatpush1.msra.mxu0 0.0
      %1217 = vmatprep.subr.mxu0 0.0
      %1218 = vmatpush1.msra.mxu0 0.0
      %1219 = vmatprep.subr.mxu0 0.0
      %1220 = vmatpush1.msra.mxu0 0.0
      %1221 = vmatprep.subr.mxu0 0.0
      %1222 = vmatpush1.msra.mxu0 %v1168
      %1223 = vmatprep.subr.mxu0 0.0
      %1224 = vmatpush1.msra.mxu0 %v1167
      %1225 = vmatprep.subr.mxu0 0.0
      %1226 = vmatpush2.msra.mxu0 0.0
      %1227 = vmatprep.subr.mxu0 0.0
      %1228 = vmatpush2.msra.mxu0 0.0
      %1229 = vmatprep.subr.mxu0 0.0
      %1230 = vmatpush2.msra.mxu0 0.0
      %1231 = vmatprep.subr.mxu0 0.0
      %1232 = vmatpush2.msra.mxu0 0.0
      %1233 = vmatprep.subr.mxu0 0.0
      %1234 = vmatpush2.msra.mxu0 0.0
      %1235 = vmatprep.subr.mxu0 0.0
      %1236 = vmatpush2.msra.mxu0 0.0
      %1237 = vmatprep.subr.mxu0 0.0
      %1238 = vmatpush2.msra.mxu0 0.0
      %1239 = vmatprep.subr.mxu0 0.0
      %1240 = vmatpush2.msra.mxu0 0.0
      %1241 = vmatprep.subr.mxu0 0.0
      %1242 = vmatpush2.msra.mxu0 0.0
      %1243 = vmatprep.subr.mxu0 0.0
      %1244 = vmatpush2.msra.mxu0 0.0
      %1245 = vmatprep.subr.mxu0 0.0
      %1246 = vmatpush2.msra.mxu0 0.0
      %1247 = vmatprep.subr.mxu0 0.0
      %1248 = vmatpush2.msra.mxu0 0.0
      %1249 = vmatprep.subr.mxu0 0.0
      %1250 = vmatpush2.msra.mxu0 0.0
      %1251 = vmatprep.subr.mxu0 0.0
      %1252 = vmatpush2.msra.mxu0 0.0
      %1253 = vmatprep.subr.mxu0 0.0
      %1254 = vmatpush2.msra.mxu0 0.0
      %1255 = vmatprep.subr.mxu0 0.0
      %1256 = vmatpush2.msra.mxu0 0.0
      %1257 = vmatprep.mubr.f32.mxu0 0.0
      %1258 = vmatmul.mubr.f32.gmra.mxu0 %v1170
      %v1259 = vpop.f32.mrf.mxu0
      %v1260 = vadd.f32 0.0, %v1259
      %v1261 = vpop.f32.mrf.mxu0
      %1262 = vmatprep.mubr.f32.mxu0 0.0
      %1263 = vmatmul.mubr.f32.gmra.mxu0 %v1173
      %v1264 = vpop.f32.mrf.mxu0
      %v1265 = vadd.f32 0.0, %v1264
      %v1266 = vpop.f32.mrf.mxu0
      %1267 = vmatprep.mubr.f32.mxu0 0.0
      %1268 = vmatmul.mubr.f32.gmra.mxu0 %v1176
      %v1269 = vpop.f32.mrf.mxu0
      %v1270 = vadd.f32 0.0, %v1269
      %v1271 = vpop.f32.mrf.mxu0
      %1272 = vmatprep.mubr.f32.mxu0 0.0
      %1273 = vmatmul.mubr.f32.gmra.mxu0 %v1179
      %v1274 = vpop.f32.mrf.mxu0
      %v1275 = vadd.f32 0.0, %v1274
      %v1276 = vpop.f32.mrf.mxu0
      %1277 = vmatprep.mubr.f32.mxu0 0.0
      %1278 = vmatmul.mubr.f32.gmra.mxu0 %v1182
      %v1279 = vpop.f32.mrf.mxu0
      %v1280 = vadd.f32 0.0, %v1279
      %v1281 = vpop.f32.mrf.mxu0
      %1282 = vmatprep.mubr.f32.mxu0 0.0
      %1283 = vmatmul.mubr.f32.gmra.mxu0 %v1185
      %v1284 = vpop.f32.mrf.mxu0
      %v1285 = vadd.f32 0.0, %v1284
      %v1286 = vpop.f32.mrf.mxu0
      %1287 = vmatprep.mubr.f32.mxu0 0.0
      %1288 = vmatmul.mubr.f32.gmra.mxu0 %v1188
      %v1289 = vpop.f32.mrf.mxu0
      %v1290 = vadd.f32 0.0, %v1289
      %v1291 = vpop.f32.mrf.mxu0
      %1292 = vmatprep.mubr.f32.mxu0 0.0
      %1293 = vmatmul.mubr.f32.gmra.mxu0 %v1191
      %v1294 = vpop.f32.mrf.mxu0
      %v1295 = vadd.f32 0.0, %v1294
      %v1296 = vpop.f32.mrf.mxu0
      %1297 = vdwg.mxu0
      %v1298 = vadd.f32 %v1149, %v1260
      %v1299 = vadd.f32 %v1150, %v1265
      %v1300 = vadd.f32 %v1151, %v1270
      %v1301 = vadd.f32 %v1152, %v1275
      %v1302 = vadd.f32 %v1153, %v1280
      %v1303 = vadd.f32 %v1154, %v1285
      %v1304 = vadd.f32 %v1155, %v1290
      %v1305 = vadd.f32 %v1156, %v1295
      %v1306 = vld [vmem:[%s1157 + $0x1] sm:$0xff]
      %v1307 = vld [vmem:[%s1157 + $0x11] sm:$0xff]
      %v1308 = vld [vmem:[%s1157 + $0x21] sm:$0xff]
      %v1309 = vld [vmem:[%s1157 + $0x31] sm:$0xff]
      %v1310 = vld [vmem:[%s1157 + $0x41] sm:$0xff]
      %v1311 = vld [vmem:[%s1157 + $0x51] sm:$0xff]
      %v1312 = vld [vmem:[%s1157 + $0x61] sm:$0xff]
      %v1313 = vld [vmem:[%s1157 + $0x71] sm:$0xff]
      %s1314 = scalar_lea.vmem %s1, 112
      %v1315 = vld [vmem:[%s1314] sm:$0xff]
      %v1316 = vld [vmem:[%s1314 + $0x8] sm:$0xff]
      %v1318 = vsel %vm305, %v1306, 0
      %v1321 = vsel %vm305, %v1307, 0
      %v1324 = vsel %vm305, %v1308, 0
      %v1327 = vsel %vm305, %v1309, 0
      %v1330 = vsel %vm305, %v1310, 0
      %v1333 = vsel %vm305, %v1311, 0
      %v1336 = vsel %vm305, %v1312, 0
      %v1339 = vsel %vm305, %v1313, 0
      %1341 = vmatprep.subr.mxu0 0.0
      %1342 = vmatpush1.msra.mxu0 0.0
      %1343 = vmatprep.subr.mxu0 0.0
      %1344 = vmatpush1.msra.mxu0 0.0
      %1345 = vmatprep.subr.mxu0 0.0
      %1346 = vmatpush1.msra.mxu0 0.0
      %1347 = vmatprep.subr.mxu0 0.0
      %1348 = vmatpush1.msra.mxu0 0.0
      %1349 = vmatprep.subr.mxu0 0.0
      %1350 = vmatpush1.msra.mxu0 0.0
      %1351 = vmatprep.subr.mxu0 0.0
      %1352 = vmatpush1.msra.mxu0 0.0
      %1353 = vmatprep.subr.mxu0 0.0
      %1354 = vmatpush1.msra.mxu0 0.0
      %1355 = vmatprep.subr.mxu0 0.0
      %1356 = vmatpush1.msra.mxu0 0.0
      %1357 = vmatprep.subr.mxu0 0.0
      %1358 = vmatpush1.msra.mxu0 0.0
      %1359 = vmatprep.subr.mxu0 0.0
      %1360 = vmatpush1.msra.mxu0 0.0
      %1361 = vmatprep.subr.mxu0 0.0
      %1362 = vmatpush1.msra.mxu0 0.0
      %1363 = vmatprep.subr.mxu0 0.0
      %1364 = vmatpush1.msra.mxu0 0.0
      %1365 = vmatprep.subr.mxu0 0.0
      %1366 = vmatpush1.msra.mxu0 0.0
      %1367 = vmatprep.subr.mxu0 0.0
      %1368 = vmatpush1.msra.mxu0 0.0
      %1369 = vmatprep.subr.mxu0 0.0
      %1370 = vmatpush1.msra.mxu0 %v1316
      %1371 = vmatprep.subr.mxu0 0.0
      %1372 = vmatpush1.msra.mxu0 %v1315
      %1373 = vmatprep.subr.mxu0 0.0
      %1374 = vmatpush2.msra.mxu0 0.0
      %1375 = vmatprep.subr.mxu0 0.0
      %1376 = vmatpush2.msra.mxu0 0.0
      %1377 = vmatprep.subr.mxu0 0.0
      %1378 = vmatpush2.msra.mxu0 0.0
      %1379 = vmatprep.subr.mxu0 0.0
      %1380 = vmatpush2.msra.mxu0 0.0
      %1381 = vmatprep.subr.mxu0 0.0
      %1382 = vmatpush2.msra.mxu0 0.0
      %1383 = vmatprep.subr.mxu0 0.0
      %1384 = vmatpush2.msra.mxu0 0.0
      %1385 = vmatprep.subr.mxu0 0.0
      %1386 = vmatpush2.msra.mxu0 0.0
      %1387 = vmatprep.subr.mxu0 0.0
      %1388 = vmatpush2.msra.mxu0 0.0
      %1389 = vmatprep.subr.mxu0 0.0
      %1390 = vmatpush2.msra.mxu0 0.0
      %1391 = vmatprep.subr.mxu0 0.0
      %1392 = vmatpush2.msra.mxu0 0.0
      %1393 = vmatprep.subr.mxu0 0.0
      %1394 = vmatpush2.msra.mxu0 0.0
      %1395 = vmatprep.subr.mxu0 0.0
      %1396 = vmatpush2.msra.mxu0 0.0
      %1397 = vmatprep.subr.mxu0 0.0
      %1398 = vmatpush2.msra.mxu0 0.0
      %1399 = vmatprep.subr.mxu0 0.0
      %1400 = vmatpush2.msra.mxu0 0.0
      %1401 = vmatprep.subr.mxu0 0.0
      %1402 = vmatpush2.msra.mxu0 0.0
      %1403 = vmatprep.subr.mxu0 0.0
      %1404 = vmatpush2.msra.mxu0 0.0
      %1405 = vmatprep.mubr.f32.mxu0 0.0
      %1406 = vmatmul.mubr.f32.gmra.mxu0 %v1318
      %v1407 = vpop.f32.mrf.mxu0
      %v1408 = vadd.f32 0.0, %v1407
      %v1409 = vpop.f32.mrf.mxu0
      %1410 = vmatprep.mubr.f32.mxu0 0.0
      %1411 = vmatmul.mubr.f32.gmra.mxu0 %v1321
      %v1412 = vpop.f32.mrf.mxu0
      %v1413 = vadd.f32 0.0, %v1412
      %v1414 = vpop.f32.mrf.mxu0
      %1415 = vmatprep.mubr.f32.mxu0 0.0
      %1416 = vmatmul.mubr.f32.gmra.mxu0 %v1324
      %v1417 = vpop.f32.mrf.mxu0
      %v1418 = vadd.f32 0.0, %v1417
      %v1419 = vpop.f32.mrf.mxu0
      %1420 = vmatprep.mubr.f32.mxu0 0.0
      %1421 = vmatmul.mubr.f32.gmra.mxu0 %v1327
      %v1422 = vpop.f32.mrf.mxu0
      %v1423 = vadd.f32 0.0, %v1422
      %v1424 = vpop.f32.mrf.mxu0
      %1425 = vmatprep.mubr.f32.mxu0 0.0
      %1426 = vmatmul.mubr.f32.gmra.mxu0 %v1330
      %v1427 = vpop.f32.mrf.mxu0
      %v1428 = vadd.f32 0.0, %v1427
      %v1429 = vpop.f32.mrf.mxu0
      %1430 = vmatprep.mubr.f32.mxu0 0.0
      %1431 = vmatmul.mubr.f32.gmra.mxu0 %v1333
      %v1432 = vpop.f32.mrf.mxu0
      %v1433 = vadd.f32 0.0, %v1432
      %v1434 = vpop.f32.mrf.mxu0
      %1435 = vmatprep.mubr.f32.mxu0 0.0
      %1436 = vmatmul.mubr.f32.gmra.mxu0 %v1336
      %v1437 = vpop.f32.mrf.mxu0
      %v1438 = vadd.f32 0.0, %v1437
      %v1439 = vpop.f32.mrf.mxu0
      %1440 = vmatprep.mubr.f32.mxu0 0.0
      %1441 = vmatmul.mubr.f32.gmra.mxu0 %v1339
      %v1442 = vpop.f32.mrf.mxu0
      %v1443 = vadd.f32 0.0, %v1442
      %v1444 = vpop.f32.mrf.mxu0
      %1445 = vdwg.mxu0
      %v1446 = vadd.f32 %v1298, %v1408
      %v1447 = vadd.f32 %v1299, %v1413
      %v1448 = vadd.f32 %v1300, %v1418
      %v1449 = vadd.f32 %v1301, %v1423
      %v1450 = vadd.f32 %v1302, %v1428
      %v1451 = vadd.f32 %v1303, %v1433
      %v1452 = vadd.f32 %v1304, %v1438
      %v1453 = vadd.f32 %v1305, %v1443
      %v1454 = vld [vmem:[%s1157 + $0x2] sm:$0xff]
      %v1455 = vld [vmem:[%s1157 + $0x12] sm:$0xff]
      %v1456 = vld [vmem:[%s1157 + $0x22] sm:$0xff]
      %v1457 = vld [vmem:[%s1157 + $0x32] sm:$0xff]
      %v1458 = vld [vmem:[%s1157 + $0x42] sm:$0xff]
      %v1459 = vld [vmem:[%s1157 + $0x52] sm:$0xff]
      %v1460 = vld [vmem:[%s1157 + $0x62] sm:$0xff]
      %v1461 = vld [vmem:[%s1157 + $0x72] sm:$0xff]
      %s1462 = scalar_lea.vmem %s1, 128
      %v1463 = vld [vmem:[%s1462] sm:$0xff]
      %v1464 = vld [vmem:[%s1462 + $0x8] sm:$0xff]
      %v1466 = vsel %vm305, %v1454, 0
      %v1469 = vsel %vm305, %v1455, 0
      %v1472 = vsel %vm305, %v1456, 0
      %v1475 = vsel %vm305, %v1457, 0
      %v1478 = vsel %vm305, %v1458, 0
      %v1481 = vsel %vm305, %v1459, 0
      %v1484 = vsel %vm305, %v1460, 0
      %v1487 = vsel %vm305, %v1461, 0
      %1489 = vmatprep.subr.mxu0 0.0
      %1490 = vmatpush1.msra.mxu0 0.0
      %1491 = vmatprep.subr.mxu0 0.0
      %1492 = vmatpush1.msra.mxu0 0.0
      %1493 = vmatprep.subr.mxu0 0.0
      %1494 = vmatpush1.msra.mxu0 0.0
      %1495 = vmatprep.subr.mxu0 0.0
      %1496 = vmatpush1.msra.mxu0 0.0
      %1497 = vmatprep.subr.mxu0 0.0
      %1498 = vmatpush1.msra.mxu0 0.0
      %1499 = vmatprep.subr.mxu0 0.0
      %1500 = vmatpush1.msra.mxu0 0.0
      %1501 = vmatprep.subr.mxu0 0.0
      %1502 = vmatpush1.msra.mxu0 0.0
      %1503 = vmatprep.subr.mxu0 0.0
      %1504 = vmatpush1.msra.mxu0 0.0
      %1505 = vmatprep.subr.mxu0 0.0
      %1506 = vmatpush1.msra.mxu0 0.0
      %1507 = vmatprep.subr.mxu0 0.0
      %1508 = vmatpush1.msra.mxu0 0.0
      %1509 = vmatprep.subr.mxu0 0.0
      %1510 = vmatpush1.msra.mxu0 0.0
      %1511 = vmatprep.subr.mxu0 0.0
      %1512 = vmatpush1.msra.mxu0 0.0
      %1513 = vmatprep.subr.mxu0 0.0
      %1514 = vmatpush1.msra.mxu0 0.0
      %1515 = vmatprep.subr.mxu0 0.0
      %1516 = vmatpush1.msra.mxu0 0.0
      %1517 = vmatprep.subr.mxu0 0.0
      %1518 = vmatpush1.msra.mxu0 %v1464
      %1519 = vmatprep.subr.mxu0 0.0
      %1520 = vmatpush1.msra.mxu0 %v1463
      %1521 = vmatprep.subr.mxu0 0.0
      %1522 = vmatpush2.msra.mxu0 0.0
      %1523 = vmatprep.subr.mxu0 0.0
      %1524 = vmatpush2.msra.mxu0 0.0
      %1525 = vmatprep.subr.mxu0 0.0
      %1526 = vmatpush2.msra.mxu0 0.0
      %1527 = vmatprep.subr.mxu0 0.0
      %1528 = vmatpush2.msra.mxu0 0.0
      %1529 = vmatprep.subr.mxu0 0.0
      %1530 = vmatpush2.msra.mxu0 0.0
      %1531 = vmatprep.subr.mxu0 0.0
      %1532 = vmatpush2.msra.mxu0 0.0
      %1533 = vmatprep.subr.mxu0 0.0
      %1534 = vmatpush2.msra.mxu0 0.0
      %1535 = vmatprep.subr.mxu0 0.0
      %1536 = vmatpush2.msra.mxu0 0.0
      %1537 = vmatprep.subr.mxu0 0.0
      %1538 = vmatpush2.msra.mxu0 0.0
      %1539 = vmatprep.subr.mxu0 0.0
      %1540 = vmatpush2.msra.mxu0 0.0
      %1541 = vmatprep.subr.mxu0 0.0
      %1542 = vmatpush2.msra.mxu0 0.0
      %1543 = vmatprep.subr.mxu0 0.0
      %1544 = vmatpush2.msra.mxu0 0.0
      %1545 = vmatprep.subr.mxu0 0.0
      %1546 = vmatpush2.msra.mxu0 0.0
      %1547 = vmatprep.subr.mxu0 0.0
      %1548 = vmatpush2.msra.mxu0 0.0
      %1549 = vmatprep.subr.mxu0 0.0
      %1550 = vmatpush2.msra.mxu0 0.0
      %1551 = vmatprep.subr.mxu0 0.0
      %1552 = vmatpush2.msra.mxu0 0.0
      %1553 = vmatprep.mubr.f32.mxu0 0.0
      %1554 = vmatmul.mubr.f32.gmra.mxu0 %v1466
      %v1555 = vpop.f32.mrf.mxu0
      %v1556 = vadd.f32 0.0, %v1555
      %v1557 = vpop.f32.mrf.mxu0
      %1558 = vmatprep.mubr.f32.mxu0 0.0
      %1559 = vmatmul.mubr.f32.gmra.mxu0 %v1469
      %v1560 = vpop.f32.mrf.mxu0
      %v1561 = vadd.f32 0.0, %v1560
      %v1562 = vpop.f32.mrf.mxu0
      %1563 = vmatprep.mubr.f32.mxu0 0.0
      %1564 = vmatmul.mubr.f32.gmra.mxu0 %v1472
      %v1565 = vpop.f32.mrf.mxu0
      %v1566 = vadd.f32 0.0, %v1565
      %v1567 = vpop.f32.mrf.mxu0
      %1568 = vmatprep.mubr.f32.mxu0 0.0
      %1569 = vmatmul.mubr.f32.gmra.mxu0 %v1475
      %v1570 = vpop.f32.mrf.mxu0
      %v1571 = vadd.f32 0.0, %v1570
      %v1572 = vpop.f32.mrf.mxu0
      %1573 = vmatprep.mubr.f32.mxu0 0.0
      %1574 = vmatmul.mubr.f32.gmra.mxu0 %v1478
      %v1575 = vpop.f32.mrf.mxu0
      %v1576 = vadd.f32 0.0, %v1575
      %v1577 = vpop.f32.mrf.mxu0
      %1578 = vmatprep.mubr.f32.mxu0 0.0
      %1579 = vmatmul.mubr.f32.gmra.mxu0 %v1481
      %v1580 = vpop.f32.mrf.mxu0
      %v1581 = vadd.f32 0.0, %v1580
      %v1582 = vpop.f32.mrf.mxu0
      %1583 = vmatprep.mubr.f32.mxu0 0.0
      %1584 = vmatmul.mubr.f32.gmra.mxu0 %v1484
      %v1585 = vpop.f32.mrf.mxu0
      %v1586 = vadd.f32 0.0, %v1585
      %v1587 = vpop.f32.mrf.mxu0
      %1588 = vmatprep.mubr.f32.mxu0 0.0
      %1589 = vmatmul.mubr.f32.gmra.mxu0 %v1487
      %v1590 = vpop.f32.mrf.mxu0
      %v1591 = vadd.f32 0.0, %v1590
      %v1592 = vpop.f32.mrf.mxu0
      %1593 = vdwg.mxu0
      %v1594 = vadd.f32 %v1446, %v1556
      %v1595 = vadd.f32 %v1447, %v1561
      %v1596 = vadd.f32 %v1448, %v1566
      %v1597 = vadd.f32 %v1449, %v1571
      %v1598 = vadd.f32 %v1450, %v1576
      %v1599 = vadd.f32 %v1451, %v1581
      %v1600 = vadd.f32 %v1452, %v1586
      %v1601 = vadd.f32 %v1453, %v1591
      %v1602 = vld [vmem:[%s273] sm:$0xff]
      %v1603 = vld [vmem:[%s273 + $0x8] sm:$0xff]
      %v1604 = vld [vmem:[%s273 + $0x10] sm:$0xff]
      %v1605 = vld [vmem:[%s273 + $0x18] sm:$0xff]
      %v1606 = vld [vmem:[%s273 + $0x20] sm:$0xff]
      %v1607 = vld [vmem:[%s273 + $0x28] sm:$0xff]
      %v1608 = vld [vmem:[%s273 + $0x30] sm:$0xff]
      %v1609 = vld [vmem:[%s273 + $0x38] sm:$0xff]
      %v1610 = vld [vmem:[%s3] sm:$0xf]
      %vm1611 = vcmask 31744
      %v1613 = vsel %vm1611, %v1602, 0
      %v1616 = vsel %vm1611, %v1603, 0
      %v1619 = vsel %vm1611, %v1604, 0
      %v1622 = vsel %vm1611, %v1605, 0
      %v1625 = vsel %vm1611, %v1606, 0
      %v1628 = vsel %vm1611, %v1607, 0
      %v1631 = vsel %vm1611, %v1608, 0
      %v1634 = vsel %vm1611, %v1609, 0
      %vm1636 = vcmask 1043456
      %v1638 = vsel %vm1636, %v1610, 0
      %1640 = vmatprep.subr.mxu0 0.0
      %1641 = vmatpush1.msra.mxu0 0.0
      %1642 = vmatprep.subr.mxu0 0.0
      %1643 = vmatpush1.msra.mxu0 0.0
      %1644 = vmatprep.subr.mxu0 0.0
      %1645 = vmatpush1.msra.mxu0 0.0
      %1646 = vmatprep.subr.mxu0 0.0
      %1647 = vmatpush1.msra.mxu0 0.0
      %1648 = vmatprep.subr.mxu0 0.0
      %1649 = vmatpush1.msra.mxu0 0.0
      %1650 = vmatprep.subr.mxu0 0.0
      %1651 = vmatpush1.msra.mxu0 0.0
      %1652 = vmatprep.subr.mxu0 0.0
      %1653 = vmatpush1.msra.mxu0 0.0
      %1654 = vmatprep.subr.mxu0 0.0
      %1655 = vmatpush1.msra.mxu0 0.0
      %1656 = vmatprep.subr.mxu0 0.0
      %1657 = vmatpush1.msra.mxu0 0.0
      %1658 = vmatprep.subr.mxu0 0.0
      %1659 = vmatpush1.msra.mxu0 0.0
      %1660 = vmatprep.subr.mxu0 0.0
      %1661 = vmatpush1.msra.mxu0 0.0
      %1662 = vmatprep.subr.mxu0 0.0
      %1663 = vmatpush1.msra.mxu0 0.0
      %1664 = vmatprep.subr.mxu0 0.0
      %1665 = vmatpush1.msra.mxu0 0.0
      %1666 = vmatprep.subr.mxu0 0.0
      %1667 = vmatpush1.msra.mxu0 0.0
      %1668 = vmatprep.subr.mxu0 0.0
      %1669 = vmatpush1.msra.mxu0 0.0
      %1670 = vmatprep.subr.mxu0 0.0
      %1671 = vmatpush1.msra.mxu0 %v1638
      %1672 = vmatprep.subr.mxu0 0.0
      %1673 = vmatpush2.msra.mxu0 0.0
      %1674 = vmatprep.subr.mxu0 0.0
      %1675 = vmatpush2.msra.mxu0 0.0
      %1676 = vmatprep.subr.mxu0 0.0
      %1677 = vmatpush2.msra.mxu0 0.0
      %1678 = vmatprep.subr.mxu0 0.0
      %1679 = vmatpush2.msra.mxu0 0.0
      %1680 = vmatprep.subr.mxu0 0.0
      %1681 = vmatpush2.msra.mxu0 0.0
      %1682 = vmatprep.subr.mxu0 0.0
      %1683 = vmatpush2.msra.mxu0 0.0
      %1684 = vmatprep.subr.mxu0 0.0
      %1685 = vmatpush2.msra.mxu0 0.0
      %1686 = vmatprep.subr.mxu0 0.0
      %1687 = vmatpush2.msra.mxu0 0.0
      %1688 = vmatprep.subr.mxu0 0.0
      %1689 = vmatpush2.msra.mxu0 0.0
      %1690 = vmatprep.subr.mxu0 0.0
      %1691 = vmatpush2.msra.mxu0 0.0
      %1692 = vmatprep.subr.mxu0 0.0
      %1693 = vmatpush2.msra.mxu0 0.0
      %1694 = vmatprep.subr.mxu0 0.0
      %1695 = vmatpush2.msra.mxu0 0.0
      %1696 = vmatprep.subr.mxu0 0.0
      %1697 = vmatpush2.msra.mxu0 0.0
      %1698 = vmatprep.subr.mxu0 0.0
      %1699 = vmatpush2.msra.mxu0 0.0
      %1700 = vmatprep.subr.mxu0 0.0
      %1701 = vmatpush2.msra.mxu0 0.0
      %1702 = vmatprep.subr.mxu0 0.0
      %1703 = vmatpush2.msra.mxu0 0.0
      %1704 = vmatprep.mubr.f32.mxu0 0.0
      %1705 = vmatmul.mubr.f32.gmra.mxu0 %v1613
      %v1706 = vpop.f32.mrf.mxu0
      %v1707 = vadd.f32 0.0, %v1706
      %v1708 = vpop.f32.mrf.mxu0
      %1709 = vmatprep.mubr.f32.mxu0 0.0
      %1710 = vmatmul.mubr.f32.gmra.mxu0 %v1616
      %v1711 = vpop.f32.mrf.mxu0
      %v1712 = vadd.f32 0.0, %v1711
      %v1713 = vpop.f32.mrf.mxu0
      %1714 = vmatprep.mubr.f32.mxu0 0.0
      %1715 = vmatmul.mubr.f32.gmra.mxu0 %v1619
      %v1716 = vpop.f32.mrf.mxu0
      %v1717 = vadd.f32 0.0, %v1716
      %v1718 = vpop.f32.mrf.mxu0
      %1719 = vmatprep.mubr.f32.mxu0 0.0
      %1720 = vmatmul.mubr.f32.gmra.mxu0 %v1622
      %v1721 = vpop.f32.mrf.mxu0
      %v1722 = vadd.f32 0.0, %v1721
      %v1723 = vpop.f32.mrf.mxu0
      %1724 = vmatprep.mubr.f32.mxu0 0.0
      %1725 = vmatmul.mubr.f32.gmra.mxu0 %v1625
      %v1726 = vpop.f32.mrf.mxu0
      %v1727 = vadd.f32 0.0, %v1726
      %v1728 = vpop.f32.mrf.mxu0
      %1729 = vmatprep.mubr.f32.mxu0 0.0
      %1730 = vmatmul.mubr.f32.gmra.mxu0 %v1628
      %v1731 = vpop.f32.mrf.mxu0
      %v1732 = vadd.f32 0.0, %v1731
      %v1733 = vpop.f32.mrf.mxu0
      %1734 = vmatprep.mubr.f32.mxu0 0.0
      %1735 = vmatmul.mubr.f32.gmra.mxu0 %v1631
      %v1736 = vpop.f32.mrf.mxu0
      %v1737 = vadd.f32 0.0, %v1736
      %v1738 = vpop.f32.mrf.mxu0
      %1739 = vmatprep.mubr.f32.mxu0 0.0
      %1740 = vmatmul.mubr.f32.gmra.mxu0 %v1634
      %v1741 = vpop.f32.mrf.mxu0
      %v1742 = vadd.f32 0.0, %v1741
      %v1743 = vpop.f32.mrf.mxu0
      %1744 = vdwg.mxu0
      %v1745 = vadd.f32 %v1594, %v1707
      %v1746 = vadd.f32 %v1595, %v1712
      %v1747 = vadd.f32 %v1596, %v1717
      %v1748 = vadd.f32 %v1597, %v1722
      %v1749 = vadd.f32 %v1598, %v1727
      %v1750 = vadd.f32 %v1599, %v1732
      %v1751 = vadd.f32 %v1600, %v1737
      %v1752 = vadd.f32 %v1601, %v1742
      %v1753 = vld [vmem:[%s4] sm:$0x1]
      %v1755 = vlaneseq
      %v1756 = vshrl.u32 %v1755, 7
      %v1757 = vsub.s32 0, %v1756
      %v1758 = vrot.slane %v1753, %v1757
      %v1760 = vadd.f32 %v1745, %v1758
      %v1761 = vadd.f32 %v1746, %v1758
      %v1762 = vadd.f32 %v1747, %v1758
      %v1763 = vadd.f32 %v1748, %v1758
      %v1764 = vadd.f32 %v1749, %v1758
      %v1765 = vadd.f32 %v1750, %v1758
      %v1766 = vadd.f32 %v1751, %v1758
      %v1767 = vadd.f32 %v1752, %v1758
      %1768 = vst.msk [vmem:[%s279] sm:$0xff] %vm305, %v1760
      %1769 = vst.msk [vmem:[%s279 + $0x8] sm:$0xff] %vm305, %v1761
      %1770 = vst.msk [vmem:[%s279 + $0x10] sm:$0xff] %vm305, %v1762
      %1771 = vst.msk [vmem:[%s279 + $0x18] sm:$0xff] %vm305, %v1763
      %1772 = vst.msk [vmem:[%s279 + $0x20] sm:$0xff] %vm305, %v1764
      %1773 = vst.msk [vmem:[%s279 + $0x28] sm:$0xff] %vm305, %v1765
      %1774 = vst.msk [vmem:[%s279 + $0x30] sm:$0xff] %vm305, %v1766
      %1775 = vst.msk [vmem:[%s279 + $0x38] sm:$0xff] %vm305, %v1767
      %v1776 = vsel %vm305, %v1760, 0.0
      %v1777 = vsel %vm305, %v1761, 0.0
      %v1778 = vadd.f32 %v1776, %v1777
      %v1779 = vsel %vm305, %v1762, 0.0
      %v1780 = vadd.f32 %v1778, %v1779
      %v1781 = vsel %vm305, %v1763, 0.0
      %v1782 = vadd.f32 %v1780, %v1781
      %v1783 = vsel %vm305, %v1764, 0.0
      %v1784 = vadd.f32 %v1782, %v1783
      %v1785 = vsel %vm305, %v1765, 0.0
      %v1786 = vadd.f32 %v1784, %v1785
      %v1787 = vsel %vm305, %v1766, 0.0
      %v1788 = vadd.f32 %v1786, %v1787
      %v1789 = vsel %vm305, %v1767, 0.0
      %v1790 = vadd.f32 %v1788, %v1789
      %v1791 = vrot.slane %v1790, 4
      %v1792 = vadd.f32 %v1790, %v1791
      %v1793 = vrot.slane %v1792, 2
      %v1794 = vadd.f32 %v1792, %v1793
      %v1795 = vrot.slane %v1794, 1
      %v1796 = vadd.f32 %v1794, %v1795
      %v1797 = vrcp.pop 64.0
      %v1798 = vmul.f32 %v1796, %v1797
      %vm1799 = vcmask 122880
      %1800 = vst.msk [vmem:[%s283] sm:$0x1] %vm1799, %v1798
      %s1801 = smul.u32 8, %s18
      %p1802 = scmp.lt.s32.totalorder %s1801, 15
      %s1803 = scalar_select %p1802, %s1801, 15
      %s1804 = smul.addr %s1803, 8
      %s1805 = scalar_lea.vmem %s5, %s1804
      %p1806 = scmp.lt.s32.totalorder %s18, 1
      %s1807 = scalar_select %p1806, %s18, 1
      %s1808 = scalar_lea.vmem %s6, %s1807
      // Predicated region
      $region41: #{stem_block_forward.4} parent=39 // pred_check
        %p1809 = pneg %p151
      $region42: #{stem_block_forward.4} parent=39 // pred_check_branch
        %1811 = sbr.rel (%p1809) target = $region44
      $region43: #{stem_block_forward.4} parent=39 // pred_region
        %s1812 = smul.u32 8, %s18
      $region44: #{stem_block_forward.4} parent=39 // pred_fallthru
        _
      // Predicated region
      $region45: #{stem_block_forward.4} parent=39 // pred_check
        %p1813 = pneg %p177
      $region46: #{stem_block_forward.4} parent=39 // pred_check_branch
        %1815 = sbr.rel (%p1813) target = $region48
      $region47: #{stem_block_forward.4} parent=39 // pred_region
        _
      $region48: #{stem_block_forward.4} parent=39 // pred_fallthru
        _
    $region40: #{stem_block_forward.4} parent=5 // pred_fallthru
      _
    %p1816 = scmp.le.s32.totalorder 2, %s13
    // Predicated region
    $region49: #{stem_block_forward.4} parent=5 // pred_check
      %p1817 = pneg %p1816
    $region50: #{stem_block_forward.4} parent=5 // pred_check_branch
      %1819 = sbr.rel (%p1817) target = $region52
    $region51: #{stem_block_forward.4} parent=5 // pred_region
      %s1820 = ssub.s32 %s13, 2
      // Predicated region
      $region53: #{stem_block_forward.4} parent=51 // pred_check
        %p1821 = pneg %p157
      $region54: #{stem_block_forward.4} parent=51 // pred_check_branch
        %1823 = sbr.rel (%p1821) target = $region56
      $region55: #{stem_block_forward.4} parent=51 // pred_region
        %s1824 = smul.u32 8, %s19
        %p1825 = scmp.lt.s32.totalorder %s1824, 15
        %s1826 = scalar_select %p1825, %s1824, 15
        %s1827 = smul.addr %s1826, 8
        %s1828 = scalar_lea.vmem %s5, %s1827
      $region56: #{stem_block_forward.4} parent=51 // pred_fallthru
        _
      // Predicated region
      $region57: #{stem_block_forward.4} parent=51 // pred_check
        %p1829 = pneg %p183
      $region58: #{stem_block_forward.4} parent=51 // pred_check_branch
        %1831 = sbr.rel (%p1829) target = $region60
      $region59: #{stem_block_forward.4} parent=51 // pred_region
        %p1832 = scmp.lt.s32.totalorder %s19, 1
        %s1833 = scalar_select %p1832, %s19, 1
        %s1834 = scalar_lea.vmem %s6, %s1833
      $region60: #{stem_block_forward.4} parent=51 // pred_fallthru
        _
    $region52: #{stem_block_forward.4} parent=5 // pred_fallthru
      _
  $region6: #{stem_block_forward.4} parent=0 // loop_footer
    %s17 = sadd.s32 1, %s13
  $region7: #{stem_block_forward.4} parent=0 // loop_footer_branch
    %12 = sbr.rel target = $region3
  $region8: #{stem_block_forward.4} parent=0 // loop_exit
    _

</llo_original>
